<compile_context>
chip_gen: v6e
topology: v6e:2x2x1
jax: 0.10.0
libtpu: 0.0.40
codegen_flags: <defaults>
</compile_context>

<pallas_src>
import functools

import jax
import jax.numpy as jnp
from jax import lax
from jax.experimental import pallas as pl
from jax.experimental.pallas import tpu as pltpu


# --------------------------- small elementwise helpers ------------------------

def _softplus(x):
    # numerically safe softplus using only exp/log/where (f32, Mosaic-friendly)
    return jnp.where(x > 20.0, x, jnp.log(1.0 + jnp.exp(jnp.minimum(x, 20.0))))


def _silu(x):
    return x * (1.0 / (1.0 + jnp.exp(-x)))


# ------------------------- fused LN + SSM Pallas kernel -----------------------
#
# Block layout: each grid step gets a (1, L*G, D) tile holding G complete
# sequence copies (batch x direction), rows ordered r = l*G + g so that a time
# shift of one step is a row shift of G (= 8 = one sublane tile).

def _fused_block_kernel(x_ref, lng_ref, lnb_ref, w_in_ref, conv_w_ref,
                        conv_b_ref, w_xm_ref, b_dt_ref, a_ref, dskip_ref,
                        w_out_ref, o_ref,
                        dt_s, u_s, g_s, bc_s, y_s, conv_s, da_s,
                        *, eps, n_copies, t_chunk):
    G = n_copies
    LG = x_ref.shape[1]          # L_pad * G rows
    E = dskip_ref.shape[1]       # d_inner
    N = a_ref.shape[0]           # d_state
    K = conv_w_ref.shape[0]      # conv kernel size
    EC = da_s.shape[2]           # d_inner chunk width (<= 128)
    TG = t_chunk * G             # rows per time chunk
    n_tc = LG // TG
    n_ec = E // EC

    x = x_ref[0].astype(jnp.float32)                               # (LG, D)

    # ---------------- LayerNorm (fused; f32 statistics) ----------------
    mu = jnp.mean(x, axis=-1, keepdims=True)
    xc = x - mu
    var = jnp.mean(xc * xc, axis=-1, keepdims=True)
    xn = xc * lax.rsqrt(var + eps) * lng_ref[...] + lnb_ref[...]   # (LG, D)

    # ---------------- merged input projection [x | z] (MXU, bf16) ------
    xz = jnp.dot(xn.astype(w_in_ref.dtype), w_in_ref[...],
                 preferred_element_type=jnp.float32)               # (LG, 2E)
    xin = xz[:, :E]
    g_s[...] = _silu(xz[:, E:])                                    # gate, reused later

    # ---------------- causal depthwise conv along time -----------------
    # pre-zeroed scratch; time stride == G rows, so every tap read is a
    # sublane-aligned view (G = 8).
    H = (K - 1) * G
    conv_s[pl.ds(0, H), :] = jnp.zeros((H, E), jnp.float32)
    conv_s[pl.ds(H, LG), :] = xin
    u = jnp.zeros((LG, E), jnp.float32)
    for k in range(K):                                             # static unroll
        u = u + conv_s[pl.ds(k * G, LG), :] * conv_w_ref[k:k + 1, :]
    u = _silu(u + conv_b_ref[...])                                 # (LG, E) f32
    u_s[...] = u

    # ---------------- merged x-projection [dt(folded) | B | C] ---------
    xdbl = jnp.dot(u.astype(w_xm_ref.dtype), w_xm_ref[...],
                   preferred_element_type=jnp.float32)             # (LG, E+2N)
    dt_s[...] = _softplus(xdbl[:, :E] + b_dt_ref[...])             # delta (LG, E)
    bc_s[...] = xdbl[:, E:]                                        # [B | C] (LG, 2N)

    # ---------------- selective scan ------------------------------------
    # Channel-chunked (carry (G, N, EC) stays in vregs) and time-chunked:
    # exp(Δ·A) is precomputed per time chunk (EUP fully pipelined, off the
    # recurrence critical path); the step body is VPU mul/add + sublane reduce.
    # TODO(synk): optionally run the exp pre-pass / gate in bf16 on v6e/v7x.
    unroll = 2 if (t_chunk % 2 == 0) else 1

    for ec in range(n_ec):                                         # static loop
        e0 = ec * EC
        a_ec = a_ref[:, e0:e0 + EC]                                # (N, EC)

        def t_chunk_body(c, h):
            row0 = pl.multiple_of(c * TG, G)
            d_c = dt_s[pl.ds(row0, TG), pl.ds(e0, EC)]             # (TG, EC)
            # hoisted EUP work for the whole time chunk
            da_s[...] = jnp.exp(d_c[:, None, :] * a_ec[None, :, :])

            def step(i, h):
                loc = pl.multiple_of(i * G, G)
                glb = pl.multiple_of(row0 + i * G, G)
                da = da_s[pl.ds(loc, G), :, :]                     # (G, N, EC)
                d_t = dt_s[pl.ds(glb, G), pl.ds(e0, EC)]           # (G, EC)
                u_t = u_s[pl.ds(glb, G), pl.ds(e0, EC)]            # (G, EC)
                bc = bc_s[pl.ds(glb, G), :]                        # (G, 2N)
                b_t = bc[:, :N]
                c_t = bc[:, N:]
                du = d_t * u_t                                     # Δ·u in-loop
                h = da * h + b_t[:, :, None] * du[:, None, :]      # (G, N, EC)
                y_s[pl.ds(glb, G), pl.ds(e0, EC)] = jnp.sum(
                    c_t[:, :, None] * h, axis=1)                   # (G, EC)
                return h

            return lax.fori_loop(0, t_chunk, step, h, unroll=unroll)

        lax.fori_loop(0, n_tc, t_chunk_body,
                      jnp.zeros((G, N, EC), jnp.float32))

    # ---------------- skip, gate, output projection ---------------------
    y = y_s[...] + u_s[...] * dskip_ref[...]                       # (LG, E)
    out = jnp.dot((y * g_s[...]).astype(w_out_ref.dtype), w_out_ref[...],
                  preferred_element_type=jnp.float32)              # (LG, D)
    o_ref[0] = out.astype(o_ref.dtype)


def _vmem_limit_bytes():
    # Generation-aware VMEM budget (leave headroom for double-buffered I/O):
    # ~48 MiB on v7x (64 MiB physical), ~96 MiB on v5e/v6e (128 MiB physical).
    try:
        cap = int(pltpu.get_tpu_info().vmem_capacity_bytes)
    except Exception:
        cap = 64 * 1024 * 1024
    return int(min(cap * 3 // 4, 100 * 1024 * 1024))


def _ssm_pallas(xx, p, n_copies, t_chunk):
    """xx: (nb, L_pad*G, D) blocks of sequence copies; returns same shape."""
    nb, LG, D = xx.shape
    E = p["D"].shape[1]
    N = p["A_T"].shape[0]
    K = p["conv_w"].shape[0]
    G = n_copies
    EC = E if (E <= 128 or E % 128 != 0) else 128     # d_inner chunk width

    weight_names = ["ln_g", "ln_b", "w_in", "conv_w", "conv_b", "w_xm",
                    "b_dt", "A_T", "D", "w_out"]
    weights = [p[n] for n in weight_names]

    kernel = functools.partial(_fused_block_kernel, eps=1e-6,
                               n_copies=G, t_chunk=t_chunk)
    return pl.pallas_call(
        kernel,
        out_shape=jax.ShapeDtypeStruct((nb, LG, D), jnp.float32),
        grid=(nb,),
        in_specs=[pl.BlockSpec((1, LG, D), lambda i: (i, 0, 0))]
        + [pl.BlockSpec(w.shape, lambda i: (0, 0)) for w in weights],
        out_specs=pl.BlockSpec((1, LG, D), lambda i: (i, 0, 0)),
        scratch_shapes=[
            pltpu.VMEM((LG, E), jnp.float32),                   # delta
            pltpu.VMEM((LG, E), jnp.float32),                   # u (post conv+silu)
            pltpu.VMEM((LG, E), jnp.float32),                   # gate = silu(z)
            pltpu.VMEM((LG, 2 * N), jnp.float32),               # packed [B | C]
            pltpu.VMEM((LG, E), jnp.float32),                   # y
            pltpu.VMEM((LG + (K - 1) * G, E), jnp.float32),     # conv pad buffer
            pltpu.VMEM((t_chunk * G, N, EC), jnp.float32),      # exp(Δ·A) chunk
        ],
        compiler_params=pltpu.CompilerParams(
            dimension_semantics=("parallel",),       # batch/direction blocks
            vmem_limit_bytes=_vmem_limit_bytes()),
    )(xx, *weights)


# ------------------------------ block_1D forward ------------------------------

def block_1d_forward(x, params, bi=True, cls=True):
    B, L, D = x.shape

    if bi:
        if cls:
            # reverse the patch tokens, keep the cls token (last position)
            x_rev = jnp.concatenate(
                [jnp.flip(x[:, :L - 1, :], axis=1), x[:, L - 1:, :]], axis=1)
        else:
            x_rev = jnp.flip(x, axis=1)
        # copies ordered (b, dir): copy 2b = forward, 2b+1 = reversed
        xc = jnp.stack([x, x_rev], axis=1).reshape(B * 2, L, D)
        S = 2 * B
    else:
        xc = x
        S = B

    # --- batch/direction copies per block: G = 8 (one sublane tile). ---------
    G = 8
    nb = -(-S // G)
    if nb == 1 and S >= 2:
        nb = 2       # keep both v7x TensorCores busy; tiny padded blocks anyway
    S_pad = nb * G

    # --- time chunk for the exp pre-pass; pad L so every chunk is full -------
    t_chunk = L if L <= 32 else 32
    L_pad = -(-L // t_chunk) * t_chunk

    xp = jnp.pad(xc, ((0, S_pad - S), (0, L_pad - L), (0, 0)))
    # interleave copies across blocks (copy s -> block s % nb, slot s // nb) so
    # real work is balanced even when S < S_pad; rows inside a block are
    # time-major: row = l*G + g.
    xx = xp.reshape(G, nb, L_pad, D).transpose(1, 2, 0, 3).reshape(nb, L_pad * G, D)

    yy = _ssm_pallas(xx, params, n_copies=G, t_chunk=t_chunk)      # (nb, LpG, D)

    yc = yy.reshape(nb, L_pad, G, D).transpose(2, 0, 1, 3).reshape(S_pad, L_pad, D)
    yc = yc[:S, :L, :]

    if bi:
        pairs = yc.reshape(B, 2, L, D)
        x1 = pairs[:, 0]
        x3 = pairs[:, 1]
        if cls:
            x3 = jnp.concatenate(
                [jnp.flip(x3[:, :L - 1, :], axis=1), x3[:, L - 1:, :]], axis=1)
        else:
            x3 = jnp.flip(x3, axis=1)
        # DropPath(0) == identity
        return 0.5 * (x1 + x3) + x
    else:
        return yc + x


# ------------------------------ parameter init --------------------------------

def _normal(key, shape, scale):
    return scale * jax.random.normal(key, shape, dtype=jnp.float32)


def init_params(key, d_model, d_state=16, expand=2, d_conv=4):
    d_inner = expand * d_model
    dt_rank = max(1, (d_model + 15) // 16)
    ks = jax.random.split(key, 8)
    w_in = _normal(ks[0], (d_model, 2 * d_inner), d_model ** -0.5)
    w_x = _normal(ks[1], (d_inner, dt_rank + 2 * d_state), d_inner ** -0.5)
    w_dt = _normal(ks[2], (dt_rank, d_inner), dt_rank ** -0.5)
    w_out = _normal(ks[3], (d_inner, d_model), d_inner ** -0.5)
    # fold the rank-R dt projection into x_proj (f32 fold, bf16 storage):
    # delta_pre = (u @ w_x)[:, :R] @ w_dt == u @ (w_x[:, :R] @ w_dt)
    w_xm = jnp.concatenate([w_x[:, :dt_rank] @ w_dt, w_x[:, dt_rank:]], axis=1)
    return {
        "ln_g": jnp.ones((1, d_model), jnp.float32),
        "ln_b": jnp.zeros((1, d_model), jnp.float32),
        # bf16 for MXU matmul weights (f32 accumulation in-kernel)
        "w_in": w_in.astype(jnp.bfloat16),
        "w_xm": w_xm.astype(jnp.bfloat16),
        "w_out": w_out.astype(jnp.bfloat16),
        # f32 for conv / elementwise / scan parameters (keeps v5e on VPU f32)
        "conv_w": _normal(ks[4], (d_conv, d_inner), d_conv ** -0.5),
        "conv_b": _normal(ks[5], (1, d_inner), 0.02),
        "b_dt": _normal(ks[6], (1, d_inner), 0.1),
        # S4D-real init: A[d, n] = -(n+1); stored pre-transposed (d_state, d_inner)
        "A_T": -jnp.broadcast_to(
            jnp.arange(1, d_state + 1, dtype=jnp.float32)[:, None],
            (d_state, d_inner)),
        "D": jnp.ones((1, d_inner), jnp.float32),
    }


# ---------------------------------- main --------------------------------------

if __name__ == "__main__":
    key = jax.random.PRNGKey(0)
    k_param, k_x = jax.random.split(key)

    B, L, D = 2, 9, 32          # 8 patch tokens + 1 cls token, hidden_dim=32
    d_state = 16

    params = init_params(k_param, d_model=D, d_state=d_state)
    x = jax.random.normal(k_x, (B, L, D), dtype=jnp.float32)

    fwd = jax.jit(functools.partial(block_1d_forward, bi=True, cls=True))
    out = fwd(x, params)
    out = jax.block_until_ready(out)

    assert out.shape == (B, L, D)
    assert out.dtype == jnp.float32
    assert bool(jnp.all(jnp.isfinite(out)))
    print("KERNEL_OK")
</pallas_src>

<mosaic_0001>
module attributes {stable_mosaic.version = 11 : i64} {
  func.func @_fused_block_kernel(%arg0: i32, %arg1: memref<1x72x32xf32, #tpu.memory_space<vmem>>, %arg2: memref<1x32xf32, #tpu.memory_space<vmem>>, %arg3: memref<1x32xf32, #tpu.memory_space<vmem>>, %arg4: memref<32x128xbf16, #tpu.memory_space<vmem>>, %arg5: memref<4x64xf32, #tpu.memory_space<vmem>>, %arg6: memref<1x64xf32, #tpu.memory_space<vmem>>, %arg7: memref<64x96xbf16, #tpu.memory_space<vmem>>, %arg8: memref<1x64xf32, #tpu.memory_space<vmem>>, %arg9: memref<16x64xf32, #tpu.memory_space<vmem>>, %arg10: memref<1x64xf32, #tpu.memory_space<vmem>>, %arg11: memref<64x32xbf16, #tpu.memory_space<vmem>>, %arg12: memref<1x72x32xf32, #tpu.memory_space<vmem>>, %arg13: memref<72x64xf32, #tpu.memory_space<vmem>>, %arg14: memref<72x64xf32, #tpu.memory_space<vmem>>, %arg15: memref<72x64xf32, #tpu.memory_space<vmem>>, %arg16: memref<72x32xf32, #tpu.memory_space<vmem>>, %arg17: memref<72x64xf32, #tpu.memory_space<vmem>>, %arg18: memref<96x64xf32, #tpu.memory_space<vmem>>, %arg19: memref<72x16x64xf32, #tpu.memory_space<vmem>>) attributes {dimension_semantics = [#tpu.dimension_semantics<parallel>], iteration_bounds = array<i64: 2>, scalar_prefetch = 0 : i64, scratch_operands = 7 : i64, tpu.core_type = #tpu.core_type<tc>, window_params = [{transform_indices = @transform_0, window_bounds = array<i64: 1, 72, 32>}, {pipeline_mode = #tpu.pipeline_mode<synchronous>, transform_indices = @transform_1, window_bounds = array<i64: 1, 32>}, {pipeline_mode = #tpu.pipeline_mode<synchronous>, transform_indices = @transform_2, window_bounds = array<i64: 1, 32>}, {pipeline_mode = #tpu.pipeline_mode<synchronous>, transform_indices = @transform_3, window_bounds = array<i64: 32, 128>}, {pipeline_mode = #tpu.pipeline_mode<synchronous>, transform_indices = @transform_4, window_bounds = array<i64: 4, 64>}, {pipeline_mode = #tpu.pipeline_mode<synchronous>, transform_indices = @transform_5, window_bounds = array<i64: 1, 64>}, {pipeline_mode = #tpu.pipeline_mode<synchronous>, transform_indices = @transform_6, window_bounds = array<i64: 64, 96>}, {pipeline_mode = #tpu.pipeline_mode<synchronous>, transform_indices = @transform_7, window_bounds = array<i64: 1, 64>}, {pipeline_mode = #tpu.pipeline_mode<synchronous>, transform_indices = @transform_8, window_bounds = array<i64: 16, 64>}, {pipeline_mode = #tpu.pipeline_mode<synchronous>, transform_indices = @transform_9, window_bounds = array<i64: 1, 64>}, {pipeline_mode = #tpu.pipeline_mode<synchronous>, transform_indices = @transform_10, window_bounds = array<i64: 64, 32>}, {transform_indices = @transform_11, window_bounds = array<i64: 1, 72, 32>}]} {
    %c0 = arith.constant 0 : index
    %c0_0 = arith.constant 0 : index
    %c0_1 = arith.constant 0 : index
    %0 = vector.load %arg1[%c0, %c0_0, %c0_1] : memref<1x72x32xf32, #tpu.memory_space<vmem>>, vector<1x72x32xf32>
    %1 = vector.shape_cast %0 : vector<1x72x32xf32> to vector<72x32xf32>
    %cst = arith.constant dense<0.000000e+00> : vector<72xf32>
    %2 = vector.multi_reduction <add>, %1, %cst [1] : vector<72x32xf32> to vector<72xf32>
    %3 = vector.shape_cast %2 : vector<72xf32> to vector<72x1xf32>
    %cst_2 = arith.constant 3.200000e+01 : f32
    %4 = vector.broadcast %cst_2 : f32 to vector<72x1xf32>
    %5 = arith.divf %3, %4 : vector<72x1xf32>
    %6 = vector.broadcast %5 : vector<72x1xf32> to vector<72x32xf32>
    %7 = arith.subf %1, %6 : vector<72x32xf32>
    %8 = arith.mulf %7, %7 : vector<72x32xf32>
    %cst_3 = arith.constant dense<0.000000e+00> : vector<72xf32>
    %9 = vector.multi_reduction <add>, %8, %cst_3 [1] : vector<72x32xf32> to vector<72xf32>
    %10 = vector.shape_cast %9 : vector<72xf32> to vector<72x1xf32>
    %cst_4 = arith.constant 3.200000e+01 : f32
    %11 = vector.broadcast %cst_4 : f32 to vector<72x1xf32>
    %12 = arith.divf %10, %11 : vector<72x1xf32>
    %cst_5 = arith.constant 9.99999997E-7 : f32
    %13 = vector.broadcast %cst_5 : f32 to vector<72x1xf32>
    %14 = arith.addf %12, %13 : vector<72x1xf32>
    %15 = math.rsqrt %14 : vector<72x1xf32>
    %16 = vector.broadcast %15 : vector<72x1xf32> to vector<72x32xf32>
    %17 = arith.mulf %7, %16 : vector<72x32xf32>
    %c0_6 = arith.constant 0 : index
    %c0_7 = arith.constant 0 : index
    %18 = vector.load %arg2[%c0_6, %c0_7] : memref<1x32xf32, #tpu.memory_space<vmem>>, vector<1x32xf32>
    %19 = vector.broadcast %18 : vector<1x32xf32> to vector<72x32xf32>
    %20 = arith.mulf %17, %19 : vector<72x32xf32>
    %c0_8 = arith.constant 0 : index
    %c0_9 = arith.constant 0 : index
    %21 = vector.load %arg3[%c0_8, %c0_9] : memref<1x32xf32, #tpu.memory_space<vmem>>, vector<1x32xf32>
    %22 = vector.broadcast %21 : vector<1x32xf32> to vector<72x32xf32>
    %23 = arith.addf %20, %22 : vector<72x32xf32>
    %24 = arith.truncf %23 : vector<72x32xf32> to vector<72x32xbf16>
    %c0_10 = arith.constant 0 : index
    %c0_11 = arith.constant 0 : index
    %25 = vector.load %arg4[%c0_10, %c0_11] : memref<32x128xbf16, #tpu.memory_space<vmem>>, vector<32x128xbf16>
    %cst_12 = arith.constant dense<0.000000e+00> : vector<72x128xf32>
    %26 = tpu.matmul %24, %25, %cst_12 {dimension_numbers = #tpu.dot_dimension_numbers<[1], [0], [0], [1], [0, 0, 1, 1], [], []>} : vector<72x32xbf16>, vector<32x128xbf16>, vector<72x128xf32> -> vector<72x128xf32>
    %27 = vector.extract_strided_slice %26 {offsets = [0, 0], sizes = [72, 64], strides = [1, 1]} : vector<72x128xf32> to vector<72x64xf32>
    %28 = vector.extract_strided_slice %26 {offsets = [0, 64], sizes = [72, 64], strides = [1, 1]} : vector<72x128xf32> to vector<72x64xf32>
    %cst_13 = arith.constant 0.000000e+00 : f32
    %29 = vector.broadcast %cst_13 : f32 to vector<72x64xf32>
    %30 = arith.subf %29, %28 : vector<72x64xf32>
    %31 = math.exp %30 : vector<72x64xf32>
    %cst_14 = arith.constant 1.000000e+00 : f32
    %32 = vector.broadcast %cst_14 : f32 to vector<72x64xf32>
    %33 = arith.addf %32, %31 : vector<72x64xf32>
    %cst_15 = arith.constant 1.000000e+00 : f32
    %34 = vector.broadcast %cst_15 : f32 to vector<72x64xf32>
    %35 = arith.divf %34, %33 : vector<72x64xf32>
    %36 = arith.mulf %28, %35 : vector<72x64xf32>
    %c0_16 = arith.constant 0 : index
    %c0_17 = arith.constant 0 : index
    %37 = vector.load %arg15[%c0_16, %c0_17] : memref<72x64xf32, #tpu.memory_space<vmem>>, vector<72x64xf32>
    tpu.vector_store %arg15[%c0_16, %c0_17], %36 {strides = array<i32>} : memref<72x64xf32, #tpu.memory_space<vmem>>, vector<72x64xf32>,
    %cst_18 = arith.constant 0.000000e+00 : f32
    %38 = vector.broadcast %cst_18 : f32 to vector<24x64xf32>
    %c0_19 = arith.constant 0 : index
    %c0_20 = arith.constant 0 : index
    %39 = vector.load %arg18[%c0_19, %c0_20] : memref<96x64xf32, #tpu.memory_space<vmem>>, vector<24x64xf32>
    tpu.vector_store %arg18[%c0_19, %c0_20], %38 {strides = array<i32>} : memref<96x64xf32, #tpu.memory_space<vmem>>, vector<24x64xf32>,
    %c24 = arith.constant 24 : index
    %c0_21 = arith.constant 0 : index
    %40 = vector.load %arg18[%c24, %c0_21] : memref<96x64xf32, #tpu.memory_space<vmem>>, vector<72x64xf32>
    tpu.vector_store %arg18[%c24, %c0_21], %27 {strides = array<i32>} : memref<96x64xf32, #tpu.memory_space<vmem>>, vector<72x64xf32>,
    %cst_22 = arith.constant 0.000000e+00 : f32
    %41 = vector.broadcast %cst_22 : f32 to vector<72x64xf32>
    %c0_23 = arith.constant 0 : index
    %c0_24 = arith.constant 0 : index
    %42 = vector.load %arg18[%c0_23, %c0_24] : memref<96x64xf32, #tpu.memory_space<vmem>>, vector<72x64xf32>
    %c0_25 = arith.constant 0 : index
    %c0_26 = arith.constant 0 : index
    %43 = vector.load %arg5[%c0_25, %c0_26] : memref<4x64xf32, #tpu.memory_space<vmem>>, vector<1x64xf32>
    %44 = vector.broadcast %43 : vector<1x64xf32> to vector<72x64xf32>
    %45 = arith.mulf %42, %44 : vector<72x64xf32>
    %46 = arith.addf %41, %45 : vector<72x64xf32>
    %c8 = arith.constant 8 : index
    %c0_27 = arith.constant 0 : index
    %47 = vector.load %arg18[%c8, %c0_27] : memref<96x64xf32, #tpu.memory_space<vmem>>, vector<72x64xf32>
    %c1 = arith.constant 1 : index
    %c0_28 = arith.constant 0 : index
    %48 = vector.load %arg5[%c1, %c0_28] : memref<4x64xf32, #tpu.memory_space<vmem>>, vector<1x64xf32>
    %49 = vector.broadcast %48 : vector<1x64xf32> to vector<72x64xf32>
    %50 = arith.mulf %47, %49 : vector<72x64xf32>
    %51 = arith.addf %46, %50 : vector<72x64xf32>
    %c16 = arith.constant 16 : index
    %c0_29 = arith.constant 0 : index
    %52 = vector.load %arg18[%c16, %c0_29] : memref<96x64xf32, #tpu.memory_space<vmem>>, vector<72x64xf32>
    %c2 = arith.constant 2 : index
    %c0_30 = arith.constant 0 : index
    %53 = vector.load %arg5[%c2, %c0_30] : memref<4x64xf32, #tpu.memory_space<vmem>>, vector<1x64xf32>
    %54 = vector.broadcast %53 : vector<1x64xf32> to vector<72x64xf32>
    %55 = arith.mulf %52, %54 : vector<72x64xf32>
    %56 = arith.addf %51, %55 : vector<72x64xf32>
    %c24_31 = arith.constant 24 : index
    %c0_32 = arith.constant 0 : index
    %57 = vector.load %arg18[%c24_31, %c0_32] : memref<96x64xf32, #tpu.memory_space<vmem>>, vector<72x64xf32>
    %c3 = arith.constant 3 : index
    %c0_33 = arith.constant 0 : index
    %58 = vector.load %arg5[%c3, %c0_33] : memref<4x64xf32, #tpu.memory_space<vmem>>, vector<1x64xf32>
    %59 = vector.broadcast %58 : vector<1x64xf32> to vector<72x64xf32>
    %60 = arith.mulf %57, %59 : vector<72x64xf32>
    %61 = arith.addf %56, %60 : vector<72x64xf32>
    %c0_34 = arith.constant 0 : index
    %c0_35 = arith.constant 0 : index
    %62 = vector.load %arg6[%c0_34, %c0_35] : memref<1x64xf32, #tpu.memory_space<vmem>>, vector<1x64xf32>
    %63 = vector.broadcast %62 : vector<1x64xf32> to vector<72x64xf32>
    %64 = arith.addf %61, %63 : vector<72x64xf32>
    %cst_36 = arith.constant 0.000000e+00 : f32
    %65 = vector.broadcast %cst_36 : f32 to vector<72x64xf32>
    %66 = arith.subf %65, %64 : vector<72x64xf32>
    %67 = math.exp %66 : vector<72x64xf32>
    %cst_37 = arith.constant 1.000000e+00 : f32
    %68 = vector.broadcast %cst_37 : f32 to vector<72x64xf32>
    %69 = arith.addf %68, %67 : vector<72x64xf32>
    %cst_38 = arith.constant 1.000000e+00 : f32
    %70 = vector.broadcast %cst_38 : f32 to vector<72x64xf32>
    %71 = arith.divf %70, %69 : vector<72x64xf32>
    %72 = arith.mulf %64, %71 : vector<72x64xf32>
    %c0_39 = arith.constant 0 : index
    %c0_40 = arith.constant 0 : index
    %73 = vector.load %arg14[%c0_39, %c0_40] : memref<72x64xf32, #tpu.memory_space<vmem>>, vector<72x64xf32>
    tpu.vector_store %arg14[%c0_39, %c0_40], %72 {strides = array<i32>} : memref<72x64xf32, #tpu.memory_space<vmem>>, vector<72x64xf32>,
    %74 = arith.truncf %72 : vector<72x64xf32> to vector<72x64xbf16>
    %c0_41 = arith.constant 0 : index
    %c0_42 = arith.constant 0 : index
    %75 = vector.load %arg7[%c0_41, %c0_42] : memref<64x96xbf16, #tpu.memory_space<vmem>>, vector<64x96xbf16>
    %cst_43 = arith.constant dense<0.000000e+00> : vector<72x96xf32>
    %76 = tpu.matmul %74, %75, %cst_43 {dimension_numbers = #tpu.dot_dimension_numbers<[1], [0], [0], [1], [0, 0, 1, 1], [], []>} : vector<72x64xbf16>, vector<64x96xbf16>, vector<72x96xf32> -> vector<72x96xf32>
    %77 = vector.extract_strided_slice %76 {offsets = [0, 0], sizes = [72, 64], strides = [1, 1]} : vector<72x96xf32> to vector<72x64xf32>
    %c0_44 = arith.constant 0 : index
    %c0_45 = arith.constant 0 : index
    %78 = vector.load %arg8[%c0_44, %c0_45] : memref<1x64xf32, #tpu.memory_space<vmem>>, vector<1x64xf32>
    %79 = vector.broadcast %78 : vector<1x64xf32> to vector<72x64xf32>
    %80 = arith.addf %77, %79 : vector<72x64xf32>
    %cst_46 = arith.constant 2.000000e+01 : f32
    %81 = vector.broadcast %cst_46 : f32 to vector<72x64xf32>
    %82 = arith.cmpf ogt, %80, %81 : vector<72x64xf32>
    %cst_47 = arith.constant 2.000000e+01 : f32
    %83 = vector.broadcast %cst_47 : f32 to vector<72x64xf32>
    %84 = arith.minimumf %80, %83 : vector<72x64xf32>
    %85 = math.exp %84 : vector<72x64xf32>
    %cst_48 = arith.constant 1.000000e+00 : f32
    %86 = vector.broadcast %cst_48 : f32 to vector<72x64xf32>
    %87 = arith.addf %86, %85 : vector<72x64xf32>
    %88 = math.log %87 : vector<72x64xf32>
    %89 = arith.select %82, %80, %88 : vector<72x64xi1>, vector<72x64xf32>
    %c0_49 = arith.constant 0 : index
    %c0_50 = arith.constant 0 : index
    %90 = vector.load %arg13[%c0_49, %c0_50] : memref<72x64xf32, #tpu.memory_space<vmem>>, vector<72x64xf32>
    tpu.vector_store %arg13[%c0_49, %c0_50], %89 {strides = array<i32>} : memref<72x64xf32, #tpu.memory_space<vmem>>, vector<72x64xf32>,
    %91 = vector.extract_strided_slice %76 {offsets = [0, 64], sizes = [72, 32], strides = [1, 1]} : vector<72x96xf32> to vector<72x32xf32>
    %c0_51 = arith.constant 0 : index
    %c0_52 = arith.constant 0 : index
    %92 = vector.load %arg16[%c0_51, %c0_52] : memref<72x32xf32, #tpu.memory_space<vmem>>, vector<72x32xf32>
    tpu.vector_store %arg16[%c0_51, %c0_52], %91 {strides = array<i32>} : memref<72x32xf32, #tpu.memory_space<vmem>>, vector<72x32xf32>,
    %c0_53 = arith.constant 0 : index
    %c0_54 = arith.constant 0 : index
    %93 = vector.load %arg9[%c0_53, %c0_54] : memref<16x64xf32, #tpu.memory_space<vmem>>, vector<16x64xf32>
    %cst_55 = arith.constant 0.000000e+00 : f32
    %94 = vector.broadcast %cst_55 : f32 to vector<8x16x64xf32>
    %c0_i32 = arith.constant 0 : i32
    %c72_i32 = arith.constant 72 : i32
    %95 = arith.muli %c0_i32, %c72_i32 : i32
    %96 = tpu.assume_multiple %95, 8 : i32
    %97 = arith.index_cast %96 : i32 to index
    %c0_56 = arith.constant 0 : index
    %98 = vector.load %arg13[%97, %c0_56] : memref<72x64xf32, #tpu.memory_space<vmem>>, vector<72x64xf32>
    %99 = vector.shape_cast %98 : vector<72x64xf32> to vector<72x1x64xf32>
    %100 = vector.shape_cast %93 : vector<16x64xf32> to vector<1x16x64xf32>
    %101 = vector.broadcast %99 : vector<72x1x64xf32> to vector<72x16x64xf32>
    %102 = vector.broadcast %100 : vector<1x16x64xf32> to vector<72x16x64xf32>
    %103 = arith.mulf %101, %102 : vector<72x16x64xf32>
    %104 = math.exp %103 : vector<72x16x64xf32>
    %c0_57 = arith.constant 0 : index
    %c0_58 = arith.constant 0 : index
    %c0_59 = arith.constant 0 : index
    %105 = vector.load %arg19[%c0_57, %c0_58, %c0_59] : memref<72x16x64xf32, #tpu.memory_space<vmem>>, vector<72x16x64xf32>
    tpu.vector_store %arg19[%c0_57, %c0_58, %c0_59], %104 {strides = array<i32>} : memref<72x16x64xf32, #tpu.memory_space<vmem>>, vector<72x16x64xf32>,
    %c0_i32_60 = arith.constant 0 : i32
    %c9_i32 = arith.constant 9 : i32
    %106 = arith.addi %c0_i32_60, %c9_i32 : i32
    %c1_i32 = arith.constant 1 : i32
    %107 = scf.for %arg20 = %c0_i32_60 to %106 step %c1_i32 iter_args(%arg21 = %94) -> (vector<8x16x64xf32>)  : i32 {
      %c8_i32 = arith.constant 8 : i32
      %122 = arith.muli %arg20, %c8_i32 : i32
      %123 = tpu.assume_multiple %122, 8 : i32
      %c8_i32_77 = arith.constant 8 : i32
      %124 = arith.muli %arg20, %c8_i32_77 : i32
      %125 = arith.addi %96, %124 : i32
      %126 = tpu.assume_multiple %125, 8 : i32
      %127 = arith.index_cast %123 : i32 to index
      %c0_78 = arith.constant 0 : index
      %c0_79 = arith.constant 0 : index
      %128 = vector.load %arg19[%127, %c0_78, %c0_79] : memref<72x16x64xf32, #tpu.memory_space<vmem>>, vector<8x16x64xf32>
      %129 = arith.index_cast %126 : i32 to index
      %c0_80 = arith.constant 0 : index
      %130 = vector.load %arg13[%129, %c0_80] : memref<72x64xf32, #tpu.memory_space<vmem>>, vector<8x64xf32>
      %131 = arith.index_cast %126 : i32 to index
      %c0_81 = arith.constant 0 : index
      %132 = vector.load %arg14[%131, %c0_81] : memref<72x64xf32, #tpu.memory_space<vmem>>, vector<8x64xf32>
      %133 = arith.index_cast %126 : i32 to index
      %c0_82 = arith.constant 0 : index
      %134 = vector.load %arg16[%133, %c0_82] : memref<72x32xf32, #tpu.memory_space<vmem>>, vector<8x32xf32>
      %135 = vector.extract_strided_slice %134 {offsets = [0, 0], sizes = [8, 16], strides = [1, 1]} : vector<8x32xf32> to vector<8x16xf32>
      %136 = vector.extract_strided_slice %134 {offsets = [0, 16], sizes = [8, 16], strides = [1, 1]} : vector<8x32xf32> to vector<8x16xf32>
      %137 = arith.mulf %130, %132 : vector<8x64xf32>
      %138 = arith.mulf %128, %arg21 : vector<8x16x64xf32>
      %139 = vector.shape_cast %135 : vector<8x16xf32> to vector<8x16x1xf32>
      %140 = vector.shape_cast %137 : vector<8x64xf32> to vector<8x1x64xf32>
      %141 = vector.broadcast %139 : vector<8x16x1xf32> to vector<8x16x64xf32>
      %142 = vector.broadcast %140 : vector<8x1x64xf32> to vector<8x16x64xf32>
      %143 = arith.mulf %141, %142 : vector<8x16x64xf32>
      %144 = arith.addf %138, %143 : vector<8x16x64xf32>
      %145 = vector.shape_cast %136 : vector<8x16xf32> to vector<8x16x1xf32>
      %146 = vector.broadcast %145 : vector<8x16x1xf32> to vector<8x16x64xf32>
      %147 = arith.mulf %146, %144 : vector<8x16x64xf32>
      %cst_83 = arith.constant dense<0.000000e+00> : vector<8x64xf32>
      %148 = vector.multi_reduction <add>, %147, %cst_83 [1] : vector<8x16x64xf32> to vector<8x64xf32>
      %149 = arith.index_cast %126 : i32 to index
      %c0_84 = arith.constant 0 : index
      %150 = vector.load %arg17[%149, %c0_84] : memref<72x64xf32, #tpu.memory_space<vmem>>, vector<8x64xf32>
      tpu.vector_store %arg17[%149, %c0_84], %148 {strides = array<i32>} : memref<72x64xf32, #tpu.memory_space<vmem>>, vector<8x64xf32>,
      scf.yield %144 : vector<8x16x64xf32>
    }
    %c9_i32_61 = arith.constant 9 : i32
    %c1_i32_62 = arith.constant 1 : i32
    %c0_63 = arith.constant 0 : index
    %c0_64 = arith.constant 0 : index
    %108 = vector.load %arg17[%c0_63, %c0_64] : memref<72x64xf32, #tpu.memory_space<vmem>>, vector<72x64xf32>
    %c0_65 = arith.constant 0 : index
    %c0_66 = arith.constant 0 : index
    %109 = vector.load %arg14[%c0_65, %c0_66] : memref<72x64xf32, #tpu.memory_space<vmem>>, vector<72x64xf32>
    %c0_67 = arith.constant 0 : index
    %c0_68 = arith.constant 0 : index
    %110 = vector.load %arg10[%c0_67, %c0_68] : memref<1x64xf32, #tpu.memory_space<vmem>>, vector<1x64xf32>
    %111 = vector.broadcast %110 : vector<1x64xf32> to vector<72x64xf32>
    %112 = arith.mulf %109, %111 : vector<72x64xf32>
    %113 = arith.addf %108, %112 : vector<72x64xf32>
    %c0_69 = arith.constant 0 : index
    %c0_70 = arith.constant 0 : index
    %114 = vector.load %arg15[%c0_69, %c0_70] : memref<72x64xf32, #tpu.memory_space<vmem>>, vector<72x64xf32>
    %115 = arith.mulf %113, %114 : vector<72x64xf32>
    %116 = arith.truncf %115 : vector<72x64xf32> to vector<72x64xbf16>
    %c0_71 = arith.constant 0 : index
    %c0_72 = arith.constant 0 : index
    %117 = vector.load %arg11[%c0_71, %c0_72] : memref<64x32xbf16, #tpu.memory_space<vmem>>, vector<64x32xbf16>
    %cst_73 = arith.constant dense<0.000000e+00> : vector<72x32xf32>
    %118 = tpu.matmul %116, %117, %cst_73 {dimension_numbers = #tpu.dot_dimension_numbers<[1], [0], [0], [1], [0, 0, 1, 1], [], []>} : vector<72x64xbf16>, vector<64x32xbf16>, vector<72x32xf32> -> vector<72x32xf32>
    %c0_74 = arith.constant 0 : index
    %c0_75 = arith.constant 0 : index
    %c0_76 = arith.constant 0 : index
    %119 = vector.load %arg12[%c0_74, %c0_75, %c0_76] : memref<1x72x32xf32, #tpu.memory_space<vmem>>, vector<1x72x32xf32>
    %120 = vector.shape_cast %119 : vector<1x72x32xf32> to vector<72x32xf32>
    %121 = vector.shape_cast %118 : vector<72x32xf32> to vector<1x72x32xf32>
    tpu.vector_store %arg12[%c0_74, %c0_75, %c0_76], %121 {strides = array<i32>} : memref<1x72x32xf32, #tpu.memory_space<vmem>>, vector<1x72x32xf32>,
    return
  }
  func.func @transform_0(%arg0: i32) -> (i32, i32, i32) {
    %c0_i32 = arith.constant 0 : i32
    %c0_i32_0 = arith.constant 0 : i32
    %c0_i32_1 = arith.constant 0 : i32
    return %arg0, %c0_i32, %c0_i32_0 : i32, i32, i32
  }
  func.func @transform_1(%arg0: i32) -> (i32, i32) {
    %c0_i32 = arith.constant 0 : i32
    %c0_i32_0 = arith.constant 0 : i32
    %c0_i32_1 = arith.constant 0 : i32
    return %c0_i32, %c0_i32_0 : i32, i32
  }
  func.func @transform_2(%arg0: i32) -> (i32, i32) {
    %c0_i32 = arith.constant 0 : i32
    %c0_i32_0 = arith.constant 0 : i32
    %c0_i32_1 = arith.constant 0 : i32
    return %c0_i32, %c0_i32_0 : i32, i32
  }
  func.func @transform_3(%arg0: i32) -> (i32, i32) {
    %c0_i32 = arith.constant 0 : i32
    %c0_i32_0 = arith.constant 0 : i32
    %c0_i32_1 = arith.constant 0 : i32
    return %c0_i32, %c0_i32_0 : i32, i32
  }
  func.func @transform_4(%arg0: i32) -> (i32, i32) {
    %c0_i32 = arith.constant 0 : i32
    %c0_i32_0 = arith.constant 0 : i32
    %c0_i32_1 = arith.constant 0 : i32
    return %c0_i32, %c0_i32_0 : i32, i32
  }
  func.func @transform_5(%arg0: i32) -> (i32, i32) {
    %c0_i32 = arith.constant 0 : i32
    %c0_i32_0 = arith.constant 0 : i32
    %c0_i32_1 = arith.constant 0 : i32
    return %c0_i32, %c0_i32_0 : i32, i32
  }
  func.func @transform_6(%arg0: i32) -> (i32, i32) {
    %c0_i32 = arith.constant 0 : i32
    %c0_i32_0 = arith.constant 0 : i32
    %c0_i32_1 = arith.constant 0 : i32
    return %c0_i32, %c0_i32_0 : i32, i32
  }
  func.func @transform_7(%arg0: i32) -> (i32, i32) {
    %c0_i32 = arith.constant 0 : i32
    %c0_i32_0 = arith.constant 0 : i32
    %c0_i32_1 = arith.constant 0 : i32
    return %c0_i32, %c0_i32_0 : i32, i32
  }
  func.func @transform_8(%arg0: i32) -> (i32, i32) {
    %c0_i32 = arith.constant 0 : i32
    %c0_i32_0 = arith.constant 0 : i32
    %c0_i32_1 = arith.constant 0 : i32
    return %c0_i32, %c0_i32_0 : i32, i32
  }
  func.func @transform_9(%arg0: i32) -> (i32, i32) {
    %c0_i32 = arith.constant 0 : i32
    %c0_i32_0 = arith.constant 0 : i32
    %c0_i32_1 = arith.constant 0 : i32
    return %c0_i32, %c0_i32_0 : i32, i32
  }
  func.func @transform_10(%arg0: i32) -> (i32, i32) {
    %c0_i32 = arith.constant 0 : i32
    %c0_i32_0 = arith.constant 0 : i32
    %c0_i32_1 = arith.constant 0 : i32
    return %c0_i32, %c0_i32_0 : i32, i32
  }
  func.func @transform_11(%arg0: i32) -> (i32, i32, i32) {
    %c0_i32 = arith.constant 0 : i32
    %c0_i32_0 = arith.constant 0 : i32
    %c0_i32_1 = arith.constant 0 : i32
    return %arg0, %c0_i32, %c0_i32_0 : i32, i32, i32
  }
}

</mosaic_0001>

<llo_original>
// kernel: block_1d_forward.1
$region0: #{block_1d_forward.1}
  #allocation0 [shape = 'u32[]', space=smem, size = 0x4, offset = 0x4, fixed_abs, tag = 'smem constant byte address 0x4 - core index']
  #allocation1 [shape = 'u32[144,128]{1,0:T(1,128)}', space=vmem, size = 0x12000, scoped, tag = 'internal scratch']
  #allocation2 [shape = 'f32[72,64]{1,0:T(8,128)}', space=vmem, size = 0x9000, scoped, tag = 'scratch operand']
  #allocation3 [shape = 'f32[72,64]{1,0:T(8,128)}', space=vmem, size = 0x9000, scoped, tag = 'scratch operand']
  #allocation4 [shape = 'f32[72,64]{1,0:T(8,128)}', space=vmem, size = 0x9000, scoped, tag = 'scratch operand']
  #allocation5 [shape = 'f32[72,32]{1,0:T(8,128)}', space=vmem, size = 0x9000, scoped, tag = 'scratch operand']
  #allocation6 [shape = 'f32[72,64]{1,0:T(8,128)}', space=vmem, size = 0x9000, scoped, tag = 'scratch operand']
  #allocation7 [shape = 'f32[96,64]{1,0:T(8,128)}', space=vmem, size = 0xc000, scoped, tag = 'scratch operand']
  #allocation8 [shape = 'f32[72,16,64]{2,1,0:T(8,128)}', space=vmem, size = 0x90000, scoped, tag = 'scratch operand']
  %s0 = inlined_call_operand.vmem [shape: f32[2,72,32], index: 0, kind: input, shape index: {}]
  %s1 = inlined_call_operand.vmem [shape: f32[1,32], index: 1, kind: input, shape index: {}]
  %s2 = inlined_call_operand.vmem [shape: f32[1,32], index: 2, kind: input, shape index: {}]
  %s3 = inlined_call_operand.vmem [shape: bf16[32,128], index: 3, kind: input, shape index: {}]
  %s4 = inlined_call_operand.vmem [shape: f32[4,64], index: 4, kind: input, shape index: {}]
  %s5 = inlined_call_operand.vmem [shape: f32[1,64], index: 5, kind: input, shape index: {}]
  %s6 = inlined_call_operand.vmem [shape: bf16[64,96], index: 6, kind: input, shape index: {}]
  %s7 = inlined_call_operand.vmem [shape: f32[1,64], index: 7, kind: input, shape index: {}]
  %s8 = inlined_call_operand.vmem [shape: f32[16,64], index: 8, kind: input, shape index: {}]
  %s9 = inlined_call_operand.vmem [shape: f32[1,64], index: 9, kind: input, shape index: {}]
  %s10 = inlined_call_operand.vmem [shape: bf16[64,32], index: 10, kind: input, shape index: {}]
  %s11 = inlined_call_operand.vmem [shape: f32[2,72,32], index: 11, kind: output, shape index: {}]
  %s12 = sld [smem:[#allocation0]]
  $region84: #{block_1d_forward.1} parent=0
    _
  %s14 = ssub.s32 1, %s12
  %s15 = scalar_select 0, %s14, %s12
  loop: start=0, step=1, limit=4
  $region2: #{block_1d_forward.1} parent=0 // loop_pre_header
    _
  $region3: #{block_1d_forward.1} parent=0 // loop_header
    %s17 = sphi 0, %s21
    %p18 = scmp.ge.s32.totalorder %s17, 4
    %s27 = sphi 0, %s29
    %s30 = sphi 0, %s27
    %s31 = sphi 0, %s30
    %s47 = sphi 0, %s31
    %s51 = sphi 0, %s51
    %s53 = sphi 0, %s51
    %s54 = sphi 0, %s53
    %s68 = sphi 0, %s54
    %s72 = sphi 0, %s72
    %s74 = sphi 0, %s72
    %s75 = sphi 0, %s74
    %s89 = sphi 0, %s75
    %s93 = sphi 0, %s93
    %s95 = sphi 0, %s93
    %s96 = sphi 0, %s95
    %s110 = sphi 0, %s96
    %s114 = sphi 0, %s114
    %s116 = sphi 0, %s114
    %s117 = sphi 0, %s116
    %s131 = sphi 0, %s117
    %s135 = sphi 0, %s135
    %s137 = sphi 0, %s135
    %s138 = sphi 0, %s137
    %s152 = sphi 0, %s138
    %s156 = sphi 0, %s156
    %s158 = sphi 0, %s156
    %s159 = sphi 0, %s158
    %s173 = sphi 0, %s159
    %s177 = sphi 0, %s177
    %s179 = sphi 0, %s177
    %s180 = sphi 0, %s179
    %s194 = sphi 0, %s180
    %s198 = sphi 0, %s198
    %s200 = sphi 0, %s198
    %s201 = sphi 0, %s200
    %s215 = sphi 0, %s201
    %s219 = sphi 0, %s219
    %s221 = sphi 0, %s219
    %s222 = sphi 0, %s221
    %s236 = sphi 0, %s222
    %s240 = sphi 0, %s240
    %s242 = sphi 0, %s240
    %s243 = sphi 0, %s242
    %s257 = sphi 0, %s243
    %s263 = sphi 0, %s265
    %s266 = sphi 0, %s263
    %s267 = sphi 0, %s266
    %s283 = sphi 0, %s267
  $region4: #{block_1d_forward.1} parent=0 // loop_header_branch
    %20 = sbr.rel (%p18) target = $region8
  $region5: #{block_1d_forward.1} parent=0 // loop_body
    %s22 = ssub.s32 %s17, 1
    %s23 = ssub.s32 %s17, 2
    %s24 = sadd.s32 %s17, 1
    %s25 = ssub.s32 %s17, %s24
    %p26 = scmp.eq.s32.totalorder %s25, 0
    %s28 = sadd.s32 %s27, 1
    %s29 = scalar_select %p26, %s27, %s28
    %p32 = pneg %p26
    %p33 = scmp.eq.s32.totalorder %s17, 1
    %p34 = por %p32, %p33
    %p35 = scmp.ne.s32.totalorder %s27, %s30
    %p36 = scmp.eq.s32.totalorder %s17, 0
    %p37 = por %p35, %p36
    %p38 = scmp.ne.s32.totalorder %s27, %s30
    %p39 = scmp.eq.s32.totalorder %s22, 1
    %p40 = por %p38, %p39
    %p41 = scmp.ne.s32.totalorder %s30, %s31
    %p42 = scmp.eq.s32.totalorder %s22, 0
    %p43 = por %p41, %p42
    %p44 = scmp.ne.s32.totalorder %s30, %s31
    %p45 = scmp.eq.s32.totalorder %s23, 1
    %p46 = por %p44, %p45
    %p48 = scmp.ne.s32.totalorder %s31, %s47
    %p49 = scmp.eq.s32.totalorder %s23, 0
    %p50 = por %p48, %p49
    %s52 = sadd.s32 %s51, 1
    %p55 = scmp.eq.s32.totalorder %s17, 1
    %p56 = scmp.ne.s32.totalorder %s51, %s53
    %p57 = scmp.eq.s32.totalorder %s17, 0
    %p58 = por %p56, %p57
    %p59 = scmp.ne.s32.totalorder %s51, %s53
    %p60 = scmp.eq.s32.totalorder %s22, 1
    %p61 = por %p59, %p60
    %p62 = scmp.ne.s32.totalorder %s53, %s54
    %p63 = scmp.eq.s32.totalorder %s22, 0
    %p64 = por %p62, %p63
    %p65 = scmp.ne.s32.totalorder %s53, %s54
    %p66 = scmp.eq.s32.totalorder %s23, 1
    %p67 = por %p65, %p66
    %p69 = scmp.ne.s32.totalorder %s54, %s68
    %p70 = scmp.eq.s32.totalorder %s23, 0
    %p71 = por %p69, %p70
    %s73 = sadd.s32 %s72, 1
    %p76 = scmp.eq.s32.totalorder %s17, 1
    %p77 = scmp.ne.s32.totalorder %s72, %s74
    %p78 = scmp.eq.s32.totalorder %s17, 0
    %p79 = por %p77, %p78
    %p80 = scmp.ne.s32.totalorder %s72, %s74
    %p81 = scmp.eq.s32.totalorder %s22, 1
    %p82 = por %p80, %p81
    %p83 = scmp.ne.s32.totalorder %s74, %s75
    %p84 = scmp.eq.s32.totalorder %s22, 0
    %p85 = por %p83, %p84
    %p86 = scmp.ne.s32.totalorder %s74, %s75
    %p87 = scmp.eq.s32.totalorder %s23, 1
    %p88 = por %p86, %p87
    %p90 = scmp.ne.s32.totalorder %s75, %s89
    %p91 = scmp.eq.s32.totalorder %s23, 0
    %p92 = por %p90, %p91
    %s94 = sadd.s32 %s93, 1
    %p97 = scmp.eq.s32.totalorder %s17, 1
    %p98 = scmp.ne.s32.totalorder %s93, %s95
    %p99 = scmp.eq.s32.totalorder %s17, 0
    %p100 = por %p98, %p99
    %p101 = scmp.ne.s32.totalorder %s93, %s95
    %p102 = scmp.eq.s32.totalorder %s22, 1
    %p103 = por %p101, %p102
    %p104 = scmp.ne.s32.totalorder %s95, %s96
    %p105 = scmp.eq.s32.totalorder %s22, 0
    %p106 = por %p104, %p105
    %p107 = scmp.ne.s32.totalorder %s95, %s96
    %p108 = scmp.eq.s32.totalorder %s23, 1
    %p109 = por %p107, %p108
    %p111 = scmp.ne.s32.totalorder %s96, %s110
    %p112 = scmp.eq.s32.totalorder %s23, 0
    %p113 = por %p111, %p112
    %s115 = sadd.s32 %s114, 1
    %p118 = scmp.eq.s32.totalorder %s17, 1
    %p119 = scmp.ne.s32.totalorder %s114, %s116
    %p120 = scmp.eq.s32.totalorder %s17, 0
    %p121 = por %p119, %p120
    %p122 = scmp.ne.s32.totalorder %s114, %s116
    %p123 = scmp.eq.s32.totalorder %s22, 1
    %p124 = por %p122, %p123
    %p125 = scmp.ne.s32.totalorder %s116, %s117
    %p126 = scmp.eq.s32.totalorder %s22, 0
    %p127 = por %p125, %p126
    %p128 = scmp.ne.s32.totalorder %s116, %s117
    %p129 = scmp.eq.s32.totalorder %s23, 1
    %p130 = por %p128, %p129
    %p132 = scmp.ne.s32.totalorder %s117, %s131
    %p133 = scmp.eq.s32.totalorder %s23, 0
    %p134 = por %p132, %p133
    %s136 = sadd.s32 %s135, 1
    %p139 = scmp.eq.s32.totalorder %s17, 1
    %p140 = scmp.ne.s32.totalorder %s135, %s137
    %p141 = scmp.eq.s32.totalorder %s17, 0
    %p142 = por %p140, %p141
    %p143 = scmp.ne.s32.totalorder %s135, %s137
    %p144 = scmp.eq.s32.totalorder %s22, 1
    %p145 = por %p143, %p144
    %p146 = scmp.ne.s32.totalorder %s137, %s138
    %p147 = scmp.eq.s32.totalorder %s22, 0
    %p148 = por %p146, %p147
    %p149 = scmp.ne.s32.totalorder %s137, %s138
    %p150 = scmp.eq.s32.totalorder %s23, 1
    %p151 = por %p149, %p150
    %p153 = scmp.ne.s32.totalorder %s138, %s152
    %p154 = scmp.eq.s32.totalorder %s23, 0
    %p155 = por %p153, %p154
    %s157 = sadd.s32 %s156, 1
    %p160 = scmp.eq.s32.totalorder %s17, 1
    %p161 = scmp.ne.s32.totalorder %s156, %s158
    %p162 = scmp.eq.s32.totalorder %s17, 0
    %p163 = por %p161, %p162
    %p164 = scmp.ne.s32.totalorder %s156, %s158
    %p165 = scmp.eq.s32.totalorder %s22, 1
    %p166 = por %p164, %p165
    %p167 = scmp.ne.s32.totalorder %s158, %s159
    %p168 = scmp.eq.s32.totalorder %s22, 0
    %p169 = por %p167, %p168
    %p170 = scmp.ne.s32.totalorder %s158, %s159
    %p171 = scmp.eq.s32.totalorder %s23, 1
    %p172 = por %p170, %p171
    %p174 = scmp.ne.s32.totalorder %s159, %s173
    %p175 = scmp.eq.s32.totalorder %s23, 0
    %p176 = por %p174, %p175
    %s178 = sadd.s32 %s177, 1
    %p181 = scmp.eq.s32.totalorder %s17, 1
    %p182 = scmp.ne.s32.totalorder %s177, %s179
    %p183 = scmp.eq.s32.totalorder %s17, 0
    %p184 = por %p182, %p183
    %p185 = scmp.ne.s32.totalorder %s177, %s179
    %p186 = scmp.eq.s32.totalorder %s22, 1
    %p187 = por %p185, %p186
    %p188 = scmp.ne.s32.totalorder %s179, %s180
    %p189 = scmp.eq.s32.totalorder %s22, 0
    %p190 = por %p188, %p189
    %p191 = scmp.ne.s32.totalorder %s179, %s180
    %p192 = scmp.eq.s32.totalorder %s23, 1
    %p193 = por %p191, %p192
    %p195 = scmp.ne.s32.totalorder %s180, %s194
    %p196 = scmp.eq.s32.totalorder %s23, 0
    %p197 = por %p195, %p196
    %s199 = sadd.s32 %s198, 1
    %p202 = scmp.eq.s32.totalorder %s17, 1
    %p203 = scmp.ne.s32.totalorder %s198, %s200
    %p204 = scmp.eq.s32.totalorder %s17, 0
    %p205 = por %p203, %p204
    %p206 = scmp.ne.s32.totalorder %s198, %s200
    %p207 = scmp.eq.s32.totalorder %s22, 1
    %p208 = por %p206, %p207
    %p209 = scmp.ne.s32.totalorder %s200, %s201
    %p210 = scmp.eq.s32.totalorder %s22, 0
    %p211 = por %p209, %p210
    %p212 = scmp.ne.s32.totalorder %s200, %s201
    %p213 = scmp.eq.s32.totalorder %s23, 1
    %p214 = por %p212, %p213
    %p216 = scmp.ne.s32.totalorder %s201, %s215
    %p217 = scmp.eq.s32.totalorder %s23, 0
    %p218 = por %p216, %p217
    %s220 = sadd.s32 %s219, 1
    %p223 = scmp.eq.s32.totalorder %s17, 1
    %p224 = scmp.ne.s32.totalorder %s219, %s221
    %p225 = scmp.eq.s32.totalorder %s17, 0
    %p226 = por %p224, %p225
    %p227 = scmp.ne.s32.totalorder %s219, %s221
    %p228 = scmp.eq.s32.totalorder %s22, 1
    %p229 = por %p227, %p228
    %p230 = scmp.ne.s32.totalorder %s221, %s222
    %p231 = scmp.eq.s32.totalorder %s22, 0
    %p232 = por %p230, %p231
    %p233 = scmp.ne.s32.totalorder %s221, %s222
    %p234 = scmp.eq.s32.totalorder %s23, 1
    %p235 = por %p233, %p234
    %p237 = scmp.ne.s32.totalorder %s222, %s236
    %p238 = scmp.eq.s32.totalorder %s23, 0
    %p239 = por %p237, %p238
    %s241 = sadd.s32 %s240, 1
    %p244 = scmp.eq.s32.totalorder %s17, 1
    %p245 = scmp.ne.s32.totalorder %s240, %s242
    %p246 = scmp.eq.s32.totalorder %s17, 0
    %p247 = por %p245, %p246
    %p248 = scmp.ne.s32.totalorder %s240, %s242
    %p249 = scmp.eq.s32.totalorder %s22, 1
    %p250 = por %p248, %p249
    %p251 = scmp.ne.s32.totalorder %s242, %s243
    %p252 = scmp.eq.s32.totalorder %s22, 0
    %p253 = por %p251, %p252
    %p254 = scmp.ne.s32.totalorder %s242, %s243
    %p255 = scmp.eq.s32.totalorder %s23, 1
    %p256 = por %p254, %p255
    %p258 = scmp.ne.s32.totalorder %s243, %s257
    %p259 = scmp.eq.s32.totalorder %s23, 0
    %p260 = por %p258, %p259
    %s261 = ssub.s32 %s17, %s24
    %p262 = scmp.eq.s32.totalorder %s261, 0
    %s264 = sadd.s32 %s263, 1
    %s265 = scalar_select %p262, %s263, %s264
    %p268 = pneg %p262
    %p269 = scmp.eq.s32.totalorder %s17, 1
    %p270 = por %p268, %p269
    %p271 = scmp.ne.s32.totalorder %s263, %s266
    %p272 = scmp.eq.s32.totalorder %s17, 0
    %p273 = por %p271, %p272
    %p274 = scmp.ne.s32.totalorder %s263, %s266
    %p275 = scmp.eq.s32.totalorder %s22, 1
    %p276 = por %p274, %p275
    %p277 = scmp.ne.s32.totalorder %s266, %s267
    %p278 = scmp.eq.s32.totalorder %s22, 0
    %p279 = por %p277, %p278
    %p280 = scmp.ne.s32.totalorder %s266, %s267
    %p281 = scmp.eq.s32.totalorder %s23, 1
    %p282 = por %p280, %p281
    %p284 = scmp.ne.s32.totalorder %s267, %s283
    %p285 = scmp.eq.s32.totalorder %s23, 0
    %p286 = por %p284, %p285
    %p287 = scmp.le.s32.totalorder 1, %s17
    %p288 = scmp.lt.s32.totalorder %s17, 3
    %p289 = pnand %p287, %p288
    %p290 = pneg %p289
    // Predicated region
    $region9: #{block_1d_forward.1} parent=5 // pred_check
      _
    $region10: #{block_1d_forward.1} parent=5 // pred_check_branch
      %292 = sbr.rel (%p289) target = $region12
    $region11: #{block_1d_forward.1} parent=5 // pred_region
      %s293 = ssub.s32 %s17, 1
      // Predicated region
      $region13: #{block_1d_forward.1} parent=11 // pred_check
        %p294 = pneg %p64
      $region14: #{block_1d_forward.1} parent=11 // pred_check_branch
        %296 = sbr.rel (%p294) target = $region16
      $region15: #{block_1d_forward.1} parent=11 // pred_region
        _
      $region16: #{block_1d_forward.1} parent=11 // pred_fallthru
        _
      // Predicated region
      $region17: #{block_1d_forward.1} parent=11 // pred_check
        %p297 = pneg %p85
      $region18: #{block_1d_forward.1} parent=11 // pred_check_branch
        %299 = sbr.rel (%p297) target = $region20
      $region19: #{block_1d_forward.1} parent=11 // pred_region
        _
      $region20: #{block_1d_forward.1} parent=11 // pred_fallthru
        _
      // Predicated region
      $region21: #{block_1d_forward.1} parent=11 // pred_check
        %p300 = pneg %p106
      $region22: #{block_1d_forward.1} parent=11 // pred_check_branch
        %302 = sbr.rel (%p300) target = $region24
      $region23: #{block_1d_forward.1} parent=11 // pred_region
        _
      $region24: #{block_1d_forward.1} parent=11 // pred_fallthru
        _
      // Predicated region
      $region25: #{block_1d_forward.1} parent=11 // pred_check
        %p303 = pneg %p127
      $region26: #{block_1d_forward.1} parent=11 // pred_check_branch
        %305 = sbr.rel (%p303) target = $region28
      $region27: #{block_1d_forward.1} parent=11 // pred_region
        _
      $region28: #{block_1d_forward.1} parent=11 // pred_fallthru
        _
      // Predicated region
      $region29: #{block_1d_forward.1} parent=11 // pred_check
        %p306 = pneg %p148
      $region30: #{block_1d_forward.1} parent=11 // pred_check_branch
        %308 = sbr.rel (%p306) target = $region32
      $region31: #{block_1d_forward.1} parent=11 // pred_region
        _
      $region32: #{block_1d_forward.1} parent=11 // pred_fallthru
        _
      // Predicated region
      $region33: #{block_1d_forward.1} parent=11 // pred_check
        %p309 = pneg %p169
      $region34: #{block_1d_forward.1} parent=11 // pred_check_branch
        %311 = sbr.rel (%p309) target = $region36
      $region35: #{block_1d_forward.1} parent=11 // pred_region
        _
      $region36: #{block_1d_forward.1} parent=11 // pred_fallthru
        _
      // Predicated region
      $region37: #{block_1d_forward.1} parent=11 // pred_check
        %p312 = pneg %p190
      $region38: #{block_1d_forward.1} parent=11 // pred_check_branch
        %314 = sbr.rel (%p312) target = $region40
      $region39: #{block_1d_forward.1} parent=11 // pred_region
        _
      $region40: #{block_1d_forward.1} parent=11 // pred_fallthru
        _
      // Predicated region
      $region41: #{block_1d_forward.1} parent=11 // pred_check
        %p315 = pneg %p211
      $region42: #{block_1d_forward.1} parent=11 // pred_check_branch
        %317 = sbr.rel (%p315) target = $region44
      $region43: #{block_1d_forward.1} parent=11 // pred_region
        _
      $region44: #{block_1d_forward.1} parent=11 // pred_fallthru
        _
      // Predicated region
      $region45: #{block_1d_forward.1} parent=11 // pred_check
        %p318 = pneg %p232
      $region46: #{block_1d_forward.1} parent=11 // pred_check_branch
        %320 = sbr.rel (%p318) target = $region48
      $region47: #{block_1d_forward.1} parent=11 // pred_region
        _
      $region48: #{block_1d_forward.1} parent=11 // pred_fallthru
        _
      // Predicated region
      $region49: #{block_1d_forward.1} parent=11 // pred_check
        %p321 = pneg %p253
      $region50: #{block_1d_forward.1} parent=11 // pred_check_branch
        %323 = sbr.rel (%p321) target = $region52
      $region51: #{block_1d_forward.1} parent=11 // pred_region
        _
      $region52: #{block_1d_forward.1} parent=11 // pred_fallthru
        _
    $region12: #{block_1d_forward.1} parent=5 // pred_fallthru
      _
    %p324 = scmp.lt.s32.totalorder %s17, 2
    // Predicated region
    $region53: #{block_1d_forward.1} parent=5 // pred_check
      %p325 = pneg %p324
    $region54: #{block_1d_forward.1} parent=5 // pred_check_branch
      %327 = sbr.rel (%p325) target = $region56
    $region55: #{block_1d_forward.1} parent=5 // pred_region
      // Predicated region
      $region57: #{block_1d_forward.1} parent=55 // pred_check
        %p328 = pneg %p37
      $region58: #{block_1d_forward.1} parent=55 // pred_check_branch
        %330 = sbr.rel (%p328) target = $region60
      $region59: #{block_1d_forward.1} parent=55 // pred_region
        %p331 = scmp.lt.s32.totalorder %s17, 1
        %s332 = scalar_select %p331, %s17, 1
        %s333 = smul.addr %s332, 9
        %s334 = smul.addr %s333, 8
        %s335 = scalar_lea.vmem %s0, %s334
      $region60: #{block_1d_forward.1} parent=55 // pred_fallthru
        _
    $region56: #{block_1d_forward.1} parent=5 // pred_fallthru
      _
    %p336 = scmp.le.s32.totalorder 1, %s17
    %p337 = scmp.lt.s32.totalorder %s17, 3
    %p338 = pnand %p336, %p337
    %p339 = pneg %p338
    // Predicated region
    $region61: #{block_1d_forward.1} parent=5 // pred_check
      _
    $region62: #{block_1d_forward.1} parent=5 // pred_check_branch
      %341 = sbr.rel (%p338) target = $region64
    $region63: #{block_1d_forward.1} parent=5 // pred_region
      %s342 = ssub.s32 %s17, 1
      %p343 = scmp.lt.s32.totalorder %s22, 1
      %s344 = scalar_select %p343, %s22, 1
      %s345 = smul.addr %s344, 9
      %s346 = smul.addr %s345, 8
      %s347 = scalar_lea.vmem %s0, %s346
      %p348 = pneg %p43
      %p349 = pneg %p40
      %p350 = pneg %p64
      %p351 = pneg %p61
      %p352 = pneg %p85
      %p353 = pneg %p82
      %p354 = pneg %p106
      %p355 = pneg %p103
      %p356 = pneg %p127
      %p357 = pneg %p124
      %p358 = pneg %p148
      %p359 = pneg %p145
      %p360 = pneg %p169
      %p361 = pneg %p166
      %p362 = pneg %p190
      %p363 = pneg %p187
      %p364 = pneg %p211
      %p365 = pneg %p208
      %p366 = pneg %p232
      %p367 = pneg %p229
      %p368 = pneg %p253
      %p369 = pneg %p250
      %p370 = pneg %p279
      %p371 = pneg %p276
      %p372 = scmp.lt.s32.totalorder %s22, 1
      %s373 = scalar_select %p372, %s22, 1
      %s374 = smul.addr %s373, 9
      %s375 = smul.addr %s374, 8
      %s376 = scalar_lea.vmem %s11, %s375
      %p377 = scmp.lt.s32.totalorder %s22, 1
      %s378 = scalar_select %p377, %s22, 1
      %s379 = smul.addr %s378, 9
      %s380 = smul.addr %s379, 8
      %s381 = scalar_lea.vmem %s0, %s380
      %p382 = scmp.lt.s32.totalorder %s22, 1
      %s383 = scalar_select %p382, %s22, 1
      %s384 = smul.addr %s383, 9
      %s385 = smul.addr %s384, 8
      %s386 = scalar_lea.vmem %s11, %s385
      %v388 = vld [vmem:[%s381] sm:$0xff]
      %v389 = vld [vmem:[%s381 + $0x8] sm:$0xff]
      %v390 = vld [vmem:[%s381 + $0x10] sm:$0xff]
      %v391 = vld [vmem:[%s381 + $0x18] sm:$0xff]
      %v392 = vld [vmem:[%s381 + $0x20] sm:$0xff]
      %v393 = vld [vmem:[%s381 + $0x28] sm:$0xff]
      %v394 = vld [vmem:[%s381 + $0x30] sm:$0xff]
      %v395 = vld [vmem:[%s381 + $0x38] sm:$0xff]
      %v396 = vld [vmem:[%s381 + $0x40] sm:$0xff]
      %vm397 = vcmask 261120
      %v398 = vsel %vm397, %v388, 0.0
      %399 = vadd.xlane.f32.xlu0 %v398
      %v400 = vpop.xlane.xlu0 %399
      %v401 = vsel %vm397, %v389, 0.0
      %402 = vadd.xlane.f32.xlu0 %v401
      %v403 = vpop.xlane.xlu0 %402
      %v404 = vsel %vm397, %v390, 0.0
      %405 = vadd.xlane.f32.xlu0 %v404
      %v406 = vpop.xlane.xlu0 %405
      %v407 = vsel %vm397, %v391, 0.0
      %408 = vadd.xlane.f32.xlu0 %v407
      %v409 = vpop.xlane.xlu0 %408
      %v410 = vsel %vm397, %v392, 0.0
      %411 = vadd.xlane.f32.xlu0 %v410
      %v412 = vpop.xlane.xlu0 %411
      %v413 = vsel %vm397, %v393, 0.0
      %414 = vadd.xlane.f32.xlu0 %v413
      %v415 = vpop.xlane.xlu0 %414
      %v416 = vsel %vm397, %v394, 0.0
      %417 = vadd.xlane.f32.xlu0 %v416
      %v418 = vpop.xlane.xlu0 %417
      %v419 = vsel %vm397, %v395, 0.0
      %420 = vadd.xlane.f32.xlu0 %v419
      %v421 = vpop.xlane.xlu0 %420
      %v422 = vsel %vm397, %v396, 0.0
      %423 = vadd.xlane.f32.xlu0 %v422
      %v424 = vpop.xlane.xlu0 %423
      %v425 = vrcp.pop 32.0
      %v426 = vmul.f32 %v400, %v425
      %v427 = vmul.f32 %v403, %v425
      %v428 = vmul.f32 %v406, %v425
      %v429 = vmul.f32 %v409, %v425
      %v430 = vmul.f32 %v412, %v425
      %v431 = vmul.f32 %v415, %v425
      %v432 = vmul.f32 %v418, %v425
      %v433 = vmul.f32 %v421, %v425
      %v434 = vmul.f32 %v424, %v425
      %v435 = vsub.f32 %v388, %v426
      %v436 = vsub.f32 %v389, %v427
      %v437 = vsub.f32 %v390, %v428
      %v438 = vsub.f32 %v391, %v429
      %v439 = vsub.f32 %v392, %v430
      %v440 = vsub.f32 %v393, %v431
      %v441 = vsub.f32 %v394, %v432
      %v442 = vsub.f32 %v395, %v433
      %v443 = vsub.f32 %v396, %v434
      %v444 = vmul.f32 %v435, %v435
      %v445 = vmul.f32 %v436, %v436
      %v446 = vmul.f32 %v437, %v437
      %v447 = vmul.f32 %v438, %v438
      %v448 = vmul.f32 %v439, %v439
      %v449 = vmul.f32 %v440, %v440
      %v450 = vmul.f32 %v441, %v441
      %v451 = vmul.f32 %v442, %v442
      %v452 = vmul.f32 %v443, %v443
      %v453 = vsel %vm397, %v444, 0.0
      %454 = vadd.xlane.f32.xlu0 %v453
      %v455 = vpop.xlane.xlu0 %454
      %v456 = vsel %vm397, %v445, 0.0
      %457 = vadd.xlane.f32.xlu0 %v456
      %v458 = vpop.xlane.xlu0 %457
      %v459 = vsel %vm397, %v446, 0.0
      %460 = vadd.xlane.f32.xlu0 %v459
      %v461 = vpop.xlane.xlu0 %460
      %v462 = vsel %vm397, %v447, 0.0
      %463 = vadd.xlane.f32.xlu0 %v462
      %v464 = vpop.xlane.xlu0 %463
      %v465 = vsel %vm397, %v448, 0.0
      %466 = vadd.xlane.f32.xlu0 %v465
      %v467 = vpop.xlane.xlu0 %466
      %v468 = vsel %vm397, %v449, 0.0
      %469 = vadd.xlane.f32.xlu0 %v468
      %v470 = vpop.xlane.xlu0 %469
      %v471 = vsel %vm397, %v450, 0.0
      %472 = vadd.xlane.f32.xlu0 %v471
      %v473 = vpop.xlane.xlu0 %472
      %v474 = vsel %vm397, %v451, 0.0
      %475 = vadd.xlane.f32.xlu0 %v474
      %v476 = vpop.xlane.xlu0 %475
      %v477 = vsel %vm397, %v452, 0.0
      %478 = vadd.xlane.f32.xlu0 %v477
      %v479 = vpop.xlane.xlu0 %478
      %v480 = vmul.f32 %v455, %v425
      %v481 = vmul.f32 %v458, %v425
      %v482 = vmul.f32 %v461, %v425
      %v483 = vmul.f32 %v464, %v425
      %v484 = vmul.f32 %v467, %v425
      %v485 = vmul.f32 %v470, %v425
      %v486 = vmul.f32 %v473, %v425
      %v487 = vmul.f32 %v476, %v425
      %v488 = vmul.f32 %v479, %v425
      %v489 = vadd.f32 %v480, 1e-06
      %v490 = vadd.f32 %v481, 1e-06
      %v491 = vadd.f32 %v482, 1e-06
      %v492 = vadd.f32 %v483, 1e-06
      %v493 = vadd.f32 %v484, 1e-06
      %v494 = vadd.f32 %v485, 1e-06
      %v495 = vadd.f32 %v486, 1e-06
      %v496 = vadd.f32 %v487, 1e-06
      %v497 = vadd.f32 %v488, 1e-06
      %v498 = vrsqrt.pop %v489
      %v499 = vrsqrt.pop %v490
      %v500 = vrsqrt.pop %v491
      %v501 = vrsqrt.pop %v492
      %v502 = vrsqrt.pop %v493
      %v503 = vrsqrt.pop %v494
      %v504 = vrsqrt.pop %v495
      %v505 = vrsqrt.pop %v496
      %v506 = vrsqrt.pop %v497
      %v507 = vmul.f32 %v435, %v498
      %v508 = vmul.f32 %v436, %v499
      %v509 = vmul.f32 %v437, %v500
      %v510 = vmul.f32 %v438, %v501
      %v511 = vmul.f32 %v439, %v502
      %v512 = vmul.f32 %v440, %v503
      %v513 = vmul.f32 %v441, %v504
      %v514 = vmul.f32 %v442, %v505
      %v515 = vmul.f32 %v443, %v506
      %v516 = vld [vmem:[%s1] sm:$0x1]
      %v518 = vlaneseq
      %v519 = vshrl.u32 %v518, 7
      %v520 = vsub.s32 0, %v519
      %v521 = vrot.slane %v516, %v520
      %v523 = vmul.f32 %v507, %v521
      %v524 = vmul.f32 %v508, %v521
      %v525 = vmul.f32 %v509, %v521
      %v526 = vmul.f32 %v510, %v521
      %v527 = vmul.f32 %v511, %v521
      %v528 = vmul.f32 %v512, %v521
      %v529 = vmul.f32 %v513, %v521
      %v530 = vmul.f32 %v514, %v521
      %v531 = vmul.f32 %v515, %v521
      %v532 = vld [vmem:[%s2] sm:$0x1]
      %v534 = vlaneseq
      %v535 = vshrl.u32 %v534, 7
      %v536 = vsub.s32 0, %v535
      %v537 = vrot.slane %v532, %v536
      %v539 = vadd.f32 %v523, %v537
      %v540 = vadd.f32 %v524, %v537
      %v541 = vadd.f32 %v525, %v537
      %v542 = vadd.f32 %v526, %v537
      %v543 = vadd.f32 %v527, %v537
      %v544 = vadd.f32 %v528, %v537
      %v545 = vadd.f32 %v529, %v537
      %v546 = vadd.f32 %v530, %v537
      %v547 = vadd.f32 %v531, %v537
      %v548 = vpack.c.bf16 %v540, %v539
      %v549 = vpack.c.bf16 %v542, %v541
      %v550 = vpack.c.bf16 %v544, %v543
      %v551 = vpack.c.bf16 %v546, %v545
      %v552 = vpack.c.bf16 %v547, %v547
      %v553 = vld [vmem:[%s3] sm:$0xf]
      %v554 = vld [vmem:[%s3 + $0x4] sm:$0xf]
      %v555 = vld [vmem:[%s3 + $0x8] sm:$0xf]
      %v556 = vld [vmem:[%s3 + $0xc] sm:$0xf]
      %v561 = vunpack.c.l.b16 %v553
      %v562 = vunpack.c.l.b16 %v554
      %v563 = vunpack.c.l.b16 %v555
      %v564 = vunpack.c.l.b16 %v556
      %v565 = vpack.c.b16 %v562, %v561
      %v566 = vpack.c.b16 %v564, %v563
      %v570 = vsel %vm397, %v548, 0
      %v573 = vsel %vm397, %v549, 0
      %v576 = vsel %vm397, %v550, 0
      %v579 = vsel %vm397, %v551, 0
      %v582 = vsel %vm397, %v552, 0
      %584 = vmatprep.subr.bf16.mxu0 0
      %585 = vmatpush1.bf16.msra.mxu0 0
      %586 = vmatprep.subr.bf16.mxu0 0
      %587 = vmatpush1.bf16.msra.mxu0 0
      %588 = vmatprep.subr.bf16.mxu0 0
      %589 = vmatpush1.bf16.msra.mxu0 0
      %590 = vmatprep.subr.bf16.mxu0 0
      %591 = vmatpush1.bf16.msra.mxu0 0
      %592 = vmatprep.subr.bf16.mxu0 0
      %593 = vmatpush1.bf16.msra.mxu0 0
      %594 = vmatprep.subr.bf16.mxu0 0
      %595 = vmatpush1.bf16.msra.mxu0 0
      %596 = vmatprep.subr.bf16.mxu0 0
      %597 = vmatpush1.bf16.msra.mxu0 %v566
      %598 = vmatprep.subr.bf16.mxu0 0
      %599 = vmatpush1.bf16.msra.mxu0 %v565
      %600 = vmatprep.subr.bf16.mxu0 0
      %601 = vmatpush2.bf16.msra.mxu0 0
      %602 = vmatprep.subr.bf16.mxu0 0
      %603 = vmatpush2.bf16.msra.mxu0 0
      %604 = vmatprep.subr.bf16.mxu0 0
      %605 = vmatpush2.bf16.msra.mxu0 0
      %606 = vmatprep.subr.bf16.mxu0 0
      %607 = vmatpush2.bf16.msra.mxu0 0
      %608 = vmatprep.subr.bf16.mxu0 0
      %609 = vmatpush2.bf16.msra.mxu0 0
      %610 = vmatprep.subr.bf16.mxu0 0
      %611 = vmatpush2.bf16.msra.mxu0 0
      %612 = vmatprep.subr.bf16.mxu0 0
      %613 = vmatpush2.bf16.msra.mxu0 0
      %614 = vmatprep.subr.bf16.mxu0 0
      %615 = vmatpush2.bf16.msra.mxu0 0
      %616 = vmatprep.mubr.bf16.mxu0 0
      %617 = vmatmul.mubr.bf16.gmra.mxu0 %v570
      %v618 = vpop.f32.mrf.mxu0
      %v619 = vadd.f32 0.0, %v618
      %v620 = vpop.f32.mrf.mxu0
      %v621 = vpop.f32.mrf.mxu0
      %v622 = vadd.f32 0.0, %v621
      %v623 = vpop.f32.mrf.mxu0
      %624 = vmatprep.mubr.bf16.mxu0 0
      %625 = vmatmul.mubr.bf16.gmra.mxu0 %v573
      %v626 = vpop.f32.mrf.mxu0
      %v627 = vadd.f32 0.0, %v626
      %v628 = vpop.f32.mrf.mxu0
      %v629 = vpop.f32.mrf.mxu0
      %v630 = vadd.f32 0.0, %v629
      %v631 = vpop.f32.mrf.mxu0
      %632 = vmatprep.mubr.bf16.mxu0 0
      %633 = vmatmul.mubr.bf16.gmra.mxu0 %v576
      %v634 = vpop.f32.mrf.mxu0
      %v635 = vadd.f32 0.0, %v634
      %v636 = vpop.f32.mrf.mxu0
      %v637 = vpop.f32.mrf.mxu0
      %v638 = vadd.f32 0.0, %v637
      %v639 = vpop.f32.mrf.mxu0
      %640 = vmatprep.mubr.bf16.mxu0 0
      %641 = vmatmul.mubr.bf16.gmra.mxu0 %v579
      %v642 = vpop.f32.mrf.mxu0
      %v643 = vadd.f32 0.0, %v642
      %v644 = vpop.f32.mrf.mxu0
      %v645 = vpop.f32.mrf.mxu0
      %v646 = vadd.f32 0.0, %v645
      %v647 = vpop.f32.mrf.mxu0
      %648 = vmatprep.mubr.bf16.mxu0 0
      %649 = vmatmul.mubr.bf16.gmra.mxu0 %v582
      %v650 = vpop.f32.mrf.mxu0
      %v651 = vadd.f32 0.0, %v650
      %v652 = vpop.f32.mrf.mxu0
      %v653 = vpop.f32.mrf.mxu0
      %v654 = vpop.f32.mrf.mxu0
      %655 = vdwg.mxu0
      %v656 = vsub.f32 0.0, %v619
      %v657 = vsub.f32 0.0, %v622
      %v658 = vsub.f32 0.0, %v627
      %v659 = vsub.f32 0.0, %v630
      %v660 = vsub.f32 0.0, %v635
      %v661 = vsub.f32 0.0, %v638
      %v662 = vsub.f32 0.0, %v643
      %v663 = vsub.f32 0.0, %v646
      %v664 = vsub.f32 0.0, %v651
      %v665 = vmul.f32 %v656, 1.442695
      %v666 = vpow.pop %v665
      %v667 = vmul.f32 %v657, 1.442695
      %v668 = vpow.pop %v667
      %v669 = vmul.f32 %v658, 1.442695
      %v670 = vpow.pop %v669
      %v671 = vmul.f32 %v659, 1.442695
      %v672 = vpow.pop %v671
      %v673 = vmul.f32 %v660, 1.442695
      %v674 = vpow.pop %v673
      %v675 = vmul.f32 %v661, 1.442695
      %v676 = vpow.pop %v675
      %v677 = vmul.f32 %v662, 1.442695
      %v678 = vpow.pop %v677
      %v679 = vmul.f32 %v663, 1.442695
      %v680 = vpow.pop %v679
      %v681 = vmul.f32 %v664, 1.442695
      %v682 = vpow.pop %v681
      %v683 = vadd.f32 %v666, 1.0
      %v684 = vadd.f32 %v668, 1.0
      %v685 = vadd.f32 %v670, 1.0
      %v686 = vadd.f32 %v672, 1.0
      %v687 = vadd.f32 %v674, 1.0
      %v688 = vadd.f32 %v676, 1.0
      %v689 = vadd.f32 %v678, 1.0
      %v690 = vadd.f32 %v680, 1.0
      %v691 = vadd.f32 %v682, 1.0
      %v692 = vrcp.pop %v683
      %v693 = vmul.f32 1.0, %v692
      %v694 = vrcp.pop %v684
      %v695 = vmul.f32 1.0, %v694
      %v696 = vrcp.pop %v685
      %v697 = vmul.f32 1.0, %v696
      %v698 = vrcp.pop %v686
      %v699 = vmul.f32 1.0, %v698
      %v700 = vrcp.pop %v687
      %v701 = vmul.f32 1.0, %v700
      %v702 = vrcp.pop %v688
      %v703 = vmul.f32 1.0, %v702
      %v704 = vrcp.pop %v689
      %v705 = vmul.f32 1.0, %v704
      %v706 = vrcp.pop %v690
      %v707 = vmul.f32 1.0, %v706
      %v708 = vrcp.pop %v691
      %v709 = vmul.f32 1.0, %v708
      %v710 = vmul.f32 %v619, %v693
      %v711 = vmul.f32 %v622, %v695
      %v712 = vmul.f32 %v627, %v697
      %v713 = vmul.f32 %v630, %v699
      %v714 = vmul.f32 %v635, %v701
      %v715 = vmul.f32 %v638, %v703
      %v716 = vmul.f32 %v643, %v705
      %v717 = vmul.f32 %v646, %v707
      %v718 = vmul.f32 %v651, %v709
      %728 = vrot.lane.b32.xlu0 %v710, 64
      %v729 = vpop.permute.xlu0 %728
      %730 = vrot.lane.b32.xlu0 %v711, 64
      %v731 = vpop.permute.xlu0 %730
      %732 = vrot.lane.b32.xlu0 %v712, 64
      %v733 = vpop.permute.xlu0 %732
      %734 = vrot.lane.b32.xlu0 %v713, 64
      %v735 = vpop.permute.xlu0 %734
      %736 = vrot.lane.b32.xlu0 %v714, 64
      %v737 = vpop.permute.xlu0 %736
      %738 = vrot.lane.b32.xlu0 %v715, 64
      %v739 = vpop.permute.xlu0 %738
      %740 = vrot.lane.b32.xlu0 %v716, 64
      %v741 = vpop.permute.xlu0 %740
      %742 = vrot.lane.b32.xlu0 %v717, 64
      %v743 = vpop.permute.xlu0 %742
      %744 = vrot.lane.b32.xlu0 %v718, 64
      %v745 = vpop.permute.xlu0 %744
      %vm755 = vcmask 523264
      %756 = vst.msk [vmem:[#allocation4] sm:$0xff] %vm755, %v729
      %757 = vst.msk [vmem:[#allocation4 + $0x8] sm:$0xff] %vm755, %v731
      %758 = vst.msk [vmem:[#allocation4 + $0x10] sm:$0xff] %vm755, %v733
      %759 = vst.msk [vmem:[#allocation4 + $0x18] sm:$0xff] %vm755, %v735
      %760 = vst.msk [vmem:[#allocation4 + $0x20] sm:$0xff] %vm755, %v737
      %761 = vst.msk [vmem:[#allocation4 + $0x28] sm:$0xff] %vm755, %v739
      %762 = vst.msk [vmem:[#allocation4 + $0x30] sm:$0xff] %vm755, %v741
      %763 = vst.msk [vmem:[#allocation4 + $0x38] sm:$0xff] %vm755, %v743
      %764 = vst.msk [vmem:[#allocation4 + $0x40] sm:$0xff] %vm755, %v745
      %765 = vst.msk [vmem:[#allocation7] sm:$0xff] %vm755, 0.0
      %766 = vst.msk [vmem:[#allocation7 + $0x8] sm:$0xff] %vm755, 0.0
      %767 = vst.msk [vmem:[#allocation7 + $0x10] sm:$0xff] %vm755, 0.0
      %768 = vst.msk [vmem:[#allocation7 + $0x18] sm:$0xff] %vm755, %v619
      %769 = vst.msk [vmem:[#allocation7 + $0x20] sm:$0xff] %vm755, %v622
      %770 = vst.msk [vmem:[#allocation7 + $0x28] sm:$0xff] %vm755, %v627
      %771 = vst.msk [vmem:[#allocation7 + $0x30] sm:$0xff] %vm755, %v630
      %772 = vst.msk [vmem:[#allocation7 + $0x38] sm:$0xff] %vm755, %v635
      %773 = vst.msk [vmem:[#allocation7 + $0x40] sm:$0xff] %vm755, %v638
      %774 = vst.msk [vmem:[#allocation7 + $0x48] sm:$0xff] %vm755, %v643
      %775 = vst.msk [vmem:[#allocation7 + $0x50] sm:$0xff] %vm755, %v646
      %776 = vst.msk [vmem:[#allocation7 + $0x58] sm:$0xff] %vm755, %v651
      %v777 = vld [vmem:[#allocation7] sm:$0xff]
      %v778 = vld [vmem:[#allocation7 + $0x8] sm:$0xff]
      %v779 = vld [vmem:[#allocation7 + $0x10] sm:$0xff]
      %v780 = vld [vmem:[#allocation7 + $0x18] sm:$0xff]
      %v781 = vld [vmem:[#allocation7 + $0x20] sm:$0xff]
      %v782 = vld [vmem:[#allocation7 + $0x28] sm:$0xff]
      %v783 = vld [vmem:[#allocation7 + $0x30] sm:$0xff]
      %v784 = vld [vmem:[#allocation7 + $0x38] sm:$0xff]
      %v785 = vld [vmem:[#allocation7 + $0x40] sm:$0xff]
      %v786 = vld [vmem:[%s4] sm:$0x1]
      %v787 = vlaneseq
      %v788 = vshrl.u32 %v787, 7
      %v789 = vsub.s32 0, %v788
      %v790 = vrot.slane %v786, %v789
      %v791 = vmul.f32 %v777, %v790
      %v792 = vmul.f32 %v778, %v790
      %v793 = vmul.f32 %v779, %v790
      %v794 = vmul.f32 %v780, %v790
      %v795 = vmul.f32 %v781, %v790
      %v796 = vmul.f32 %v782, %v790
      %v797 = vmul.f32 %v783, %v790
      %v798 = vmul.f32 %v784, %v790
      %v799 = vmul.f32 %v785, %v790
      %v800 = vadd.f32 %v791, 0.0
      %v801 = vadd.f32 %v792, 0.0
      %v802 = vadd.f32 %v793, 0.0
      %v803 = vadd.f32 %v794, 0.0
      %v804 = vadd.f32 %v795, 0.0
      %v805 = vadd.f32 %v796, 0.0
      %v806 = vadd.f32 %v797, 0.0
      %v807 = vadd.f32 %v798, 0.0
      %v808 = vadd.f32 %v799, 0.0
      %v809 = vld [vmem:[#allocation7 + $0x48] sm:$0xff]
      %v810 = vld [vmem:[%s4 + $0x1] sm:$0x1]
      %v811 = vlaneseq
      %v812 = vshrl.u32 %v811, 7
      %v813 = vsub.s32 0, %v812
      %v814 = vrot.slane %v810, %v813
      %v815 = vmul.f32 %v778, %v814
      %v816 = vmul.f32 %v779, %v814
      %v817 = vmul.f32 %v780, %v814
      %v818 = vmul.f32 %v781, %v814
      %v819 = vmul.f32 %v782, %v814
      %v820 = vmul.f32 %v783, %v814
      %v821 = vmul.f32 %v784, %v814
      %v822 = vmul.f32 %v785, %v814
      %v823 = vmul.f32 %v809, %v814
      %v824 = vadd.f32 %v800, %v815
      %v825 = vadd.f32 %v801, %v816
      %v826 = vadd.f32 %v802, %v817
      %v827 = vadd.f32 %v803, %v818
      %v828 = vadd.f32 %v804, %v819
      %v829 = vadd.f32 %v805, %v820
      %v830 = vadd.f32 %v806, %v821
      %v831 = vadd.f32 %v807, %v822
      %v832 = vadd.f32 %v808, %v823
      %v833 = vld [vmem:[#allocation7 + $0x50] sm:$0xff]
      %v834 = vld [vmem:[%s4 + $0x2] sm:$0x1]
      %v835 = vlaneseq
      %v836 = vshrl.u32 %v835, 7
      %v837 = vsub.s32 0, %v836
      %v838 = vrot.slane %v834, %v837
      %v839 = vmul.f32 %v779, %v838
      %v840 = vmul.f32 %v780, %v838
      %v841 = vmul.f32 %v781, %v838
      %v842 = vmul.f32 %v782, %v838
      %v843 = vmul.f32 %v783, %v838
      %v844 = vmul.f32 %v784, %v838
      %v845 = vmul.f32 %v785, %v838
      %v846 = vmul.f32 %v809, %v838
      %v847 = vmul.f32 %v833, %v838
      %v848 = vadd.f32 %v824, %v839
      %v849 = vadd.f32 %v825, %v840
      %v850 = vadd.f32 %v826, %v841
      %v851 = vadd.f32 %v827, %v842
      %v852 = vadd.f32 %v828, %v843
      %v853 = vadd.f32 %v829, %v844
      %v854 = vadd.f32 %v830, %v845
      %v855 = vadd.f32 %v831, %v846
      %v856 = vadd.f32 %v832, %v847
      %v857 = vld [vmem:[#allocation7 + $0x58] sm:$0xff]
      %v858 = vld [vmem:[%s4 + $0x3] sm:$0x1]
      %v859 = vlaneseq
      %v860 = vshrl.u32 %v859, 7
      %v861 = vsub.s32 0, %v860
      %v862 = vrot.slane %v858, %v861
      %v863 = vmul.f32 %v780, %v862
      %v864 = vmul.f32 %v781, %v862
      %v865 = vmul.f32 %v782, %v862
      %v866 = vmul.f32 %v783, %v862
      %v867 = vmul.f32 %v784, %v862
      %v868 = vmul.f32 %v785, %v862
      %v869 = vmul.f32 %v809, %v862
      %v870 = vmul.f32 %v833, %v862
      %v871 = vmul.f32 %v857, %v862
      %v872 = vadd.f32 %v848, %v863
      %v873 = vadd.f32 %v849, %v864
      %v874 = vadd.f32 %v850, %v865
      %v875 = vadd.f32 %v851, %v866
      %v876 = vadd.f32 %v852, %v867
      %v877 = vadd.f32 %v853, %v868
      %v878 = vadd.f32 %v854, %v869
      %v879 = vadd.f32 %v855, %v870
      %v880 = vadd.f32 %v856, %v871
      %v881 = vld [vmem:[%s5] sm:$0x1]
      %v883 = vlaneseq
      %v884 = vshrl.u32 %v883, 7
      %v885 = vsub.s32 0, %v884
      %v886 = vrot.slane %v881, %v885
      %v888 = vadd.f32 %v872, %v886
      %v889 = vadd.f32 %v873, %v886
      %v890 = vadd.f32 %v874, %v886
      %v891 = vadd.f32 %v875, %v886
      %v892 = vadd.f32 %v876, %v886
      %v893 = vadd.f32 %v877, %v886
      %v894 = vadd.f32 %v878, %v886
      %v895 = vadd.f32 %v879, %v886
      %v896 = vadd.f32 %v880, %v886
      %v897 = vsub.f32 0.0, %v888
      %v898 = vsub.f32 0.0, %v889
      %v899 = vsub.f32 0.0, %v890
      %v900 = vsub.f32 0.0, %v891
      %v901 = vsub.f32 0.0, %v892
      %v902 = vsub.f32 0.0, %v893
      %v903 = vsub.f32 0.0, %v894
      %v904 = vsub.f32 0.0, %v895
      %v905 = vsub.f32 0.0, %v896
      %v906 = vmul.f32 %v897, 1.442695
      %v907 = vpow.pop %v906
      %v908 = vmul.f32 %v898, 1.442695
      %v909 = vpow.pop %v908
      %v910 = vmul.f32 %v899, 1.442695
      %v911 = vpow.pop %v910
      %v912 = vmul.f32 %v900, 1.442695
      %v913 = vpow.pop %v912
      %v914 = vmul.f32 %v901, 1.442695
      %v915 = vpow.pop %v914
      %v916 = vmul.f32 %v902, 1.442695
      %v917 = vpow.pop %v916
      %v918 = vmul.f32 %v903, 1.442695
      %v919 = vpow.pop %v918
      %v920 = vmul.f32 %v904, 1.442695
      %v921 = vpow.pop %v920
      %v922 = vmul.f32 %v905, 1.442695
      %v923 = vpow.pop %v922
      %v924 = vadd.f32 %v907, 1.0
      %v925 = vadd.f32 %v909, 1.0
      %v926 = vadd.f32 %v911, 1.0
      %v927 = vadd.f32 %v913, 1.0
      %v928 = vadd.f32 %v915, 1.0
      %v929 = vadd.f32 %v917, 1.0
      %v930 = vadd.f32 %v919, 1.0
      %v931 = vadd.f32 %v921, 1.0
      %v932 = vadd.f32 %v923, 1.0
      %v933 = vrcp.pop %v924
      %v934 = vmul.f32 1.0, %v933
      %v935 = vrcp.pop %v925
      %v936 = vmul.f32 1.0, %v935
      %v937 = vrcp.pop %v926
      %v938 = vmul.f32 1.0, %v937
      %v939 = vrcp.pop %v927
      %v940 = vmul.f32 1.0, %v939
      %v941 = vrcp.pop %v928
      %v942 = vmul.f32 1.0, %v941
      %v943 = vrcp.pop %v929
      %v944 = vmul.f32 1.0, %v943
      %v945 = vrcp.pop %v930
      %v946 = vmul.f32 1.0, %v945
      %v947 = vrcp.pop %v931
      %v948 = vmul.f32 1.0, %v947
      %v949 = vrcp.pop %v932
      %v950 = vmul.f32 1.0, %v949
      %v951 = vmul.f32 %v888, %v934
      %v952 = vmul.f32 %v889, %v936
      %v953 = vmul.f32 %v890, %v938
      %v954 = vmul.f32 %v891, %v940
      %v955 = vmul.f32 %v892, %v942
      %v956 = vmul.f32 %v893, %v944
      %v957 = vmul.f32 %v894, %v946
      %v958 = vmul.f32 %v895, %v948
      %v959 = vmul.f32 %v896, %v950
      %960 = vst.msk [vmem:[#allocation3] sm:$0xff] %vm755, %v951
      %961 = vst.msk [vmem:[#allocation3 + $0x8] sm:$0xff] %vm755, %v952
      %962 = vst.msk [vmem:[#allocation3 + $0x10] sm:$0xff] %vm755, %v953
      %963 = vst.msk [vmem:[#allocation3 + $0x18] sm:$0xff] %vm755, %v954
      %964 = vst.msk [vmem:[#allocation3 + $0x20] sm:$0xff] %vm755, %v955
      %965 = vst.msk [vmem:[#allocation3 + $0x28] sm:$0xff] %vm755, %v956
      %966 = vst.msk [vmem:[#allocation3 + $0x30] sm:$0xff] %vm755, %v957
      %967 = vst.msk [vmem:[#allocation3 + $0x38] sm:$0xff] %vm755, %v958
      %968 = vst.msk [vmem:[#allocation3 + $0x40] sm:$0xff] %vm755, %v959
      %v969 = vpack.c.bf16 %v952, %v951
      %v970 = vpack.c.bf16 %v954, %v953
      %v971 = vpack.c.bf16 %v956, %v955
      %v972 = vpack.c.bf16 %v958, %v957
      %v973 = vpack.c.bf16 %v959, %v959
      %v974 = vld [vmem:[%s6] sm:$0xf]
      %v975 = vld [vmem:[%s6 + $0x4] sm:$0xf]
      %v976 = vld [vmem:[%s6 + $0x8] sm:$0xf]
      %v977 = vld [vmem:[%s6 + $0xc] sm:$0xf]
      %v978 = vld [vmem:[%s6 + $0x10] sm:$0xf]
      %v979 = vld [vmem:[%s6 + $0x14] sm:$0xf]
      %v980 = vld [vmem:[%s6 + $0x18] sm:$0xf]
      %v981 = vld [vmem:[%s6 + $0x1c] sm:$0xf]
      %v990 = vunpack.c.l.b16 %v974
      %v991 = vunpack.c.l.b16 %v975
      %v992 = vunpack.c.l.b16 %v976
      %v993 = vunpack.c.l.b16 %v977
      %v994 = vunpack.c.l.b16 %v978
      %v995 = vunpack.c.l.b16 %v979
      %v996 = vunpack.c.l.b16 %v980
      %v997 = vunpack.c.l.b16 %v981
      %v998 = vpack.c.b16 %v991, %v990
      %v999 = vpack.c.b16 %v993, %v992
      %v1000 = vpack.c.b16 %v995, %v994
      %v1001 = vpack.c.b16 %v997, %v996
      %v1007 = vsel %vm755, %v969, 0
      %v1010 = vsel %vm755, %v970, 0
      %v1013 = vsel %vm755, %v971, 0
      %v1016 = vsel %vm755, %v972, 0
      %v1019 = vsel %vm755, %v973, 0
      %1021 = vmatprep.subr.bf16.mxu0 0
      %1022 = vmatpush1.bf16.msra.mxu0 0
      %1023 = vmatprep.subr.bf16.mxu0 0
      %1024 = vmatpush1.bf16.msra.mxu0 0
      %1025 = vmatprep.subr.bf16.mxu0 0
      %1026 = vmatpush1.bf16.msra.mxu0 0
      %1027 = vmatprep.subr.bf16.mxu0 0
      %1028 = vmatpush1.bf16.msra.mxu0 0
      %1029 = vmatprep.subr.bf16.mxu0 0
      %1030 = vmatpush1.bf16.msra.mxu0 %v1001
      %1031 = vmatprep.subr.bf16.mxu0 0
      %1032 = vmatpush1.bf16.msra.mxu0 %v1000
      %1033 = vmatprep.subr.bf16.mxu0 0
      %1034 = vmatpush1.bf16.msra.mxu0 %v999
      %1035 = vmatprep.subr.bf16.mxu0 0
      %1036 = vmatpush1.bf16.msra.mxu0 %v998
      %1037 = vmatprep.subr.bf16.mxu0 0
      %1038 = vmatpush2.bf16.msra.mxu0 0
      %1039 = vmatprep.subr.bf16.mxu0 0
      %1040 = vmatpush2.bf16.msra.mxu0 0
      %1041 = vmatprep.subr.bf16.mxu0 0
      %1042 = vmatpush2.bf16.msra.mxu0 0
      %1043 = vmatprep.subr.bf16.mxu0 0
      %1044 = vmatpush2.bf16.msra.mxu0 0
      %1045 = vmatprep.subr.bf16.mxu0 0
      %1046 = vmatpush2.bf16.msra.mxu0 0
      %1047 = vmatprep.subr.bf16.mxu0 0
      %1048 = vmatpush2.bf16.msra.mxu0 0
      %1049 = vmatprep.subr.bf16.mxu0 0
      %1050 = vmatpush2.bf16.msra.mxu0 0
      %1051 = vmatprep.subr.bf16.mxu0 0
      %1052 = vmatpush2.bf16.msra.mxu0 0
      %1053 = vmatprep.mubr.bf16.mxu0 0
      %1054 = vmatmul.mubr.bf16.gmra.mxu0 %v1007
      %v1055 = vpop.f32.mrf.mxu0
      %v1056 = vadd.f32 0.0, %v1055
      %v1057 = vpop.f32.mrf.mxu0
      %v1058 = vpop.f32.mrf.mxu0
      %v1059 = vadd.f32 0.0, %v1058
      %v1060 = vpop.f32.mrf.mxu0
      %1061 = vmatprep.mubr.bf16.mxu0 0
      %1062 = vmatmul.mubr.bf16.gmra.mxu0 %v1010
      %v1063 = vpop.f32.mrf.mxu0
      %v1064 = vadd.f32 0.0, %v1063
      %v1065 = vpop.f32.mrf.mxu0
      %v1066 = vpop.f32.mrf.mxu0
      %v1067 = vadd.f32 0.0, %v1066
      %v1068 = vpop.f32.mrf.mxu0
      %1069 = vmatprep.mubr.bf16.mxu0 0
      %1070 = vmatmul.mubr.bf16.gmra.mxu0 %v1013
      %v1071 = vpop.f32.mrf.mxu0
      %v1072 = vadd.f32 0.0, %v1071
      %v1073 = vpop.f32.mrf.mxu0
      %v1074 = vpop.f32.mrf.mxu0
      %v1075 = vadd.f32 0.0, %v1074
      %v1076 = vpop.f32.mrf.mxu0
      %1077 = vmatprep.mubr.bf16.mxu0 0
      %1078 = vmatmul.mubr.bf16.gmra.mxu0 %v1016
      %v1079 = vpop.f32.mrf.mxu0
      %v1080 = vadd.f32 0.0, %v1079
      %v1081 = vpop.f32.mrf.mxu0
      %v1082 = vpop.f32.mrf.mxu0
      %v1083 = vadd.f32 0.0, %v1082
      %v1084 = vpop.f32.mrf.mxu0
      %1085 = vmatprep.mubr.bf16.mxu0 0
      %1086 = vmatmul.mubr.bf16.gmra.mxu0 %v1019
      %v1087 = vpop.f32.mrf.mxu0
      %v1088 = vadd.f32 0.0, %v1087
      %v1089 = vpop.f32.mrf.mxu0
      %v1090 = vpop.f32.mrf.mxu0
      %v1091 = vpop.f32.mrf.mxu0
      %1092 = vdwg.mxu0
      %v1093 = vld [vmem:[%s7] sm:$0x1]
      %v1095 = vlaneseq
      %v1096 = vshrl.u32 %v1095, 7
      %v1097 = vsub.s32 0, %v1096
      %v1098 = vrot.slane %v1093, %v1097
      %v1100 = vadd.f32 %v1056, %v1098
      %v1101 = vadd.f32 %v1059, %v1098
      %v1102 = vadd.f32 %v1064, %v1098
      %v1103 = vadd.f32 %v1067, %v1098
      %v1104 = vadd.f32 %v1072, %v1098
      %v1105 = vadd.f32 %v1075, %v1098
      %v1106 = vadd.f32 %v1080, %v1098
      %v1107 = vadd.f32 %v1083, %v1098
      %v1108 = vadd.f32 %v1088, %v1098
      %vm1109 = vcmp.gt.f32.partialorder %v1100, 20.0
      %vm1110 = vcmp.gt.f32.partialorder %v1101, 20.0
      %vm1111 = vcmp.gt.f32.partialorder %v1102, 20.0
      %vm1112 = vcmp.gt.f32.partialorder %v1103, 20.0
      %vm1113 = vcmp.gt.f32.partialorder %v1104, 20.0
      %vm1114 = vcmp.gt.f32.partialorder %v1105, 20.0
      %vm1115 = vcmp.gt.f32.partialorder %v1106, 20.0
      %vm1116 = vcmp.gt.f32.partialorder %v1107, 20.0
      %vm1117 = vcmp.gt.f32.partialorder %v1108, 20.0
      %v1118 = vmin.f32 %v1100, 20.0
      %v1119 = vmin.f32 %v1101, 20.0
      %v1120 = vmin.f32 %v1102, 20.0
      %v1121 = vmin.f32 %v1103, 20.0
      %v1122 = vmin.f32 %v1104, 20.0
      %v1123 = vmin.f32 %v1105, 20.0
      %v1124 = vmin.f32 %v1106, 20.0
      %v1125 = vmin.f32 %v1107, 20.0
      %v1126 = vmin.f32 %v1108, 20.0
      %v1127 = vmul.f32 %v1118, 1.442695
      %v1128 = vpow.pop %v1127
      %v1129 = vmul.f32 %v1119, 1.442695
      %v1130 = vpow.pop %v1129
      %v1131 = vmul.f32 %v1120, 1.442695
      %v1132 = vpow.pop %v1131
      %v1133 = vmul.f32 %v1121, 1.442695
      %v1134 = vpow.pop %v1133
      %v1135 = vmul.f32 %v1122, 1.442695
      %v1136 = vpow.pop %v1135
      %v1137 = vmul.f32 %v1123, 1.442695
      %v1138 = vpow.pop %v1137
      %v1139 = vmul.f32 %v1124, 1.442695
      %v1140 = vpow.pop %v1139
      %v1141 = vmul.f32 %v1125, 1.442695
      %v1142 = vpow.pop %v1141
      %v1143 = vmul.f32 %v1126, 1.442695
      %v1144 = vpow.pop %v1143
      %v1145 = vadd.f32 %v1128, 1.0
      %v1146 = vadd.f32 %v1130, 1.0
      %v1147 = vadd.f32 %v1132, 1.0
      %v1148 = vadd.f32 %v1134, 1.0
      %v1149 = vadd.f32 %v1136, 1.0
      %v1150 = vadd.f32 %v1138, 1.0
      %v1151 = vadd.f32 %v1140, 1.0
      %v1152 = vadd.f32 %v1142, 1.0
      %v1153 = vadd.f32 %v1144, 1.0
      %v1154 = vlog2.pop %v1145
      %v1155 = vmul.f32 %v1154, 0.6931472
      %v1156 = vlog2.pop %v1146
      %v1157 = vmul.f32 %v1156, 0.6931472
      %v1158 = vlog2.pop %v1147
      %v1159 = vmul.f32 %v1158, 0.6931472
      %v1160 = vlog2.pop %v1148
      %v1161 = vmul.f32 %v1160, 0.6931472
      %v1162 = vlog2.pop %v1149
      %v1163 = vmul.f32 %v1162, 0.6931472
      %v1164 = vlog2.pop %v1150
      %v1165 = vmul.f32 %v1164, 0.6931472
      %v1166 = vlog2.pop %v1151
      %v1167 = vmul.f32 %v1166, 0.6931472
      %v1168 = vlog2.pop %v1152
      %v1169 = vmul.f32 %v1168, 0.6931472
      %v1170 = vlog2.pop %v1153
      %v1171 = vmul.f32 %v1170, 0.6931472
      %v1172 = vsel %vm1109, %v1100, %v1155
      %v1173 = vsel %vm1110, %v1101, %v1157
      %v1174 = vsel %vm1111, %v1102, %v1159
      %v1175 = vsel %vm1112, %v1103, %v1161
      %v1176 = vsel %vm1113, %v1104, %v1163
      %v1177 = vsel %vm1114, %v1105, %v1165
      %v1178 = vsel %vm1115, %v1106, %v1167
      %v1179 = vsel %vm1116, %v1107, %v1169
      %v1180 = vsel %vm1117, %v1108, %v1171
      %1181 = vst.msk [vmem:[#allocation2] sm:$0xff] %vm755, %v1172
      %1182 = vst.msk [vmem:[#allocation2 + $0x8] sm:$0xff] %vm755, %v1173
      %1183 = vst.msk [vmem:[#allocation2 + $0x10] sm:$0xff] %vm755, %v1174
      %1184 = vst.msk [vmem:[#allocation2 + $0x18] sm:$0xff] %vm755, %v1175
      %1185 = vst.msk [vmem:[#allocation2 + $0x20] sm:$0xff] %vm755, %v1176
      %1186 = vst.msk [vmem:[#allocation2 + $0x28] sm:$0xff] %vm755, %v1177
      %1187 = vst.msk [vmem:[#allocation2 + $0x30] sm:$0xff] %vm755, %v1178
      %1188 = vst.msk [vmem:[#allocation2 + $0x38] sm:$0xff] %vm755, %v1179
      %1189 = vst.msk [vmem:[#allocation2 + $0x40] sm:$0xff] %vm755, %v1180
      %1199 = vrot.lane.b32.xlu0 %v1056, 64
      %v1200 = vpop.permute.xlu0 %1199
      %1201 = vrot.lane.b32.xlu0 %v1059, 64
      %v1202 = vpop.permute.xlu0 %1201
      %1203 = vrot.lane.b32.xlu0 %v1064, 64
      %v1204 = vpop.permute.xlu0 %1203
      %1205 = vrot.lane.b32.xlu0 %v1067, 64
      %v1206 = vpop.permute.xlu0 %1205
      %1207 = vrot.lane.b32.xlu0 %v1072, 64
      %v1208 = vpop.permute.xlu0 %1207
      %1209 = vrot.lane.b32.xlu0 %v1075, 64
      %v1210 = vpop.permute.xlu0 %1209
      %1211 = vrot.lane.b32.xlu0 %v1080, 64
      %v1212 = vpop.permute.xlu0 %1211
      %1213 = vrot.lane.b32.xlu0 %v1083, 64
      %v1214 = vpop.permute.xlu0 %1213
      %1215 = vrot.lane.b32.xlu0 %v1088, 64
      %v1216 = vpop.permute.xlu0 %1215
      %1226 = vst.msk [vmem:[#allocation5] sm:$0xff] %vm397, %v1200
      %1227 = vst.msk [vmem:[#allocation5 + $0x8] sm:$0xff] %vm397, %v1202
      %1228 = vst.msk [vmem:[#allocation5 + $0x10] sm:$0xff] %vm397, %v1204
      %1229 = vst.msk [vmem:[#allocation5 + $0x18] sm:$0xff] %vm397, %v1206
      %1230 = vst.msk [vmem:[#allocation5 + $0x20] sm:$0xff] %vm397, %v1208
      %1231 = vst.msk [vmem:[#allocation5 + $0x28] sm:$0xff] %vm397, %v1210
      %1232 = vst.msk [vmem:[#allocation5 + $0x30] sm:$0xff] %vm397, %v1212
      %1233 = vst.msk [vmem:[#allocation5 + $0x38] sm:$0xff] %vm397, %v1214
      %1234 = vst.msk [vmem:[#allocation5 + $0x40] sm:$0xff] %vm397, %v1216
      %v1235 = vld [vmem:[%s8] sm:$0xff]
      %v1236 = vld [vmem:[%s8 + $0x8] sm:$0xff]
      %v1237 = vld [vmem:[#allocation2] sm:$0xff]
      %v1238 = vld [vmem:[#allocation2 + $0x8] sm:$0xff]
      %v1239 = vld [vmem:[#allocation2 + $0x10] sm:$0xff]
      %v1240 = vld [vmem:[#allocation2 + $0x18] sm:$0xff]
      %v1241 = vld [vmem:[#allocation2 + $0x20] sm:$0xff]
      %v1242 = vld [vmem:[#allocation2 + $0x28] sm:$0xff]
      %v1243 = vld [vmem:[#allocation2 + $0x30] sm:$0xff]
      %v1244 = vld [vmem:[#allocation2 + $0x38] sm:$0xff]
      %v1245 = vld [vmem:[#allocation2 + $0x40] sm:$0xff]
      %v1255 = vcombine.high %v1237, %v1237
      %v1257 = vunpack.c.l.s4 1966171168
      %v1258 = vunpack.c.0.s8 %v1257
      %v1259 = vlaneseq
      %v1260 = vshrl.u32 %v1259, 7
      %v1261 = vsub.s32 %v1258, %v1260
      %v1262 = vrot.slane %v1237, %v1261
      %v1264 = vunpack.c.l.s4 1966171168
      %v1265 = vunpack.c.0.s8 %v1264
      %v1266 = vlaneseq
      %v1267 = vshrl.u32 %v1266, 7
      %v1268 = vsub.s32 %v1265, %v1267
      %v1269 = vrot.slane %v1255, %v1268
      %v1270 = vcombine.high %v1262, %v1262
      %v1271 = vcombine.high %v1269, %v1269
      %v1273 = vunpack.c.l.s4 1966171168
      %v1274 = vunpack.c.0.s8 %v1273
      %v1275 = vlaneseq
      %v1276 = vshrl.u32 %v1275, 7
      %v1277 = vsub.s32 %v1274, %v1276
      %v1278 = vrot.slane %v1262, %v1277
      %v1280 = vunpack.c.l.s4 1966171168
      %v1281 = vunpack.c.0.s8 %v1280
      %v1282 = vlaneseq
      %v1283 = vshrl.u32 %v1282, 7
      %v1284 = vsub.s32 %v1281, %v1283
      %v1285 = vrot.slane %v1269, %v1284
      %v1287 = vunpack.c.l.s4 1966171168
      %v1288 = vunpack.c.0.s8 %v1287
      %v1289 = vlaneseq
      %v1290 = vshrl.u32 %v1289, 7
      %v1291 = vsub.s32 %v1288, %v1290
      %v1292 = vrot.slane %v1270, %v1291
      %v1294 = vunpack.c.l.s4 1966171168
      %v1295 = vunpack.c.0.s8 %v1294
      %v1296 = vlaneseq
      %v1297 = vshrl.u32 %v1296, 7
      %v1298 = vsub.s32 %v1295, %v1297
      %v1299 = vrot.slane %v1271, %v1298
      %v1300 = vcombine.high %v1278, %v1278
      %v1301 = vcombine.high %v1285, %v1285
      %v1302 = vcombine.high %v1292, %v1292
      %v1303 = vcombine.high %v1299, %v1299
      %v1304 = vcombine.high %v1238, %v1238
      %v1306 = vunpack.c.l.s4 1966171168
      %v1307 = vunpack.c.0.s8 %v1306
      %v1308 = vlaneseq
      %v1309 = vshrl.u32 %v1308, 7
      %v1310 = vsub.s32 %v1307, %v1309
      %v1311 = vrot.slane %v1238, %v1310
      %v1313 = vunpack.c.l.s4 1966171168
      %v1314 = vunpack.c.0.s8 %v1313
      %v1315 = vlaneseq
      %v1316 = vshrl.u32 %v1315, 7
      %v1317 = vsub.s32 %v1314, %v1316
      %v1318 = vrot.slane %v1304, %v1317
      %v1319 = vcombine.high %v1311, %v1311
      %v1320 = vcombine.high %v1318, %v1318
      %v1322 = vunpack.c.l.s4 1966171168
      %v1323 = vunpack.c.0.s8 %v1322
      %v1324 = vlaneseq
      %v1325 = vshrl.u32 %v1324, 7
      %v1326 = vsub.s32 %v1323, %v1325
      %v1327 = vrot.slane %v1311, %v1326
      %v1329 = vunpack.c.l.s4 1966171168
      %v1330 = vunpack.c.0.s8 %v1329
      %v1331 = vlaneseq
      %v1332 = vshrl.u32 %v1331, 7
      %v1333 = vsub.s32 %v1330, %v1332
      %v1334 = vrot.slane %v1318, %v1333
      %v1336 = vunpack.c.l.s4 1966171168
      %v1337 = vunpack.c.0.s8 %v1336
      %v1338 = vlaneseq
      %v1339 = vshrl.u32 %v1338, 7
      %v1340 = vsub.s32 %v1337, %v1339
      %v1341 = vrot.slane %v1319, %v1340
      %v1343 = vunpack.c.l.s4 1966171168
      %v1344 = vunpack.c.0.s8 %v1343
      %v1345 = vlaneseq
      %v1346 = vshrl.u32 %v1345, 7
      %v1347 = vsub.s32 %v1344, %v1346
      %v1348 = vrot.slane %v1320, %v1347
      %v1349 = vcombine.high %v1327, %v1327
      %v1350 = vcombine.high %v1334, %v1334
      %v1351 = vcombine.high %v1341, %v1341
      %v1352 = vcombine.high %v1348, %v1348
      %v1353 = vcombine.high %v1239, %v1239
      %v1355 = vunpack.c.l.s4 1966171168
      %v1356 = vunpack.c.0.s8 %v1355
      %v1357 = vlaneseq
      %v1358 = vshrl.u32 %v1357, 7
      %v1359 = vsub.s32 %v1356, %v1358
      %v1360 = vrot.slane %v1239, %v1359
      %v1362 = vunpack.c.l.s4 1966171168
      %v1363 = vunpack.c.0.s8 %v1362
      %v1364 = vlaneseq
      %v1365 = vshrl.u32 %v1364, 7
      %v1366 = vsub.s32 %v1363, %v1365
      %v1367 = vrot.slane %v1353, %v1366
      %v1368 = vcombine.high %v1360, %v1360
      %v1369 = vcombine.high %v1367, %v1367
      %v1371 = vunpack.c.l.s4 1966171168
      %v1372 = vunpack.c.0.s8 %v1371
      %v1373 = vlaneseq
      %v1374 = vshrl.u32 %v1373, 7
      %v1375 = vsub.s32 %v1372, %v1374
      %v1376 = vrot.slane %v1360, %v1375
      %v1378 = vunpack.c.l.s4 1966171168
      %v1379 = vunpack.c.0.s8 %v1378
      %v1380 = vlaneseq
      %v1381 = vshrl.u32 %v1380, 7
      %v1382 = vsub.s32 %v1379, %v1381
      %v1383 = vrot.slane %v1367, %v1382
      %v1385 = vunpack.c.l.s4 1966171168
      %v1386 = vunpack.c.0.s8 %v1385
      %v1387 = vlaneseq
      %v1388 = vshrl.u32 %v1387, 7
      %v1389 = vsub.s32 %v1386, %v1388
      %v1390 = vrot.slane %v1368, %v1389
      %v1392 = vunpack.c.l.s4 1966171168
      %v1393 = vunpack.c.0.s8 %v1392
      %v1394 = vlaneseq
      %v1395 = vshrl.u32 %v1394, 7
      %v1396 = vsub.s32 %v1393, %v1395
      %v1397 = vrot.slane %v1369, %v1396
      %v1398 = vcombine.high %v1376, %v1376
      %v1399 = vcombine.high %v1383, %v1383
      %v1400 = vcombine.high %v1390, %v1390
      %v1401 = vcombine.high %v1397, %v1397
      %v1402 = vcombine.high %v1240, %v1240
      %v1404 = vunpack.c.l.s4 1966171168
      %v1405 = vunpack.c.0.s8 %v1404
      %v1406 = vlaneseq
      %v1407 = vshrl.u32 %v1406, 7
      %v1408 = vsub.s32 %v1405, %v1407
      %v1409 = vrot.slane %v1240, %v1408
      %v1411 = vunpack.c.l.s4 1966171168
      %v1412 = vunpack.c.0.s8 %v1411
      %v1413 = vlaneseq
      %v1414 = vshrl.u32 %v1413, 7
      %v1415 = vsub.s32 %v1412, %v1414
      %v1416 = vrot.slane %v1402, %v1415
      %v1417 = vcombine.high %v1409, %v1409
      %v1418 = vcombine.high %v1416, %v1416
      %v1420 = vunpack.c.l.s4 1966171168
      %v1421 = vunpack.c.0.s8 %v1420
      %v1422 = vlaneseq
      %v1423 = vshrl.u32 %v1422, 7
      %v1424 = vsub.s32 %v1421, %v1423
      %v1425 = vrot.slane %v1409, %v1424
      %v1427 = vunpack.c.l.s4 1966171168
      %v1428 = vunpack.c.0.s8 %v1427
      %v1429 = vlaneseq
      %v1430 = vshrl.u32 %v1429, 7
      %v1431 = vsub.s32 %v1428, %v1430
      %v1432 = vrot.slane %v1416, %v1431
      %v1434 = vunpack.c.l.s4 1966171168
      %v1435 = vunpack.c.0.s8 %v1434
      %v1436 = vlaneseq
      %v1437 = vshrl.u32 %v1436, 7
      %v1438 = vsub.s32 %v1435, %v1437
      %v1439 = vrot.slane %v1417, %v1438
      %v1441 = vunpack.c.l.s4 1966171168
      %v1442 = vunpack.c.0.s8 %v1441
      %v1443 = vlaneseq
      %v1444 = vshrl.u32 %v1443, 7
      %v1445 = vsub.s32 %v1442, %v1444
      %v1446 = vrot.slane %v1418, %v1445
      %v1447 = vcombine.high %v1425, %v1425
      %v1448 = vcombine.high %v1432, %v1432
      %v1449 = vcombine.high %v1439, %v1439
      %v1450 = vcombine.high %v1446, %v1446
      %v1451 = vcombine.high %v1241, %v1241
      %v1453 = vunpack.c.l.s4 1966171168
      %v1454 = vunpack.c.0.s8 %v1453
      %v1455 = vlaneseq
      %v1456 = vshrl.u32 %v1455, 7
      %v1457 = vsub.s32 %v1454, %v1456
      %v1458 = vrot.slane %v1241, %v1457
      %v1460 = vunpack.c.l.s4 1966171168
      %v1461 = vunpack.c.0.s8 %v1460
      %v1462 = vlaneseq
      %v1463 = vshrl.u32 %v1462, 7
      %v1464 = vsub.s32 %v1461, %v1463
      %v1465 = vrot.slane %v1451, %v1464
      %v1466 = vcombine.high %v1458, %v1458
      %v1467 = vcombine.high %v1465, %v1465
      %v1469 = vunpack.c.l.s4 1966171168
      %v1470 = vunpack.c.0.s8 %v1469
      %v1471 = vlaneseq
      %v1472 = vshrl.u32 %v1471, 7
      %v1473 = vsub.s32 %v1470, %v1472
      %v1474 = vrot.slane %v1458, %v1473
      %v1476 = vunpack.c.l.s4 1966171168
      %v1477 = vunpack.c.0.s8 %v1476
      %v1478 = vlaneseq
      %v1479 = vshrl.u32 %v1478, 7
      %v1480 = vsub.s32 %v1477, %v1479
      %v1481 = vrot.slane %v1465, %v1480
      %v1483 = vunpack.c.l.s4 1966171168
      %v1484 = vunpack.c.0.s8 %v1483
      %v1485 = vlaneseq
      %v1486 = vshrl.u32 %v1485, 7
      %v1487 = vsub.s32 %v1484, %v1486
      %v1488 = vrot.slane %v1466, %v1487
      %v1490 = vunpack.c.l.s4 1966171168
      %v1491 = vunpack.c.0.s8 %v1490
      %v1492 = vlaneseq
      %v1493 = vshrl.u32 %v1492, 7
      %v1494 = vsub.s32 %v1491, %v1493
      %v1495 = vrot.slane %v1467, %v1494
      %v1496 = vcombine.high %v1474, %v1474
      %v1497 = vcombine.high %v1481, %v1481
      %v1498 = vcombine.high %v1488, %v1488
      %v1499 = vcombine.high %v1495, %v1495
      %v1500 = vcombine.high %v1242, %v1242
      %v1502 = vunpack.c.l.s4 1966171168
      %v1503 = vunpack.c.0.s8 %v1502
      %v1504 = vlaneseq
      %v1505 = vshrl.u32 %v1504, 7
      %v1506 = vsub.s32 %v1503, %v1505
      %v1507 = vrot.slane %v1242, %v1506
      %v1509 = vunpack.c.l.s4 1966171168
      %v1510 = vunpack.c.0.s8 %v1509
      %v1511 = vlaneseq
      %v1512 = vshrl.u32 %v1511, 7
      %v1513 = vsub.s32 %v1510, %v1512
      %v1514 = vrot.slane %v1500, %v1513
      %v1515 = vcombine.high %v1507, %v1507
      %v1516 = vcombine.high %v1514, %v1514
      %v1518 = vunpack.c.l.s4 1966171168
      %v1519 = vunpack.c.0.s8 %v1518
      %v1520 = vlaneseq
      %v1521 = vshrl.u32 %v1520, 7
      %v1522 = vsub.s32 %v1519, %v1521
      %v1523 = vrot.slane %v1507, %v1522
      %v1525 = vunpack.c.l.s4 1966171168
      %v1526 = vunpack.c.0.s8 %v1525
      %v1527 = vlaneseq
      %v1528 = vshrl.u32 %v1527, 7
      %v1529 = vsub.s32 %v1526, %v1528
      %v1530 = vrot.slane %v1514, %v1529
      %v1532 = vunpack.c.l.s4 1966171168
      %v1533 = vunpack.c.0.s8 %v1532
      %v1534 = vlaneseq
      %v1535 = vshrl.u32 %v1534, 7
      %v1536 = vsub.s32 %v1533, %v1535
      %v1537 = vrot.slane %v1515, %v1536
      %v1539 = vunpack.c.l.s4 1966171168
      %v1540 = vunpack.c.0.s8 %v1539
      %v1541 = vlaneseq
      %v1542 = vshrl.u32 %v1541, 7
      %v1543 = vsub.s32 %v1540, %v1542
      %v1544 = vrot.slane %v1516, %v1543
      %v1545 = vcombine.high %v1523, %v1523
      %v1546 = vcombine.high %v1530, %v1530
      %v1547 = vcombine.high %v1537, %v1537
      %v1548 = vcombine.high %v1544, %v1544
      %v1549 = vcombine.high %v1243, %v1243
      %v1551 = vunpack.c.l.s4 1966171168
      %v1552 = vunpack.c.0.s8 %v1551
      %v1553 = vlaneseq
      %v1554 = vshrl.u32 %v1553, 7
      %v1555 = vsub.s32 %v1552, %v1554
      %v1556 = vrot.slane %v1243, %v1555
      %v1558 = vunpack.c.l.s4 1966171168
      %v1559 = vunpack.c.0.s8 %v1558
      %v1560 = vlaneseq
      %v1561 = vshrl.u32 %v1560, 7
      %v1562 = vsub.s32 %v1559, %v1561
      %v1563 = vrot.slane %v1549, %v1562
      %v1564 = vcombine.high %v1556, %v1556
      %v1565 = vcombine.high %v1563, %v1563
      %v1567 = vunpack.c.l.s4 1966171168
      %v1568 = vunpack.c.0.s8 %v1567
      %v1569 = vlaneseq
      %v1570 = vshrl.u32 %v1569, 7
      %v1571 = vsub.s32 %v1568, %v1570
      %v1572 = vrot.slane %v1556, %v1571
      %v1574 = vunpack.c.l.s4 1966171168
      %v1575 = vunpack.c.0.s8 %v1574
      %v1576 = vlaneseq
      %v1577 = vshrl.u32 %v1576, 7
      %v1578 = vsub.s32 %v1575, %v1577
      %v1579 = vrot.slane %v1563, %v1578
      %v1581 = vunpack.c.l.s4 1966171168
      %v1582 = vunpack.c.0.s8 %v1581
      %v1583 = vlaneseq
      %v1584 = vshrl.u32 %v1583, 7
      %v1585 = vsub.s32 %v1582, %v1584
      %v1586 = vrot.slane %v1564, %v1585
      %v1588 = vunpack.c.l.s4 1966171168
      %v1589 = vunpack.c.0.s8 %v1588
      %v1590 = vlaneseq
      %v1591 = vshrl.u32 %v1590, 7
      %v1592 = vsub.s32 %v1589, %v1591
      %v1593 = vrot.slane %v1565, %v1592
      %v1594 = vcombine.high %v1572, %v1572
      %v1595 = vcombine.high %v1579, %v1579
      %v1596 = vcombine.high %v1586, %v1586
      %v1597 = vcombine.high %v1593, %v1593
      %v1598 = vcombine.high %v1244, %v1244
      %v1600 = vunpack.c.l.s4 1966171168
      %v1601 = vunpack.c.0.s8 %v1600
      %v1602 = vlaneseq
      %v1603 = vshrl.u32 %v1602, 7
      %v1604 = vsub.s32 %v1601, %v1603
      %v1605 = vrot.slane %v1244, %v1604
      %v1607 = vunpack.c.l.s4 1966171168
      %v1608 = vunpack.c.0.s8 %v1607
      %v1609 = vlaneseq
      %v1610 = vshrl.u32 %v1609, 7
      %v1611 = vsub.s32 %v1608, %v1610
      %v1612 = vrot.slane %v1598, %v1611
      %v1613 = vcombine.high %v1605, %v1605
      %v1614 = vcombine.high %v1612, %v1612
      %v1616 = vunpack.c.l.s4 1966171168
      %v1617 = vunpack.c.0.s8 %v1616
      %v1618 = vlaneseq
      %v1619 = vshrl.u32 %v1618, 7
      %v1620 = vsub.s32 %v1617, %v1619
      %v1621 = vrot.slane %v1605, %v1620
      %v1623 = vunpack.c.l.s4 1966171168
      %v1624 = vunpack.c.0.s8 %v1623
      %v1625 = vlaneseq
      %v1626 = vshrl.u32 %v1625, 7
      %v1627 = vsub.s32 %v1624, %v1626
      %v1628 = vrot.slane %v1612, %v1627
      %v1630 = vunpack.c.l.s4 1966171168
      %v1631 = vunpack.c.0.s8 %v1630
      %v1632 = vlaneseq
      %v1633 = vshrl.u32 %v1632, 7
      %v1634 = vsub.s32 %v1631, %v1633
      %v1635 = vrot.slane %v1613, %v1634
      %v1637 = vunpack.c.l.s4 1966171168
      %v1638 = vunpack.c.0.s8 %v1637
      %v1639 = vlaneseq
      %v1640 = vshrl.u32 %v1639, 7
      %v1641 = vsub.s32 %v1638, %v1640
      %v1642 = vrot.slane %v1614, %v1641
      %v1643 = vcombine.high %v1621, %v1621
      %v1644 = vcombine.high %v1628, %v1628
      %v1645 = vcombine.high %v1635, %v1635
      %v1646 = vcombine.high %v1642, %v1642
      %v1647 = vcombine.high %v1245, %v1245
      %v1649 = vunpack.c.l.s4 1966171168
      %v1650 = vunpack.c.0.s8 %v1649
      %v1651 = vlaneseq
      %v1652 = vshrl.u32 %v1651, 7
      %v1653 = vsub.s32 %v1650, %v1652
      %v1654 = vrot.slane %v1245, %v1653
      %v1656 = vunpack.c.l.s4 1966171168
      %v1657 = vunpack.c.0.s8 %v1656
      %v1658 = vlaneseq
      %v1659 = vshrl.u32 %v1658, 7
      %v1660 = vsub.s32 %v1657, %v1659
      %v1661 = vrot.slane %v1647, %v1660
      %v1662 = vcombine.high %v1654, %v1654
      %v1663 = vcombine.high %v1661, %v1661
      %v1665 = vunpack.c.l.s4 1966171168
      %v1666 = vunpack.c.0.s8 %v1665
      %v1667 = vlaneseq
      %v1668 = vshrl.u32 %v1667, 7
      %v1669 = vsub.s32 %v1666, %v1668
      %v1670 = vrot.slane %v1654, %v1669
      %v1672 = vunpack.c.l.s4 1966171168
      %v1673 = vunpack.c.0.s8 %v1672
      %v1674 = vlaneseq
      %v1675 = vshrl.u32 %v1674, 7
      %v1676 = vsub.s32 %v1673, %v1675
      %v1677 = vrot.slane %v1661, %v1676
      %v1679 = vunpack.c.l.s4 1966171168
      %v1680 = vunpack.c.0.s8 %v1679
      %v1681 = vlaneseq
      %v1682 = vshrl.u32 %v1681, 7
      %v1683 = vsub.s32 %v1680, %v1682
      %v1684 = vrot.slane %v1662, %v1683
      %v1686 = vunpack.c.l.s4 1966171168
      %v1687 = vunpack.c.0.s8 %v1686
      %v1688 = vlaneseq
      %v1689 = vshrl.u32 %v1688, 7
      %v1690 = vsub.s32 %v1687, %v1689
      %v1691 = vrot.slane %v1663, %v1690
      %v1692 = vcombine.high %v1670, %v1670
      %v1693 = vcombine.high %v1677, %v1677
      %v1694 = vcombine.high %v1684, %v1684
      %v1695 = vcombine.high %v1691, %v1691
      %v1696 = vlaneseq
      %v1697 = vshrl.u32 %v1696, 7
      %v1698 = vsub.s32 0, %v1697
      %v1699 = vrot.slane %v1278, %v1698
      %v1700 = vlaneseq
      %v1701 = vshrl.u32 %v1700, 7
      %v1702 = vsub.s32 0, %v1701
      %v1703 = vrot.slane %v1292, %v1702
      %v1704 = vlaneseq
      %v1705 = vshrl.u32 %v1704, 7
      %v1706 = vsub.s32 0, %v1705
      %v1707 = vrot.slane %v1300, %v1706
      %v1708 = vlaneseq
      %v1709 = vshrl.u32 %v1708, 7
      %v1710 = vsub.s32 0, %v1709
      %v1711 = vrot.slane %v1302, %v1710
      %v1712 = vlaneseq
      %v1713 = vshrl.u32 %v1712, 7
      %v1714 = vsub.s32 0, %v1713
      %v1715 = vrot.slane %v1285, %v1714
      %v1716 = vlaneseq
      %v1717 = vshrl.u32 %v1716, 7
      %v1718 = vsub.s32 0, %v1717
      %v1719 = vrot.slane %v1299, %v1718
      %v1720 = vlaneseq
      %v1721 = vshrl.u32 %v1720, 7
      %v1722 = vsub.s32 0, %v1721
      %v1723 = vrot.slane %v1301, %v1722
      %v1724 = vlaneseq
      %v1725 = vshrl.u32 %v1724, 7
      %v1726 = vsub.s32 0, %v1725
      %v1727 = vrot.slane %v1303, %v1726
      %v1728 = vlaneseq
      %v1729 = vshrl.u32 %v1728, 7
      %v1730 = vsub.s32 0, %v1729
      %v1731 = vrot.slane %v1327, %v1730
      %v1732 = vlaneseq
      %v1733 = vshrl.u32 %v1732, 7
      %v1734 = vsub.s32 0, %v1733
      %v1735 = vrot.slane %v1341, %v1734
      %v1736 = vlaneseq
      %v1737 = vshrl.u32 %v1736, 7
      %v1738 = vsub.s32 0, %v1737
      %v1739 = vrot.slane %v1349, %v1738
      %v1740 = vlaneseq
      %v1741 = vshrl.u32 %v1740, 7
      %v1742 = vsub.s32 0, %v1741
      %v1743 = vrot.slane %v1351, %v1742
      %v1744 = vlaneseq
      %v1745 = vshrl.u32 %v1744, 7
      %v1746 = vsub.s32 0, %v1745
      %v1747 = vrot.slane %v1334, %v1746
      %v1748 = vlaneseq
      %v1749 = vshrl.u32 %v1748, 7
      %v1750 = vsub.s32 0, %v1749
      %v1751 = vrot.slane %v1348, %v1750
      %v1752 = vlaneseq
      %v1753 = vshrl.u32 %v1752, 7
      %v1754 = vsub.s32 0, %v1753
      %v1755 = vrot.slane %v1350, %v1754
      %v1756 = vlaneseq
      %v1757 = vshrl.u32 %v1756, 7
      %v1758 = vsub.s32 0, %v1757
      %v1759 = vrot.slane %v1352, %v1758
      %v1760 = vlaneseq
      %v1761 = vshrl.u32 %v1760, 7
      %v1762 = vsub.s32 0, %v1761
      %v1763 = vrot.slane %v1376, %v1762
      %v1764 = vlaneseq
      %v1765 = vshrl.u32 %v1764, 7
      %v1766 = vsub.s32 0, %v1765
      %v1767 = vrot.slane %v1390, %v1766
      %v1768 = vlaneseq
      %v1769 = vshrl.u32 %v1768, 7
      %v1770 = vsub.s32 0, %v1769
      %v1771 = vrot.slane %v1398, %v1770
      %v1772 = vlaneseq
      %v1773 = vshrl.u32 %v1772, 7
      %v1774 = vsub.s32 0, %v1773
      %v1775 = vrot.slane %v1400, %v1774
      %v1776 = vlaneseq
      %v1777 = vshrl.u32 %v1776, 7
      %v1778 = vsub.s32 0, %v1777
      %v1779 = vrot.slane %v1383, %v1778
      %v1780 = vlaneseq
      %v1781 = vshrl.u32 %v1780, 7
      %v1782 = vsub.s32 0, %v1781
      %v1783 = vrot.slane %v1397, %v1782
      %v1784 = vlaneseq
      %v1785 = vshrl.u32 %v1784, 7
      %v1786 = vsub.s32 0, %v1785
      %v1787 = vrot.slane %v1399, %v1786
      %v1788 = vlaneseq
      %v1789 = vshrl.u32 %v1788, 7
      %v1790 = vsub.s32 0, %v1789
      %v1791 = vrot.slane %v1401, %v1790
      %v1792 = vlaneseq
      %v1793 = vshrl.u32 %v1792, 7
      %v1794 = vsub.s32 0, %v1793
      %v1795 = vrot.slane %v1425, %v1794
      %v1796 = vlaneseq
      %v1797 = vshrl.u32 %v1796, 7
      %v1798 = vsub.s32 0, %v1797
      %v1799 = vrot.slane %v1439, %v1798
      %v1800 = vlaneseq
      %v1801 = vshrl.u32 %v1800, 7
      %v1802 = vsub.s32 0, %v1801
      %v1803 = vrot.slane %v1447, %v1802
      %v1804 = vlaneseq
      %v1805 = vshrl.u32 %v1804, 7
      %v1806 = vsub.s32 0, %v1805
      %v1807 = vrot.slane %v1449, %v1806
      %v1808 = vlaneseq
      %v1809 = vshrl.u32 %v1808, 7
      %v1810 = vsub.s32 0, %v1809
      %v1811 = vrot.slane %v1432, %v1810
      %v1812 = vlaneseq
      %v1813 = vshrl.u32 %v1812, 7
      %v1814 = vsub.s32 0, %v1813
      %v1815 = vrot.slane %v1446, %v1814
      %v1816 = vlaneseq
      %v1817 = vshrl.u32 %v1816, 7
      %v1818 = vsub.s32 0, %v1817
      %v1819 = vrot.slane %v1448, %v1818
      %v1820 = vlaneseq
      %v1821 = vshrl.u32 %v1820, 7
      %v1822 = vsub.s32 0, %v1821
      %v1823 = vrot.slane %v1450, %v1822
      %v1824 = vlaneseq
      %v1825 = vshrl.u32 %v1824, 7
      %v1826 = vsub.s32 0, %v1825
      %v1827 = vrot.slane %v1474, %v1826
      %v1828 = vlaneseq
      %v1829 = vshrl.u32 %v1828, 7
      %v1830 = vsub.s32 0, %v1829
      %v1831 = vrot.slane %v1488, %v1830
      %v1832 = vlaneseq
      %v1833 = vshrl.u32 %v1832, 7
      %v1834 = vsub.s32 0, %v1833
      %v1835 = vrot.slane %v1496, %v1834
      %v1836 = vlaneseq
      %v1837 = vshrl.u32 %v1836, 7
      %v1838 = vsub.s32 0, %v1837
      %v1839 = vrot.slane %v1498, %v1838
      %v1840 = vlaneseq
      %v1841 = vshrl.u32 %v1840, 7
      %v1842 = vsub.s32 0, %v1841
      %v1843 = vrot.slane %v1481, %v1842
      %v1844 = vlaneseq
      %v1845 = vshrl.u32 %v1844, 7
      %v1846 = vsub.s32 0, %v1845
      %v1847 = vrot.slane %v1495, %v1846
      %v1848 = vlaneseq
      %v1849 = vshrl.u32 %v1848, 7
      %v1850 = vsub.s32 0, %v1849
      %v1851 = vrot.slane %v1497, %v1850
      %v1852 = vlaneseq
      %v1853 = vshrl.u32 %v1852, 7
      %v1854 = vsub.s32 0, %v1853
      %v1855 = vrot.slane %v1499, %v1854
      %v1856 = vlaneseq
      %v1857 = vshrl.u32 %v1856, 7
      %v1858 = vsub.s32 0, %v1857
      %v1859 = vrot.slane %v1523, %v1858
      %v1860 = vlaneseq
      %v1861 = vshrl.u32 %v1860, 7
      %v1862 = vsub.s32 0, %v1861
      %v1863 = vrot.slane %v1537, %v1862
      %v1864 = vlaneseq
      %v1865 = vshrl.u32 %v1864, 7
      %v1866 = vsub.s32 0, %v1865
      %v1867 = vrot.slane %v1545, %v1866
      %v1868 = vlaneseq
      %v1869 = vshrl.u32 %v1868, 7
      %v1870 = vsub.s32 0, %v1869
      %v1871 = vrot.slane %v1547, %v1870
      %v1872 = vlaneseq
      %v1873 = vshrl.u32 %v1872, 7
      %v1874 = vsub.s32 0, %v1873
      %v1875 = vrot.slane %v1530, %v1874
      %v1876 = vlaneseq
      %v1877 = vshrl.u32 %v1876, 7
      %v1878 = vsub.s32 0, %v1877
      %v1879 = vrot.slane %v1544, %v1878
      %v1880 = vlaneseq
      %v1881 = vshrl.u32 %v1880, 7
      %v1882 = vsub.s32 0, %v1881
      %v1883 = vrot.slane %v1546, %v1882
      %v1884 = vlaneseq
      %v1885 = vshrl.u32 %v1884, 7
      %v1886 = vsub.s32 0, %v1885
      %v1887 = vrot.slane %v1548, %v1886
      %v1888 = vlaneseq
      %v1889 = vshrl.u32 %v1888, 7
      %v1890 = vsub.s32 0, %v1889
      %v1891 = vrot.slane %v1572, %v1890
      %v1892 = vlaneseq
      %v1893 = vshrl.u32 %v1892, 7
      %v1894 = vsub.s32 0, %v1893
      %v1895 = vrot.slane %v1586, %v1894
      %v1896 = vlaneseq
      %v1897 = vshrl.u32 %v1896, 7
      %v1898 = vsub.s32 0, %v1897
      %v1899 = vrot.slane %v1594, %v1898
      %v1900 = vlaneseq
      %v1901 = vshrl.u32 %v1900, 7
      %v1902 = vsub.s32 0, %v1901
      %v1903 = vrot.slane %v1596, %v1902
      %v1904 = vlaneseq
      %v1905 = vshrl.u32 %v1904, 7
      %v1906 = vsub.s32 0, %v1905
      %v1907 = vrot.slane %v1579, %v1906
      %v1908 = vlaneseq
      %v1909 = vshrl.u32 %v1908, 7
      %v1910 = vsub.s32 0, %v1909
      %v1911 = vrot.slane %v1593, %v1910
      %v1912 = vlaneseq
      %v1913 = vshrl.u32 %v1912, 7
      %v1914 = vsub.s32 0, %v1913
      %v1915 = vrot.slane %v1595, %v1914
      %v1916 = vlaneseq
      %v1917 = vshrl.u32 %v1916, 7
      %v1918 = vsub.s32 0, %v1917
      %v1919 = vrot.slane %v1597, %v1918
      %v1920 = vlaneseq
      %v1921 = vshrl.u32 %v1920, 7
      %v1922 = vsub.s32 0, %v1921
      %v1923 = vrot.slane %v1621, %v1922
      %v1924 = vlaneseq
      %v1925 = vshrl.u32 %v1924, 7
      %v1926 = vsub.s32 0, %v1925
      %v1927 = vrot.slane %v1635, %v1926
      %v1928 = vlaneseq
      %v1929 = vshrl.u32 %v1928, 7
      %v1930 = vsub.s32 0, %v1929
      %v1931 = vrot.slane %v1643, %v1930
      %v1932 = vlaneseq
      %v1933 = vshrl.u32 %v1932, 7
      %v1934 = vsub.s32 0, %v1933
      %v1935 = vrot.slane %v1645, %v1934
      %v1936 = vlaneseq
      %v1937 = vshrl.u32 %v1936, 7
      %v1938 = vsub.s32 0, %v1937
      %v1939 = vrot.slane %v1628, %v1938
      %v1940 = vlaneseq
      %v1941 = vshrl.u32 %v1940, 7
      %v1942 = vsub.s32 0, %v1941
      %v1943 = vrot.slane %v1642, %v1942
      %v1944 = vlaneseq
      %v1945 = vshrl.u32 %v1944, 7
      %v1946 = vsub.s32 0, %v1945
      %v1947 = vrot.slane %v1644, %v1946
      %v1948 = vlaneseq
      %v1949 = vshrl.u32 %v1948, 7
      %v1950 = vsub.s32 0, %v1949
      %v1951 = vrot.slane %v1646, %v1950
      %v1952 = vlaneseq
      %v1953 = vshrl.u32 %v1952, 7
      %v1954 = vsub.s32 0, %v1953
      %v1955 = vrot.slane %v1670, %v1954
      %v1956 = vlaneseq
      %v1957 = vshrl.u32 %v1956, 7
      %v1958 = vsub.s32 0, %v1957
      %v1959 = vrot.slane %v1684, %v1958
      %v1960 = vlaneseq
      %v1961 = vshrl.u32 %v1960, 7
      %v1962 = vsub.s32 0, %v1961
      %v1963 = vrot.slane %v1692, %v1962
      %v1964 = vlaneseq
      %v1965 = vshrl.u32 %v1964, 7
      %v1966 = vsub.s32 0, %v1965
      %v1967 = vrot.slane %v1694, %v1966
      %v1968 = vlaneseq
      %v1969 = vshrl.u32 %v1968, 7
      %v1970 = vsub.s32 0, %v1969
      %v1971 = vrot.slane %v1677, %v1970
      %v1972 = vlaneseq
      %v1973 = vshrl.u32 %v1972, 7
      %v1974 = vsub.s32 0, %v1973
      %v1975 = vrot.slane %v1691, %v1974
      %v1976 = vlaneseq
      %v1977 = vshrl.u32 %v1976, 7
      %v1978 = vsub.s32 0, %v1977
      %v1979 = vrot.slane %v1693, %v1978
      %v1980 = vlaneseq
      %v1981 = vshrl.u32 %v1980, 7
      %v1982 = vsub.s32 0, %v1981
      %v1983 = vrot.slane %v1695, %v1982
      %v2056 = vmul.f32 %v1699, %v1235
      %v2057 = vmul.f32 %v1699, %v1236
      %v2058 = vmul.f32 %v1703, %v1235
      %v2059 = vmul.f32 %v1703, %v1236
      %v2060 = vmul.f32 %v1707, %v1235
      %v2061 = vmul.f32 %v1707, %v1236
      %v2062 = vmul.f32 %v1711, %v1235
      %v2063 = vmul.f32 %v1711, %v1236
      %v2064 = vmul.f32 %v1715, %v1235
      %v2065 = vmul.f32 %v1715, %v1236
      %v2066 = vmul.f32 %v1719, %v1235
      %v2067 = vmul.f32 %v1719, %v1236
      %v2068 = vmul.f32 %v1723, %v1235
      %v2069 = vmul.f32 %v1723, %v1236
      %v2070 = vmul.f32 %v1727, %v1235
      %v2071 = vmul.f32 %v1727, %v1236
      %v2072 = vmul.f32 %v1731, %v1235
      %v2073 = vmul.f32 %v1731, %v1236
      %v2074 = vmul.f32 %v1735, %v1235
      %v2075 = vmul.f32 %v1735, %v1236
      %v2076 = vmul.f32 %v1739, %v1235
      %v2077 = vmul.f32 %v1739, %v1236
      %v2078 = vmul.f32 %v1743, %v1235
      %v2079 = vmul.f32 %v1743, %v1236
      %v2080 = vmul.f32 %v1747, %v1235
      %v2081 = vmul.f32 %v1747, %v1236
      %v2082 = vmul.f32 %v1751, %v1235
      %v2083 = vmul.f32 %v1751, %v1236
      %v2084 = vmul.f32 %v1755, %v1235
      %v2085 = vmul.f32 %v1755, %v1236
      %v2086 = vmul.f32 %v1759, %v1235
      %v2087 = vmul.f32 %v1759, %v1236
      %v2088 = vmul.f32 %v1763, %v1235
      %v2089 = vmul.f32 %v1763, %v1236
      %v2090 = vmul.f32 %v1767, %v1235
      %v2091 = vmul.f32 %v1767, %v1236
      %v2092 = vmul.f32 %v1771, %v1235
      %v2093 = vmul.f32 %v1771, %v1236
      %v2094 = vmul.f32 %v1775, %v1235
      %v2095 = vmul.f32 %v1775, %v1236
      %v2096 = vmul.f32 %v1779, %v1235
      %v2097 = vmul.f32 %v1779, %v1236
      %v2098 = vmul.f32 %v1783, %v1235
      %v2099 = vmul.f32 %v1783, %v1236
      %v2100 = vmul.f32 %v1787, %v1235
      %v2101 = vmul.f32 %v1787, %v1236
      %v2102 = vmul.f32 %v1791, %v1235
      %v2103 = vmul.f32 %v1791, %v1236
      %v2104 = vmul.f32 %v1795, %v1235
      %v2105 = vmul.f32 %v1795, %v1236
      %v2106 = vmul.f32 %v1799, %v1235
      %v2107 = vmul.f32 %v1799, %v1236
      %v2108 = vmul.f32 %v1803, %v1235
      %v2109 = vmul.f32 %v1803, %v1236
      %v2110 = vmul.f32 %v1807, %v1235
      %v2111 = vmul.f32 %v1807, %v1236
      %v2112 = vmul.f32 %v1811, %v1235
      %v2113 = vmul.f32 %v1811, %v1236
      %v2114 = vmul.f32 %v1815, %v1235
      %v2115 = vmul.f32 %v1815, %v1236
      %v2116 = vmul.f32 %v1819, %v1235
      %v2117 = vmul.f32 %v1819, %v1236
      %v2118 = vmul.f32 %v1823, %v1235
      %v2119 = vmul.f32 %v1823, %v1236
      %v2120 = vmul.f32 %v1827, %v1235
      %v2121 = vmul.f32 %v1827, %v1236
      %v2122 = vmul.f32 %v1831, %v1235
      %v2123 = vmul.f32 %v1831, %v1236
      %v2124 = vmul.f32 %v1835, %v1235
      %v2125 = vmul.f32 %v1835, %v1236
      %v2126 = vmul.f32 %v1839, %v1235
      %v2127 = vmul.f32 %v1839, %v1236
      %v2128 = vmul.f32 %v1843, %v1235
      %v2129 = vmul.f32 %v1843, %v1236
      %v2130 = vmul.f32 %v1847, %v1235
      %v2131 = vmul.f32 %v1847, %v1236
      %v2132 = vmul.f32 %v1851, %v1235
      %v2133 = vmul.f32 %v1851, %v1236
      %v2134 = vmul.f32 %v1855, %v1235
      %v2135 = vmul.f32 %v1855, %v1236
      %v2136 = vmul.f32 %v1859, %v1235
      %v2137 = vmul.f32 %v1859, %v1236
      %v2138 = vmul.f32 %v1863, %v1235
      %v2139 = vmul.f32 %v1863, %v1236
      %v2140 = vmul.f32 %v1867, %v1235
      %v2141 = vmul.f32 %v1867, %v1236
      %v2142 = vmul.f32 %v1871, %v1235
      %v2143 = vmul.f32 %v1871, %v1236
      %v2144 = vmul.f32 %v1875, %v1235
      %v2145 = vmul.f32 %v1875, %v1236
      %v2146 = vmul.f32 %v1879, %v1235
      %v2147 = vmul.f32 %v1879, %v1236
      %v2148 = vmul.f32 %v1883, %v1235
      %v2149 = vmul.f32 %v1883, %v1236
      %v2150 = vmul.f32 %v1887, %v1235
      %v2151 = vmul.f32 %v1887, %v1236
      %v2152 = vmul.f32 %v1891, %v1235
      %v2153 = vmul.f32 %v1891, %v1236
      %v2154 = vmul.f32 %v1895, %v1235
      %v2155 = vmul.f32 %v1895, %v1236
      %v2156 = vmul.f32 %v1899, %v1235
      %v2157 = vmul.f32 %v1899, %v1236
      %v2158 = vmul.f32 %v1903, %v1235
      %v2159 = vmul.f32 %v1903, %v1236
      %v2160 = vmul.f32 %v1907, %v1235
      %v2161 = vmul.f32 %v1907, %v1236
      %v2162 = vmul.f32 %v1911, %v1235
      %v2163 = vmul.f32 %v1911, %v1236
      %v2164 = vmul.f32 %v1915, %v1235
      %v2165 = vmul.f32 %v1915, %v1236
      %v2166 = vmul.f32 %v1919, %v1235
      %v2167 = vmul.f32 %v1919, %v1236
      %v2168 = vmul.f32 %v1923, %v1235
      %v2169 = vmul.f32 %v1923, %v1236
      %v2170 = vmul.f32 %v1927, %v1235
      %v2171 = vmul.f32 %v1927, %v1236
      %v2172 = vmul.f32 %v1931, %v1235
      %v2173 = vmul.f32 %v1931, %v1236
      %v2174 = vmul.f32 %v1935, %v1235
      %v2175 = vmul.f32 %v1935, %v1236
      %v2176 = vmul.f32 %v1939, %v1235
      %v2177 = vmul.f32 %v1939, %v1236
      %v2178 = vmul.f32 %v1943, %v1235
      %v2179 = vmul.f32 %v1943, %v1236
      %v2180 = vmul.f32 %v1947, %v1235
      %v2181 = vmul.f32 %v1947, %v1236
      %v2182 = vmul.f32 %v1951, %v1235
      %v2183 = vmul.f32 %v1951, %v1236
      %v2184 = vmul.f32 %v1955, %v1235
      %v2185 = vmul.f32 %v1955, %v1236
      %v2186 = vmul.f32 %v1959, %v1235
      %v2187 = vmul.f32 %v1959, %v1236
      %v2188 = vmul.f32 %v1963, %v1235
      %v2189 = vmul.f32 %v1963, %v1236
      %v2190 = vmul.f32 %v1967, %v1235
      %v2191 = vmul.f32 %v1967, %v1236
      %v2192 = vmul.f32 %v1971, %v1235
      %v2193 = vmul.f32 %v1971, %v1236
      %v2194 = vmul.f32 %v1975, %v1235
      %v2195 = vmul.f32 %v1975, %v1236
      %v2196 = vmul.f32 %v1979, %v1235
      %v2197 = vmul.f32 %v1979, %v1236
      %v2198 = vmul.f32 %v1983, %v1235
      %v2199 = vmul.f32 %v1983, %v1236
      %v2200 = vmul.f32 %v2056, 1.442695
      %v2201 = vpow.pop %v2200
      %v2202 = vmul.f32 %v2057, 1.442695
      %v2203 = vpow.pop %v2202
      %v2204 = vmul.f32 %v2058, 1.442695
      %v2205 = vpow.pop %v2204
      %v2206 = vmul.f32 %v2059, 1.442695
      %v2207 = vpow.pop %v2206
      %v2208 = vmul.f32 %v2060, 1.442695
      %v2209 = vpow.pop %v2208
      %v2210 = vmul.f32 %v2061, 1.442695
      %v2211 = vpow.pop %v2210
      %v2212 = vmul.f32 %v2062, 1.442695
      %v2213 = vpow.pop %v2212
      %v2214 = vmul.f32 %v2063, 1.442695
      %v2215 = vpow.pop %v2214
      %v2216 = vmul.f32 %v2064, 1.442695
      %v2217 = vpow.pop %v2216
      %v2218 = vmul.f32 %v2065, 1.442695
      %v2219 = vpow.pop %v2218
      %v2220 = vmul.f32 %v2066, 1.442695
      %v2221 = vpow.pop %v2220
      %v2222 = vmul.f32 %v2067, 1.442695
      %v2223 = vpow.pop %v2222
      %v2224 = vmul.f32 %v2068, 1.442695
      %v2225 = vpow.pop %v2224
      %v2226 = vmul.f32 %v2069, 1.442695
      %v2227 = vpow.pop %v2226
      %v2228 = vmul.f32 %v2070, 1.442695
      %v2229 = vpow.pop %v2228
      %v2230 = vmul.f32 %v2071, 1.442695
      %v2231 = vpow.pop %v2230
      %v2232 = vmul.f32 %v2072, 1.442695
      %v2233 = vpow.pop %v2232
      %v2234 = vmul.f32 %v2073, 1.442695
      %v2235 = vpow.pop %v2234
      %v2236 = vmul.f32 %v2074, 1.442695
      %v2237 = vpow.pop %v2236
      %v2238 = vmul.f32 %v2075, 1.442695
      %v2239 = vpow.pop %v2238
      %v2240 = vmul.f32 %v2076, 1.442695
      %v2241 = vpow.pop %v2240
      %v2242 = vmul.f32 %v2077, 1.442695
      %v2243 = vpow.pop %v2242
      %v2244 = vmul.f32 %v2078, 1.442695
      %v2245 = vpow.pop %v2244
      %v2246 = vmul.f32 %v2079, 1.442695
      %v2247 = vpow.pop %v2246
      %v2248 = vmul.f32 %v2080, 1.442695
      %v2249 = vpow.pop %v2248
      %v2250 = vmul.f32 %v2081, 1.442695
      %v2251 = vpow.pop %v2250
      %v2252 = vmul.f32 %v2082, 1.442695
      %v2253 = vpow.pop %v2252
      %v2254 = vmul.f32 %v2083, 1.442695
      %v2255 = vpow.pop %v2254
      %v2256 = vmul.f32 %v2084, 1.442695
      %v2257 = vpow.pop %v2256
      %v2258 = vmul.f32 %v2085, 1.442695
      %v2259 = vpow.pop %v2258
      %v2260 = vmul.f32 %v2086, 1.442695
      %v2261 = vpow.pop %v2260
      %v2262 = vmul.f32 %v2087, 1.442695
      %v2263 = vpow.pop %v2262
      %v2264 = vmul.f32 %v2088, 1.442695
      %v2265 = vpow.pop %v2264
      %v2266 = vmul.f32 %v2089, 1.442695
      %v2267 = vpow.pop %v2266
      %v2268 = vmul.f32 %v2090, 1.442695
      %v2269 = vpow.pop %v2268
      %v2270 = vmul.f32 %v2091, 1.442695
      %v2271 = vpow.pop %v2270
      %v2272 = vmul.f32 %v2092, 1.442695
      %v2273 = vpow.pop %v2272
      %v2274 = vmul.f32 %v2093, 1.442695
      %v2275 = vpow.pop %v2274
      %v2276 = vmul.f32 %v2094, 1.442695
      %v2277 = vpow.pop %v2276
      %v2278 = vmul.f32 %v2095, 1.442695
      %v2279 = vpow.pop %v2278
      %v2280 = vmul.f32 %v2096, 1.442695
      %v2281 = vpow.pop %v2280
      %v2282 = vmul.f32 %v2097, 1.442695
      %v2283 = vpow.pop %v2282
      %v2284 = vmul.f32 %v2098, 1.442695
      %v2285 = vpow.pop %v2284
      %v2286 = vmul.f32 %v2099, 1.442695
      %v2287 = vpow.pop %v2286
      %v2288 = vmul.f32 %v2100, 1.442695
      %v2289 = vpow.pop %v2288
      %v2290 = vmul.f32 %v2101, 1.442695
      %v2291 = vpow.pop %v2290
      %v2292 = vmul.f32 %v2102, 1.442695
      %v2293 = vpow.pop %v2292
      %v2294 = vmul.f32 %v2103, 1.442695
      %v2295 = vpow.pop %v2294
      %v2296 = vmul.f32 %v2104, 1.442695
      %v2297 = vpow.pop %v2296
      %v2298 = vmul.f32 %v2105, 1.442695
      %v2299 = vpow.pop %v2298
      %v2300 = vmul.f32 %v2106, 1.442695
      %v2301 = vpow.pop %v2300
      %v2302 = vmul.f32 %v2107, 1.442695
      %v2303 = vpow.pop %v2302
      %v2304 = vmul.f32 %v2108, 1.442695
      %v2305 = vpow.pop %v2304
      %v2306 = vmul.f32 %v2109, 1.442695
      %v2307 = vpow.pop %v2306
      %v2308 = vmul.f32 %v2110, 1.442695
      %v2309 = vpow.pop %v2308
      %v2310 = vmul.f32 %v2111, 1.442695
      %v2311 = vpow.pop %v2310
      %v2312 = vmul.f32 %v2112, 1.442695
      %v2313 = vpow.pop %v2312
      %v2314 = vmul.f32 %v2113, 1.442695
      %v2315 = vpow.pop %v2314
      %v2316 = vmul.f32 %v2114, 1.442695
      %v2317 = vpow.pop %v2316
      %v2318 = vmul.f32 %v2115, 1.442695
      %v2319 = vpow.pop %v2318
      %v2320 = vmul.f32 %v2116, 1.442695
      %v2321 = vpow.pop %v2320
      %v2322 = vmul.f32 %v2117, 1.442695
      %v2323 = vpow.pop %v2322
      %v2324 = vmul.f32 %v2118, 1.442695
      %v2325 = vpow.pop %v2324
      %v2326 = vmul.f32 %v2119, 1.442695
      %v2327 = vpow.pop %v2326
      %v2328 = vmul.f32 %v2120, 1.442695
      %v2329 = vpow.pop %v2328
      %v2330 = vmul.f32 %v2121, 1.442695
      %v2331 = vpow.pop %v2330
      %v2332 = vmul.f32 %v2122, 1.442695
      %v2333 = vpow.pop %v2332
      %v2334 = vmul.f32 %v2123, 1.442695
      %v2335 = vpow.pop %v2334
      %v2336 = vmul.f32 %v2124, 1.442695
      %v2337 = vpow.pop %v2336
      %v2338 = vmul.f32 %v2125, 1.442695
      %v2339 = vpow.pop %v2338
      %v2340 = vmul.f32 %v2126, 1.442695
      %v2341 = vpow.pop %v2340
      %v2342 = vmul.f32 %v2127, 1.442695
      %v2343 = vpow.pop %v2342
      %v2344 = vmul.f32 %v2128, 1.442695
      %v2345 = vpow.pop %v2344
      %v2346 = vmul.f32 %v2129, 1.442695
      %v2347 = vpow.pop %v2346
      %v2348 = vmul.f32 %v2130, 1.442695
      %v2349 = vpow.pop %v2348
      %v2350 = vmul.f32 %v2131, 1.442695
      %v2351 = vpow.pop %v2350
      %v2352 = vmul.f32 %v2132, 1.442695
      %v2353 = vpow.pop %v2352
      %v2354 = vmul.f32 %v2133, 1.442695
      %v2355 = vpow.pop %v2354
      %v2356 = vmul.f32 %v2134, 1.442695
      %v2357 = vpow.pop %v2356
      %v2358 = vmul.f32 %v2135, 1.442695
      %v2359 = vpow.pop %v2358
      %v2360 = vmul.f32 %v2136, 1.442695
      %v2361 = vpow.pop %v2360
      %v2362 = vmul.f32 %v2137, 1.442695
      %v2363 = vpow.pop %v2362
      %v2364 = vmul.f32 %v2138, 1.442695
      %v2365 = vpow.pop %v2364
      %v2366 = vmul.f32 %v2139, 1.442695
      %v2367 = vpow.pop %v2366
      %v2368 = vmul.f32 %v2140, 1.442695
      %v2369 = vpow.pop %v2368
      %v2370 = vmul.f32 %v2141, 1.442695
      %v2371 = vpow.pop %v2370
      %v2372 = vmul.f32 %v2142, 1.442695
      %v2373 = vpow.pop %v2372
      %v2374 = vmul.f32 %v2143, 1.442695
      %v2375 = vpow.pop %v2374
      %v2376 = vmul.f32 %v2144, 1.442695
      %v2377 = vpow.pop %v2376
      %v2378 = vmul.f32 %v2145, 1.442695
      %v2379 = vpow.pop %v2378
      %v2380 = vmul.f32 %v2146, 1.442695
      %v2381 = vpow.pop %v2380
      %v2382 = vmul.f32 %v2147, 1.442695
      %v2383 = vpow.pop %v2382
      %v2384 = vmul.f32 %v2148, 1.442695
      %v2385 = vpow.pop %v2384
      %v2386 = vmul.f32 %v2149, 1.442695
      %v2387 = vpow.pop %v2386
      %v2388 = vmul.f32 %v2150, 1.442695
      %v2389 = vpow.pop %v2388
      %v2390 = vmul.f32 %v2151, 1.442695
      %v2391 = vpow.pop %v2390
      %v2392 = vmul.f32 %v2152, 1.442695
      %v2393 = vpow.pop %v2392
      %v2394 = vmul.f32 %v2153, 1.442695
      %v2395 = vpow.pop %v2394
      %v2396 = vmul.f32 %v2154, 1.442695
      %v2397 = vpow.pop %v2396
      %v2398 = vmul.f32 %v2155, 1.442695
      %v2399 = vpow.pop %v2398
      %v2400 = vmul.f32 %v2156, 1.442695
      %v2401 = vpow.pop %v2400
      %v2402 = vmul.f32 %v2157, 1.442695
      %v2403 = vpow.pop %v2402
      %v2404 = vmul.f32 %v2158, 1.442695
      %v2405 = vpow.pop %v2404
      %v2406 = vmul.f32 %v2159, 1.442695
      %v2407 = vpow.pop %v2406
      %v2408 = vmul.f32 %v2160, 1.442695
      %v2409 = vpow.pop %v2408
      %v2410 = vmul.f32 %v2161, 1.442695
      %v2411 = vpow.pop %v2410
      %v2412 = vmul.f32 %v2162, 1.442695
      %v2413 = vpow.pop %v2412
      %v2414 = vmul.f32 %v2163, 1.442695
      %v2415 = vpow.pop %v2414
      %v2416 = vmul.f32 %v2164, 1.442695
      %v2417 = vpow.pop %v2416
      %v2418 = vmul.f32 %v2165, 1.442695
      %v2419 = vpow.pop %v2418
      %v2420 = vmul.f32 %v2166, 1.442695
      %v2421 = vpow.pop %v2420
      %v2422 = vmul.f32 %v2167, 1.442695
      %v2423 = vpow.pop %v2422
      %v2424 = vmul.f32 %v2168, 1.442695
      %v2425 = vpow.pop %v2424
      %v2426 = vmul.f32 %v2169, 1.442695
      %v2427 = vpow.pop %v2426
      %v2428 = vmul.f32 %v2170, 1.442695
      %v2429 = vpow.pop %v2428
      %v2430 = vmul.f32 %v2171, 1.442695
      %v2431 = vpow.pop %v2430
      %v2432 = vmul.f32 %v2172, 1.442695
      %v2433 = vpow.pop %v2432
      %v2434 = vmul.f32 %v2173, 1.442695
      %v2435 = vpow.pop %v2434
      %v2436 = vmul.f32 %v2174, 1.442695
      %v2437 = vpow.pop %v2436
      %v2438 = vmul.f32 %v2175, 1.442695
      %v2439 = vpow.pop %v2438
      %v2440 = vmul.f32 %v2176, 1.442695
      %v2441 = vpow.pop %v2440
      %v2442 = vmul.f32 %v2177, 1.442695
      %v2443 = vpow.pop %v2442
      %v2444 = vmul.f32 %v2178, 1.442695
      %v2445 = vpow.pop %v2444
      %v2446 = vmul.f32 %v2179, 1.442695
      %v2447 = vpow.pop %v2446
      %v2448 = vmul.f32 %v2180, 1.442695
      %v2449 = vpow.pop %v2448
      %v2450 = vmul.f32 %v2181, 1.442695
      %v2451 = vpow.pop %v2450
      %v2452 = vmul.f32 %v2182, 1.442695
      %v2453 = vpow.pop %v2452
      %v2454 = vmul.f32 %v2183, 1.442695
      %v2455 = vpow.pop %v2454
      %v2456 = vmul.f32 %v2184, 1.442695
      %v2457 = vpow.pop %v2456
      %v2458 = vmul.f32 %v2185, 1.442695
      %v2459 = vpow.pop %v2458
      %v2460 = vmul.f32 %v2186, 1.442695
      %v2461 = vpow.pop %v2460
      %v2462 = vmul.f32 %v2187, 1.442695
      %v2463 = vpow.pop %v2462
      %v2464 = vmul.f32 %v2188, 1.442695
      %v2465 = vpow.pop %v2464
      %v2466 = vmul.f32 %v2189, 1.442695
      %v2467 = vpow.pop %v2466
      %v2468 = vmul.f32 %v2190, 1.442695
      %v2469 = vpow.pop %v2468
      %v2470 = vmul.f32 %v2191, 1.442695
      %v2471 = vpow.pop %v2470
      %v2472 = vmul.f32 %v2192, 1.442695
      %v2473 = vpow.pop %v2472
      %v2474 = vmul.f32 %v2193, 1.442695
      %v2475 = vpow.pop %v2474
      %v2476 = vmul.f32 %v2194, 1.442695
      %v2477 = vpow.pop %v2476
      %v2478 = vmul.f32 %v2195, 1.442695
      %v2479 = vpow.pop %v2478
      %v2480 = vmul.f32 %v2196, 1.442695
      %v2481 = vpow.pop %v2480
      %v2482 = vmul.f32 %v2197, 1.442695
      %v2483 = vpow.pop %v2482
      %v2484 = vmul.f32 %v2198, 1.442695
      %v2485 = vpow.pop %v2484
      %v2486 = vmul.f32 %v2199, 1.442695
      %v2487 = vpow.pop %v2486
      %2488 = vst.msk [vmem:[#allocation8] sm:$0xff] %vm755, %v2201
      %2489 = vst.msk [vmem:[#allocation8 + $0x8] sm:$0xff] %vm755, %v2203
      %2490 = vst.msk [vmem:[#allocation8 + $0x10] sm:$0xff] %vm755, %v2205
      %2491 = vst.msk [vmem:[#allocation8 + $0x18] sm:$0xff] %vm755, %v2207
      %2492 = vst.msk [vmem:[#allocation8 + $0x20] sm:$0xff] %vm755, %v2209
      %2493 = vst.msk [vmem:[#allocation8 + $0x28] sm:$0xff] %vm755, %v2211
      %2494 = vst.msk [vmem:[#allocation8 + $0x30] sm:$0xff] %vm755, %v2213
      %2495 = vst.msk [vmem:[#allocation8 + $0x38] sm:$0xff] %vm755, %v2215
      %2496 = vst.msk [vmem:[#allocation8 + $0x40] sm:$0xff] %vm755, %v2217
      %2497 = vst.msk [vmem:[#allocation8 + $0x48] sm:$0xff] %vm755, %v2219
      %2498 = vst.msk [vmem:[#allocation8 + $0x50] sm:$0xff] %vm755, %v2221
      %2499 = vst.msk [vmem:[#allocation8 + $0x58] sm:$0xff] %vm755, %v2223
      %2500 = vst.msk [vmem:[#allocation8 + $0x60] sm:$0xff] %vm755, %v2225
      %2501 = vst.msk [vmem:[#allocation8 + $0x68] sm:$0xff] %vm755, %v2227
      %2502 = vst.msk [vmem:[#allocation8 + $0x70] sm:$0xff] %vm755, %v2229
      %2503 = vst.msk [vmem:[#allocation8 + $0x78] sm:$0xff] %vm755, %v2231
      %2504 = vst.msk [vmem:[#allocation8 + $0x80] sm:$0xff] %vm755, %v2233
      %2505 = vst.msk [vmem:[#allocation8 + $0x88] sm:$0xff] %vm755, %v2235
      %2506 = vst.msk [vmem:[#allocation8 + $0x90] sm:$0xff] %vm755, %v2237
      %2507 = vst.msk [vmem:[#allocation8 + $0x98] sm:$0xff] %vm755, %v2239
      %2508 = vst.msk [vmem:[#allocation8 + $0xa0] sm:$0xff] %vm755, %v2241
      %2509 = vst.msk [vmem:[#allocation8 + $0xa8] sm:$0xff] %vm755, %v2243
      %2510 = vst.msk [vmem:[#allocation8 + $0xb0] sm:$0xff] %vm755, %v2245
      %2511 = vst.msk [vmem:[#allocation8 + $0xb8] sm:$0xff] %vm755, %v2247
      %2512 = vst.msk [vmem:[#allocation8 + $0xc0] sm:$0xff] %vm755, %v2249
      %2513 = vst.msk [vmem:[#allocation8 + $0xc8] sm:$0xff] %vm755, %v2251
      %2514 = vst.msk [vmem:[#allocation8 + $0xd0] sm:$0xff] %vm755, %v2253
      %2515 = vst.msk [vmem:[#allocation8 + $0xd8] sm:$0xff] %vm755, %v2255
      %2516 = vst.msk [vmem:[#allocation8 + $0xe0] sm:$0xff] %vm755, %v2257
      %2517 = vst.msk [vmem:[#allocation8 + $0xe8] sm:$0xff] %vm755, %v2259
      %2518 = vst.msk [vmem:[#allocation8 + $0xf0] sm:$0xff] %vm755, %v2261
      %2519 = vst.msk [vmem:[#allocation8 + $0xf8] sm:$0xff] %vm755, %v2263
      %2520 = vst.msk [vmem:[#allocation8 + $0x100] sm:$0xff] %vm755, %v2265
      %2521 = vst.msk [vmem:[#allocation8 + $0x108] sm:$0xff] %vm755, %v2267
      %2522 = vst.msk [vmem:[#allocation8 + $0x110] sm:$0xff] %vm755, %v2269
      %2523 = vst.msk [vmem:[#allocation8 + $0x118] sm:$0xff] %vm755, %v2271
      %2524 = vst.msk [vmem:[#allocation8 + $0x120] sm:$0xff] %vm755, %v2273
      %2525 = vst.msk [vmem:[#allocation8 + $0x128] sm:$0xff] %vm755, %v2275
      %2526 = vst.msk [vmem:[#allocation8 + $0x130] sm:$0xff] %vm755, %v2277
      %2527 = vst.msk [vmem:[#allocation8 + $0x138] sm:$0xff] %vm755, %v2279
      %2528 = vst.msk [vmem:[#allocation8 + $0x140] sm:$0xff] %vm755, %v2281
      %2529 = vst.msk [vmem:[#allocation8 + $0x148] sm:$0xff] %vm755, %v2283
      %2530 = vst.msk [vmem:[#allocation8 + $0x150] sm:$0xff] %vm755, %v2285
      %2531 = vst.msk [vmem:[#allocation8 + $0x158] sm:$0xff] %vm755, %v2287
      %2532 = vst.msk [vmem:[#allocation8 + $0x160] sm:$0xff] %vm755, %v2289
      %2533 = vst.msk [vmem:[#allocation8 + $0x168] sm:$0xff] %vm755, %v2291
      %2534 = vst.msk [vmem:[#allocation8 + $0x170] sm:$0xff] %vm755, %v2293
      %2535 = vst.msk [vmem:[#allocation8 + $0x178] sm:$0xff] %vm755, %v2295
      %2536 = vst.msk [vmem:[#allocation8 + $0x180] sm:$0xff] %vm755, %v2297
      %2537 = vst.msk [vmem:[#allocation8 + $0x188] sm:$0xff] %vm755, %v2299
      %2538 = vst.msk [vmem:[#allocation8 + $0x190] sm:$0xff] %vm755, %v2301
      %2539 = vst.msk [vmem:[#allocation8 + $0x198] sm:$0xff] %vm755, %v2303
      %2540 = vst.msk [vmem:[#allocation8 + $0x1a0] sm:$0xff] %vm755, %v2305
      %2541 = vst.msk [vmem:[#allocation8 + $0x1a8] sm:$0xff] %vm755, %v2307
      %2542 = vst.msk [vmem:[#allocation8 + $0x1b0] sm:$0xff] %vm755, %v2309
      %2543 = vst.msk [vmem:[#allocation8 + $0x1b8] sm:$0xff] %vm755, %v2311
      %2544 = vst.msk [vmem:[#allocation8 + $0x1c0] sm:$0xff] %vm755, %v2313
      %2545 = vst.msk [vmem:[#allocation8 + $0x1c8] sm:$0xff] %vm755, %v2315
      %2546 = vst.msk [vmem:[#allocation8 + $0x1d0] sm:$0xff] %vm755, %v2317
      %2547 = vst.msk [vmem:[#allocation8 + $0x1d8] sm:$0xff] %vm755, %v2319
      %2548 = vst.msk [vmem:[#allocation8 + $0x1e0] sm:$0xff] %vm755, %v2321
      %2549 = vst.msk [vmem:[#allocation8 + $0x1e8] sm:$0xff] %vm755, %v2323
      %2550 = vst.msk [vmem:[#allocation8 + $0x1f0] sm:$0xff] %vm755, %v2325
      %2551 = vst.msk [vmem:[#allocation8 + $0x1f8] sm:$0xff] %vm755, %v2327
      %2552 = vst.msk [vmem:[#allocation8 + $0x200] sm:$0xff] %vm755, %v2329
      %2553 = vst.msk [vmem:[#allocation8 + $0x208] sm:$0xff] %vm755, %v2331
      %2554 = vst.msk [vmem:[#allocation8 + $0x210] sm:$0xff] %vm755, %v2333
      %2555 = vst.msk [vmem:[#allocation8 + $0x218] sm:$0xff] %vm755, %v2335
      %2556 = vst.msk [vmem:[#allocation8 + $0x220] sm:$0xff] %vm755, %v2337
      %2557 = vst.msk [vmem:[#allocation8 + $0x228] sm:$0xff] %vm755, %v2339
      %2558 = vst.msk [vmem:[#allocation8 + $0x230] sm:$0xff] %vm755, %v2341
      %2559 = vst.msk [vmem:[#allocation8 + $0x238] sm:$0xff] %vm755, %v2343
      %2560 = vst.msk [vmem:[#allocation8 + $0x240] sm:$0xff] %vm755, %v2345
      %2561 = vst.msk [vmem:[#allocation8 + $0x248] sm:$0xff] %vm755, %v2347
      %2562 = vst.msk [vmem:[#allocation8 + $0x250] sm:$0xff] %vm755, %v2349
      %2563 = vst.msk [vmem:[#allocation8 + $0x258] sm:$0xff] %vm755, %v2351
      %2564 = vst.msk [vmem:[#allocation8 + $0x260] sm:$0xff] %vm755, %v2353
      %2565 = vst.msk [vmem:[#allocation8 + $0x268] sm:$0xff] %vm755, %v2355
      %2566 = vst.msk [vmem:[#allocation8 + $0x270] sm:$0xff] %vm755, %v2357
      %2567 = vst.msk [vmem:[#allocation8 + $0x278] sm:$0xff] %vm755, %v2359
      %2568 = vst.msk [vmem:[#allocation8 + $0x280] sm:$0xff] %vm755, %v2361
      %2569 = vst.msk [vmem:[#allocation8 + $0x288] sm:$0xff] %vm755, %v2363
      %2570 = vst.msk [vmem:[#allocation8 + $0x290] sm:$0xff] %vm755, %v2365
      %2571 = vst.msk [vmem:[#allocation8 + $0x298] sm:$0xff] %vm755, %v2367
      %2572 = vst.msk [vmem:[#allocation8 + $0x2a0] sm:$0xff] %vm755, %v2369
      %2573 = vst.msk [vmem:[#allocation8 + $0x2a8] sm:$0xff] %vm755, %v2371
      %2574 = vst.msk [vmem:[#allocation8 + $0x2b0] sm:$0xff] %vm755, %v2373
      %2575 = vst.msk [vmem:[#allocation8 + $0x2b8] sm:$0xff] %vm755, %v2375
      %2576 = vst.msk [vmem:[#allocation8 + $0x2c0] sm:$0xff] %vm755, %v2377
      %2577 = vst.msk [vmem:[#allocation8 + $0x2c8] sm:$0xff] %vm755, %v2379
      %2578 = vst.msk [vmem:[#allocation8 + $0x2d0] sm:$0xff] %vm755, %v2381
      %2579 = vst.msk [vmem:[#allocation8 + $0x2d8] sm:$0xff] %vm755, %v2383
      %2580 = vst.msk [vmem:[#allocation8 + $0x2e0] sm:$0xff] %vm755, %v2385
      %2581 = vst.msk [vmem:[#allocation8 + $0x2e8] sm:$0xff] %vm755, %v2387
      %2582 = vst.msk [vmem:[#allocation8 + $0x2f0] sm:$0xff] %vm755, %v2389
      %2583 = vst.msk [vmem:[#allocation8 + $0x2f8] sm:$0xff] %vm755, %v2391
      %2584 = vst.msk [vmem:[#allocation8 + $0x300] sm:$0xff] %vm755, %v2393
      %2585 = vst.msk [vmem:[#allocation8 + $0x308] sm:$0xff] %vm755, %v2395
      %2586 = vst.msk [vmem:[#allocation8 + $0x310] sm:$0xff] %vm755, %v2397
      %2587 = vst.msk [vmem:[#allocation8 + $0x318] sm:$0xff] %vm755, %v2399
      %2588 = vst.msk [vmem:[#allocation8 + $0x320] sm:$0xff] %vm755, %v2401
      %2589 = vst.msk [vmem:[#allocation8 + $0x328] sm:$0xff] %vm755, %v2403
      %2590 = vst.msk [vmem:[#allocation8 + $0x330] sm:$0xff] %vm755, %v2405
      %2591 = vst.msk [vmem:[#allocation8 + $0x338] sm:$0xff] %vm755, %v2407
      %2592 = vst.msk [vmem:[#allocation8 + $0x340] sm:$0xff] %vm755, %v2409
      %2593 = vst.msk [vmem:[#allocation8 + $0x348] sm:$0xff] %vm755, %v2411
      %2594 = vst.msk [vmem:[#allocation8 + $0x350] sm:$0xff] %vm755, %v2413
      %2595 = vst.msk [vmem:[#allocation8 + $0x358] sm:$0xff] %vm755, %v2415
      %2596 = vst.msk [vmem:[#allocation8 + $0x360] sm:$0xff] %vm755, %v2417
      %2597 = vst.msk [vmem:[#allocation8 + $0x368] sm:$0xff] %vm755, %v2419
      %2598 = vst.msk [vmem:[#allocation8 + $0x370] sm:$0xff] %vm755, %v2421
      %2599 = vst.msk [vmem:[#allocation8 + $0x378] sm:$0xff] %vm755, %v2423
      %2600 = vst.msk [vmem:[#allocation8 + $0x380] sm:$0xff] %vm755, %v2425
      %2601 = vst.msk [vmem:[#allocation8 + $0x388] sm:$0xff] %vm755, %v2427
      %2602 = vst.msk [vmem:[#allocation8 + $0x390] sm:$0xff] %vm755, %v2429
      %2603 = vst.msk [vmem:[#allocation8 + $0x398] sm:$0xff] %vm755, %v2431
      %2604 = vst.msk [vmem:[#allocation8 + $0x3a0] sm:$0xff] %vm755, %v2433
      %2605 = vst.msk [vmem:[#allocation8 + $0x3a8] sm:$0xff] %vm755, %v2435
      %2606 = vst.msk [vmem:[#allocation8 + $0x3b0] sm:$0xff] %vm755, %v2437
      %2607 = vst.msk [vmem:[#allocation8 + $0x3b8] sm:$0xff] %vm755, %v2439
      %2608 = vst.msk [vmem:[#allocation8 + $0x3c0] sm:$0xff] %vm755, %v2441
      %2609 = vst.msk [vmem:[#allocation8 + $0x3c8] sm:$0xff] %vm755, %v2443
      %2610 = vst.msk [vmem:[#allocation8 + $0x3d0] sm:$0xff] %vm755, %v2445
      %2611 = vst.msk [vmem:[#allocation8 + $0x3d8] sm:$0xff] %vm755, %v2447
      %2612 = vst.msk [vmem:[#allocation8 + $0x3e0] sm:$0xff] %vm755, %v2449
      %2613 = vst.msk [vmem:[#allocation8 + $0x3e8] sm:$0xff] %vm755, %v2451
      %2614 = vst.msk [vmem:[#allocation8 + $0x3f0] sm:$0xff] %vm755, %v2453
      %2615 = vst.msk [vmem:[#allocation8 + $0x3f8] sm:$0xff] %vm755, %v2455
      %2616 = vst.msk [vmem:[#allocation8 + $0x400] sm:$0xff] %vm755, %v2457
      %2617 = vst.msk [vmem:[#allocation8 + $0x408] sm:$0xff] %vm755, %v2459
      %2618 = vst.msk [vmem:[#allocation8 + $0x410] sm:$0xff] %vm755, %v2461
      %2619 = vst.msk [vmem:[#allocation8 + $0x418] sm:$0xff] %vm755, %v2463
      %2620 = vst.msk [vmem:[#allocation8 + $0x420] sm:$0xff] %vm755, %v2465
      %2621 = vst.msk [vmem:[#allocation8 + $0x428] sm:$0xff] %vm755, %v2467
      %2622 = vst.msk [vmem:[#allocation8 + $0x430] sm:$0xff] %vm755, %v2469
      %2623 = vst.msk [vmem:[#allocation8 + $0x438] sm:$0xff] %vm755, %v2471
      %2624 = vst.msk [vmem:[#allocation8 + $0x440] sm:$0xff] %vm755, %v2473
      %2625 = vst.msk [vmem:[#allocation8 + $0x448] sm:$0xff] %vm755, %v2475
      %2626 = vst.msk [vmem:[#allocation8 + $0x450] sm:$0xff] %vm755, %v2477
      %2627 = vst.msk [vmem:[#allocation8 + $0x458] sm:$0xff] %vm755, %v2479
      %2628 = vst.msk [vmem:[#allocation8 + $0x460] sm:$0xff] %vm755, %v2481
      %2629 = vst.msk [vmem:[#allocation8 + $0x468] sm:$0xff] %vm755, %v2483
      %2630 = vst.msk [vmem:[#allocation8 + $0x470] sm:$0xff] %vm755, %v2485
      %2631 = vst.msk [vmem:[#allocation8 + $0x478] sm:$0xff] %vm755, %v2487
      loop: start=0, step=1, limit=9
      $region65: #{block_1d_forward.1} parent=63 // loop_pre_header
        _
      $region66: #{block_1d_forward.1} parent=63 // loop_header
        %s2633 = sphi 0, %s2637
        %p2634 = scmp.ge.s32.totalorder %s2633, 9
        %v2638 = vphi 0.0, %v2891
        %v2639 = vphi 0.0, %v2892
        %v2640 = vphi 0.0, %v2893
        %v2641 = vphi 0.0, %v2894
        %v2642 = vphi 0.0, %v2895
        %v2643 = vphi 0.0, %v2896
        %v2644 = vphi 0.0, %v2897
        %v2645 = vphi 0.0, %v2898
        %v2646 = vphi 0.0, %v2899
        %v2647 = vphi 0.0, %v2900
        %v2648 = vphi 0.0, %v2901
        %v2649 = vphi 0.0, %v2902
        %v2650 = vphi 0.0, %v2903
        %v2651 = vphi 0.0, %v2904
        %v2652 = vphi 0.0, %v2905
        %v2653 = vphi 0.0, %v2906
      $region67: #{block_1d_forward.1} parent=63 // loop_header_branch
        %2636 = sbr.rel (%p2634) target = $region71
      $region68: #{block_1d_forward.1} parent=63 // loop_body
        %s2654 = smul.u32 %s2633, 8
        %s2655 = sadd.s32 0, %s2654
        %s2656 = smul.u32 %s2654, 16
        %s2657 = scalar_lea.vmem [#allocation8], %s2656
        %v2658 = vld [vmem:[%s2657] sm:$0xff]
        %v2659 = vld [vmem:[%s2657 + $0x8] sm:$0xff]
        %v2660 = vld [vmem:[%s2657 + $0x10] sm:$0xff]
        %v2661 = vld [vmem:[%s2657 + $0x18] sm:$0xff]
        %v2662 = vld [vmem:[%s2657 + $0x20] sm:$0xff]
        %v2663 = vld [vmem:[%s2657 + $0x28] sm:$0xff]
        %v2664 = vld [vmem:[%s2657 + $0x30] sm:$0xff]
        %v2665 = vld [vmem:[%s2657 + $0x38] sm:$0xff]
        %v2666 = vld [vmem:[%s2657 + $0x40] sm:$0xff]
        %v2667 = vld [vmem:[%s2657 + $0x48] sm:$0xff]
        %v2668 = vld [vmem:[%s2657 + $0x50] sm:$0xff]
        %v2669 = vld [vmem:[%s2657 + $0x58] sm:$0xff]
        %v2670 = vld [vmem:[%s2657 + $0x60] sm:$0xff]
        %v2671 = vld [vmem:[%s2657 + $0x68] sm:$0xff]
        %v2672 = vld [vmem:[%s2657 + $0x70] sm:$0xff]
        %v2673 = vld [vmem:[%s2657 + $0x78] sm:$0xff]
        %s2674 = scalar_lea.vmem [#allocation2], %s2655
        %v2675 = vld [vmem:[%s2674] sm:$0xff]
        %s2676 = scalar_lea.vmem [#allocation3], %s2655
        %v2677 = vld [vmem:[%s2676] sm:$0xff]
        %s2678 = scalar_lea.vmem [#allocation5], %s2655
        %v2679 = vld [vmem:[%s2678] sm:$0xff]
        %v2680 = vmul.f32 %v2675, %v2677
        %v2681 = vmul.f32 %v2658, %v2638
        %v2682 = vmul.f32 %v2659, %v2639
        %v2683 = vmul.f32 %v2660, %v2640
        %v2684 = vmul.f32 %v2661, %v2641
        %v2685 = vmul.f32 %v2662, %v2642
        %v2686 = vmul.f32 %v2663, %v2643
        %v2687 = vmul.f32 %v2664, %v2644
        %v2688 = vmul.f32 %v2665, %v2645
        %v2689 = vmul.f32 %v2666, %v2646
        %v2690 = vmul.f32 %v2667, %v2647
        %v2691 = vmul.f32 %v2668, %v2648
        %v2692 = vmul.f32 %v2669, %v2649
        %v2693 = vmul.f32 %v2670, %v2650
        %v2694 = vmul.f32 %v2671, %v2651
        %v2695 = vmul.f32 %v2672, %v2652
        %v2696 = vmul.f32 %v2673, %v2653
        %v2697 = vlaneseq
        %v2698 = vshrl.u32 %v2697, 7
        %v2699 = vsub.s32 0, %v2698
        %v2700 = vrot.slane %v2679, %v2699
        %2702 = vbcast.lane.b32.xlu0 %v2700, 256
        %v2703 = vpop.permute.xlu0 %2702
        %s2705 = sor.u32 256, 8
        %2706 = vbcast.lane.b32.xlu0 %v2700, %s2705
        %v2707 = vpop.permute.xlu0 %2706
        %v2708 = vlaneseq
        %v2709 = vshrl.u32 %v2708, 7
        %v2710 = vsub.s32 1, %v2709
        %v2711 = vrot.slane %v2679, %v2710
        %2713 = vbcast.lane.b32.xlu0 %v2711, 256
        %v2714 = vpop.permute.xlu0 %2713
        %s2716 = sor.u32 256, 8
        %2717 = vbcast.lane.b32.xlu0 %v2711, %s2716
        %v2718 = vpop.permute.xlu0 %2717
        %v2719 = vlaneseq
        %v2720 = vshrl.u32 %v2719, 7
        %v2721 = vsub.s32 2, %v2720
        %v2722 = vrot.slane %v2679, %v2721
        %2724 = vbcast.lane.b32.xlu0 %v2722, 256
        %v2725 = vpop.permute.xlu0 %2724
        %s2727 = sor.u32 256, 8
        %2728 = vbcast.lane.b32.xlu0 %v2722, %s2727
        %v2729 = vpop.permute.xlu0 %2728
        %v2730 = vlaneseq
        %v2731 = vshrl.u32 %v2730, 7
        %v2732 = vsub.s32 3, %v2731
        %v2733 = vrot.slane %v2679, %v2732
        %2735 = vbcast.lane.b32.xlu0 %v2733, 256
        %v2736 = vpop.permute.xlu0 %2735
        %s2738 = sor.u32 256, 8
        %2739 = vbcast.lane.b32.xlu0 %v2733, %s2738
        %v2740 = vpop.permute.xlu0 %2739
        %v2741 = vlaneseq
        %v2742 = vshrl.u32 %v2741, 7
        %v2743 = vsub.s32 4, %v2742
        %v2744 = vrot.slane %v2679, %v2743
        %2746 = vbcast.lane.b32.xlu0 %v2744, 256
        %v2747 = vpop.permute.xlu0 %2746
        %s2749 = sor.u32 256, 8
        %2750 = vbcast.lane.b32.xlu0 %v2744, %s2749
        %v2751 = vpop.permute.xlu0 %2750
        %v2752 = vlaneseq
        %v2753 = vshrl.u32 %v2752, 7
        %v2754 = vsub.s32 5, %v2753
        %v2755 = vrot.slane %v2679, %v2754
        %2757 = vbcast.lane.b32.xlu0 %v2755, 256
        %v2758 = vpop.permute.xlu0 %2757
        %s2760 = sor.u32 256, 8
        %2761 = vbcast.lane.b32.xlu0 %v2755, %s2760
        %v2762 = vpop.permute.xlu0 %2761
        %v2763 = vlaneseq
        %v2764 = vshrl.u32 %v2763, 7
        %v2765 = vsub.s32 6, %v2764
        %v2766 = vrot.slane %v2679, %v2765
        %2768 = vbcast.lane.b32.xlu0 %v2766, 256
        %v2769 = vpop.permute.xlu0 %2768
        %s2771 = sor.u32 256, 8
        %2772 = vbcast.lane.b32.xlu0 %v2766, %s2771
        %v2773 = vpop.permute.xlu0 %2772
        %v2774 = vlaneseq
        %v2775 = vshrl.u32 %v2774, 7
        %v2776 = vsub.s32 7, %v2775
        %v2777 = vrot.slane %v2679, %v2776
        %2779 = vbcast.lane.b32.xlu0 %v2777, 256
        %v2780 = vpop.permute.xlu0 %2779
        %s2782 = sor.u32 256, 8
        %2783 = vbcast.lane.b32.xlu0 %v2777, %s2782
        %v2784 = vpop.permute.xlu0 %2783
        %v2786 = vcombine.high %v2680, %v2680
        %v2788 = vunpack.c.l.s4 1966171168
        %v2789 = vunpack.c.0.s8 %v2788
        %v2790 = vlaneseq
        %v2791 = vshrl.u32 %v2790, 7
        %v2792 = vsub.s32 %v2789, %v2791
        %v2793 = vrot.slane %v2680, %v2792
        %v2795 = vunpack.c.l.s4 1966171168
        %v2796 = vunpack.c.0.s8 %v2795
        %v2797 = vlaneseq
        %v2798 = vshrl.u32 %v2797, 7
        %v2799 = vsub.s32 %v2796, %v2798
        %v2800 = vrot.slane %v2786, %v2799
        %v2801 = vcombine.high %v2793, %v2793
        %v2802 = vcombine.high %v2800, %v2800
        %v2804 = vunpack.c.l.s4 1966171168
        %v2805 = vunpack.c.0.s8 %v2804
        %v2806 = vlaneseq
        %v2807 = vshrl.u32 %v2806, 7
        %v2808 = vsub.s32 %v2805, %v2807
        %v2809 = vrot.slane %v2793, %v2808
        %v2811 = vunpack.c.l.s4 1966171168
        %v2812 = vunpack.c.0.s8 %v2811
        %v2813 = vlaneseq
        %v2814 = vshrl.u32 %v2813, 7
        %v2815 = vsub.s32 %v2812, %v2814
        %v2816 = vrot.slane %v2800, %v2815
        %v2818 = vunpack.c.l.s4 1966171168
        %v2819 = vunpack.c.0.s8 %v2818
        %v2820 = vlaneseq
        %v2821 = vshrl.u32 %v2820, 7
        %v2822 = vsub.s32 %v2819, %v2821
        %v2823 = vrot.slane %v2801, %v2822
        %v2825 = vunpack.c.l.s4 1966171168
        %v2826 = vunpack.c.0.s8 %v2825
        %v2827 = vlaneseq
        %v2828 = vshrl.u32 %v2827, 7
        %v2829 = vsub.s32 %v2826, %v2828
        %v2830 = vrot.slane %v2802, %v2829
        %v2831 = vcombine.high %v2809, %v2809
        %v2832 = vcombine.high %v2816, %v2816
        %v2833 = vcombine.high %v2823, %v2823
        %v2834 = vcombine.high %v2830, %v2830
        %v2835 = vlaneseq
        %v2836 = vshrl.u32 %v2835, 7
        %v2837 = vsub.s32 0, %v2836
        %v2838 = vrot.slane %v2809, %v2837
        %v2839 = vlaneseq
        %v2840 = vshrl.u32 %v2839, 7
        %v2841 = vsub.s32 0, %v2840
        %v2842 = vrot.slane %v2823, %v2841
        %v2843 = vlaneseq
        %v2844 = vshrl.u32 %v2843, 7
        %v2845 = vsub.s32 0, %v2844
        %v2846 = vrot.slane %v2831, %v2845
        %v2847 = vlaneseq
        %v2848 = vshrl.u32 %v2847, 7
        %v2849 = vsub.s32 0, %v2848
        %v2850 = vrot.slane %v2833, %v2849
        %v2851 = vlaneseq
        %v2852 = vshrl.u32 %v2851, 7
        %v2853 = vsub.s32 0, %v2852
        %v2854 = vrot.slane %v2816, %v2853
        %v2855 = vlaneseq
        %v2856 = vshrl.u32 %v2855, 7
        %v2857 = vsub.s32 0, %v2856
        %v2858 = vrot.slane %v2830, %v2857
        %v2859 = vlaneseq
        %v2860 = vshrl.u32 %v2859, 7
        %v2861 = vsub.s32 0, %v2860
        %v2862 = vrot.slane %v2832, %v2861
        %v2863 = vlaneseq
        %v2864 = vshrl.u32 %v2863, 7
        %v2865 = vsub.s32 0, %v2864
        %v2866 = vrot.slane %v2834, %v2865
        %v2875 = vmul.f32 %v2703, %v2838
        %v2876 = vmul.f32 %v2707, %v2838
        %v2877 = vmul.f32 %v2714, %v2842
        %v2878 = vmul.f32 %v2718, %v2842
        %v2879 = vmul.f32 %v2725, %v2846
        %v2880 = vmul.f32 %v2729, %v2846
        %v2881 = vmul.f32 %v2736, %v2850
        %v2882 = vmul.f32 %v2740, %v2850
        %v2883 = vmul.f32 %v2747, %v2854
        %v2884 = vmul.f32 %v2751, %v2854
        %v2885 = vmul.f32 %v2758, %v2858
        %v2886 = vmul.f32 %v2762, %v2858
        %v2887 = vmul.f32 %v2769, %v2862
        %v2888 = vmul.f32 %v2773, %v2862
        %v2889 = vmul.f32 %v2780, %v2866
        %v2890 = vmul.f32 %v2784, %v2866
        %v2891 = vadd.f32 %v2681, %v2875
        %v2892 = vadd.f32 %v2682, %v2876
        %v2893 = vadd.f32 %v2683, %v2877
        %v2894 = vadd.f32 %v2684, %v2878
        %v2895 = vadd.f32 %v2685, %v2879
        %v2896 = vadd.f32 %v2686, %v2880
        %v2897 = vadd.f32 %v2687, %v2881
        %v2898 = vadd.f32 %v2688, %v2882
        %v2899 = vadd.f32 %v2689, %v2883
        %v2900 = vadd.f32 %v2690, %v2884
        %v2901 = vadd.f32 %v2691, %v2885
        %v2902 = vadd.f32 %v2692, %v2886
        %v2903 = vadd.f32 %v2693, %v2887
        %v2904 = vadd.f32 %v2694, %v2888
        %v2905 = vadd.f32 %v2695, %v2889
        %v2906 = vadd.f32 %v2696, %v2890
        %s2908 = sor.u32 256, 16
        %2909 = vbcast.lane.b32.xlu0 %v2700, %s2908
        %v2910 = vpop.permute.xlu0 %2909
        %s2912 = sor.u32 256, 24
        %2913 = vbcast.lane.b32.xlu0 %v2700, %s2912
        %v2914 = vpop.permute.xlu0 %2913
        %s2916 = sor.u32 256, 16
        %2917 = vbcast.lane.b32.xlu0 %v2711, %s2916
        %v2918 = vpop.permute.xlu0 %2917
        %s2920 = sor.u32 256, 24
        %2921 = vbcast.lane.b32.xlu0 %v2711, %s2920
        %v2922 = vpop.permute.xlu0 %2921
        %s2924 = sor.u32 256, 16
        %2925 = vbcast.lane.b32.xlu0 %v2722, %s2924
        %v2926 = vpop.permute.xlu0 %2925
        %s2928 = sor.u32 256, 24
        %2929 = vbcast.lane.b32.xlu0 %v2722, %s2928
        %v2930 = vpop.permute.xlu0 %2929
        %s2932 = sor.u32 256, 16
        %2933 = vbcast.lane.b32.xlu0 %v2733, %s2932
        %v2934 = vpop.permute.xlu0 %2933
        %s2936 = sor.u32 256, 24
        %2937 = vbcast.lane.b32.xlu0 %v2733, %s2936
        %v2938 = vpop.permute.xlu0 %2937
        %s2940 = sor.u32 256, 16
        %2941 = vbcast.lane.b32.xlu0 %v2744, %s2940
        %v2942 = vpop.permute.xlu0 %2941
        %s2944 = sor.u32 256, 24
        %2945 = vbcast.lane.b32.xlu0 %v2744, %s2944
        %v2946 = vpop.permute.xlu0 %2945
        %s2948 = sor.u32 256, 16
        %2949 = vbcast.lane.b32.xlu0 %v2755, %s2948
        %v2950 = vpop.permute.xlu0 %2949
        %s2952 = sor.u32 256, 24
        %2953 = vbcast.lane.b32.xlu0 %v2755, %s2952
        %v2954 = vpop.permute.xlu0 %2953
        %s2956 = sor.u32 256, 16
        %2957 = vbcast.lane.b32.xlu0 %v2766, %s2956
        %v2958 = vpop.permute.xlu0 %2957
        %s2960 = sor.u32 256, 24
        %2961 = vbcast.lane.b32.xlu0 %v2766, %s2960
        %v2962 = vpop.permute.xlu0 %2961
        %s2964 = sor.u32 256, 16
        %2965 = vbcast.lane.b32.xlu0 %v2777, %s2964
        %v2966 = vpop.permute.xlu0 %2965
        %s2968 = sor.u32 256, 24
        %2969 = vbcast.lane.b32.xlu0 %v2777, %s2968
        %v2970 = vpop.permute.xlu0 %2969
        %v2971 = vmul.f32 %v2910, %v2891
        %v2972 = vmul.f32 %v2914, %v2892
        %v2973 = vmul.f32 %v2918, %v2893
        %v2974 = vmul.f32 %v2922, %v2894
        %v2975 = vmul.f32 %v2926, %v2895
        %v2976 = vmul.f32 %v2930, %v2896
        %v2977 = vmul.f32 %v2934, %v2897
        %v2978 = vmul.f32 %v2938, %v2898
        %v2979 = vmul.f32 %v2942, %v2899
        %v2980 = vmul.f32 %v2946, %v2900
        %v2981 = vmul.f32 %v2950, %v2901
        %v2982 = vmul.f32 %v2954, %v2902
        %v2983 = vmul.f32 %v2958, %v2903
        %v2984 = vmul.f32 %v2962, %v2904
        %v2985 = vmul.f32 %v2966, %v2905
        %v2986 = vmul.f32 %v2970, %v2906
        %v2987 = vsel %vm755, %v2971, 0.0
        %v2988 = vsel %vm755, %v2972, 0.0
        %v2989 = vadd.f32 %v2987, %v2988
        %v2990 = vrot.slane %v2989, 4
        %v2991 = vadd.f32 %v2989, %v2990
        %v2992 = vrot.slane %v2991, 2
        %v2993 = vadd.f32 %v2991, %v2992
        %v2994 = vrot.slane %v2993, 1
        %v2995 = vadd.f32 %v2993, %v2994
        %v2996 = vsel %vm755, %v2973, 0.0
        %v2997 = vsel %vm755, %v2974, 0.0
        %v2998 = vadd.f32 %v2996, %v2997
        %v2999 = vrot.slane %v2998, 4
        %v3000 = vadd.f32 %v2998, %v2999
        %v3001 = vrot.slane %v3000, 2
        %v3002 = vadd.f32 %v3000, %v3001
        %v3003 = vrot.slane %v3002, 1
        %v3004 = vadd.f32 %v3002, %v3003
        %v3005 = vsel %vm755, %v2975, 0.0
        %v3006 = vsel %vm755, %v2976, 0.0
        %v3007 = vadd.f32 %v3005, %v3006
        %v3008 = vrot.slane %v3007, 4
        %v3009 = vadd.f32 %v3007, %v3008
        %v3010 = vrot.slane %v3009, 2
        %v3011 = vadd.f32 %v3009, %v3010
        %v3012 = vrot.slane %v3011, 1
        %v3013 = vadd.f32 %v3011, %v3012
        %v3014 = vsel %vm755, %v2977, 0.0
        %v3015 = vsel %vm755, %v2978, 0.0
        %v3016 = vadd.f32 %v3014, %v3015
        %v3017 = vrot.slane %v3016, 4
        %v3018 = vadd.f32 %v3016, %v3017
        %v3019 = vrot.slane %v3018, 2
        %v3020 = vadd.f32 %v3018, %v3019
        %v3021 = vrot.slane %v3020, 1
        %v3022 = vadd.f32 %v3020, %v3021
        %v3023 = vsel %vm755, %v2979, 0.0
        %v3024 = vsel %vm755, %v2980, 0.0
        %v3025 = vadd.f32 %v3023, %v3024
        %v3026 = vrot.slane %v3025, 4
        %v3027 = vadd.f32 %v3025, %v3026
        %v3028 = vrot.slane %v3027, 2
        %v3029 = vadd.f32 %v3027, %v3028
        %v3030 = vrot.slane %v3029, 1
        %v3031 = vadd.f32 %v3029, %v3030
        %v3032 = vsel %vm755, %v2981, 0.0
        %v3033 = vsel %vm755, %v2982, 0.0
        %v3034 = vadd.f32 %v3032, %v3033
        %v3035 = vrot.slane %v3034, 4
        %v3036 = vadd.f32 %v3034, %v3035
        %v3037 = vrot.slane %v3036, 2
        %v3038 = vadd.f32 %v3036, %v3037
        %v3039 = vrot.slane %v3038, 1
        %v3040 = vadd.f32 %v3038, %v3039
        %v3041 = vsel %vm755, %v2983, 0.0
        %v3042 = vsel %vm755, %v2984, 0.0
        %v3043 = vadd.f32 %v3041, %v3042
        %v3044 = vrot.slane %v3043, 4
        %v3045 = vadd.f32 %v3043, %v3044
        %v3046 = vrot.slane %v3045, 2
        %v3047 = vadd.f32 %v3045, %v3046
        %v3048 = vrot.slane %v3047, 1
        %v3049 = vadd.f32 %v3047, %v3048
        %v3050 = vsel %vm755, %v2985, 0.0
        %v3051 = vsel %vm755, %v2986, 0.0
        %v3052 = vadd.f32 %v3050, %v3051
        %v3053 = vrot.slane %v3052, 4
        %v3054 = vadd.f32 %v3052, %v3053
        %v3055 = vrot.slane %v3054, 2
        %v3056 = vadd.f32 %v3054, %v3055
        %v3057 = vrot.slane %v3056, 1
        %v3058 = vadd.f32 %v3056, %v3057
        %vm3067 = vcmask 1041409
        %v3068 = vsel %vm3067, %v3004, %v2995
        %vm3069 = vcmask 1042434
        %v3070 = vsel %vm3069, %v3013, %v3068
        %vm3071 = vcmask 1043459
        %v3072 = vsel %vm3071, %v3022, %v3070
        %vm3073 = vcmask 1044484
        %v3074 = vsel %vm3073, %v3031, %v3072
        %vm3075 = vcmask 1045509
        %v3076 = vsel %vm3075, %v3040, %v3074
        %vm3077 = vcmask 1046534
        %v3078 = vsel %vm3077, %v3049, %v3076
        %vm3079 = vcmask 1047559
        %v3080 = vsel %vm3079, %v3058, %v3078
        %s3082 = scalar_lea.vmem [#allocation6], %s2655
        %3083 = vst.msk [vmem:[%s3082] sm:$0xff] %vm755, %v3080
      $region69: #{block_1d_forward.1} parent=63 // loop_footer
        %s2637 = sadd.s32 1, %s2633
      $region70: #{block_1d_forward.1} parent=63 // loop_footer_branch
        %2632 = sbr.rel target = $region66
      $region71: #{block_1d_forward.1} parent=63 // loop_exit
        _
      %v3084 = vld [vmem:[#allocation6] sm:$0xff]
      %v3085 = vld [vmem:[#allocation6 + $0x8] sm:$0xff]
      %v3086 = vld [vmem:[#allocation6 + $0x10] sm:$0xff]
      %v3087 = vld [vmem:[#allocation6 + $0x18] sm:$0xff]
      %v3088 = vld [vmem:[#allocation6 + $0x20] sm:$0xff]
      %v3089 = vld [vmem:[#allocation6 + $0x28] sm:$0xff]
      %v3090 = vld [vmem:[#allocation6 + $0x30] sm:$0xff]
      %v3091 = vld [vmem:[#allocation6 + $0x38] sm:$0xff]
      %v3092 = vld [vmem:[#allocation6 + $0x40] sm:$0xff]
      %v3093 = vld [vmem:[#allocation3] sm:$0xff]
      %v3094 = vld [vmem:[#allocation3 + $0x8] sm:$0xff]
      %v3095 = vld [vmem:[#allocation3 + $0x10] sm:$0xff]
      %v3096 = vld [vmem:[#allocation3 + $0x18] sm:$0xff]
      %v3097 = vld [vmem:[#allocation3 + $0x20] sm:$0xff]
      %v3098 = vld [vmem:[#allocation3 + $0x28] sm:$0xff]
      %v3099 = vld [vmem:[#allocation3 + $0x30] sm:$0xff]
      %v3100 = vld [vmem:[#allocation3 + $0x38] sm:$0xff]
      %v3101 = vld [vmem:[#allocation3 + $0x40] sm:$0xff]
      %v3102 = vld [vmem:[%s9] sm:$0x1]
      %v3104 = vlaneseq
      %v3105 = vshrl.u32 %v3104, 7
      %v3106 = vsub.s32 0, %v3105
      %v3107 = vrot.slane %v3102, %v3106
      %v3109 = vmul.f32 %v3093, %v3107
      %v3110 = vmul.f32 %v3094, %v3107
      %v3111 = vmul.f32 %v3095, %v3107
      %v3112 = vmul.f32 %v3096, %v3107
      %v3113 = vmul.f32 %v3097, %v3107
      %v3114 = vmul.f32 %v3098, %v3107
      %v3115 = vmul.f32 %v3099, %v3107
      %v3116 = vmul.f32 %v3100, %v3107
      %v3117 = vmul.f32 %v3101, %v3107
      %v3118 = vadd.f32 %v3084, %v3109
      %v3119 = vadd.f32 %v3085, %v3110
      %v3120 = vadd.f32 %v3086, %v3111
      %v3121 = vadd.f32 %v3087, %v3112
      %v3122 = vadd.f32 %v3088, %v3113
      %v3123 = vadd.f32 %v3089, %v3114
      %v3124 = vadd.f32 %v3090, %v3115
      %v3125 = vadd.f32 %v3091, %v3116
      %v3126 = vadd.f32 %v3092, %v3117
      %v3127 = vld [vmem:[#allocation4] sm:$0xff]
      %v3128 = vld [vmem:[#allocation4 + $0x8] sm:$0xff]
      %v3129 = vld [vmem:[#allocation4 + $0x10] sm:$0xff]
      %v3130 = vld [vmem:[#allocation4 + $0x18] sm:$0xff]
      %v3131 = vld [vmem:[#allocation4 + $0x20] sm:$0xff]
      %v3132 = vld [vmem:[#allocation4 + $0x28] sm:$0xff]
      %v3133 = vld [vmem:[#allocation4 + $0x30] sm:$0xff]
      %v3134 = vld [vmem:[#allocation4 + $0x38] sm:$0xff]
      %v3135 = vld [vmem:[#allocation4 + $0x40] sm:$0xff]
      %v3136 = vmul.f32 %v3118, %v3127
      %v3137 = vmul.f32 %v3119, %v3128
      %v3138 = vmul.f32 %v3120, %v3129
      %v3139 = vmul.f32 %v3121, %v3130
      %v3140 = vmul.f32 %v3122, %v3131
      %v3141 = vmul.f32 %v3123, %v3132
      %v3142 = vmul.f32 %v3124, %v3133
      %v3143 = vmul.f32 %v3125, %v3134
      %v3144 = vmul.f32 %v3126, %v3135
      %v3145 = vpack.c.bf16 %v3137, %v3136
      %v3146 = vpack.c.bf16 %v3139, %v3138
      %v3147 = vpack.c.bf16 %v3141, %v3140
      %v3148 = vpack.c.bf16 %v3143, %v3142
      %v3149 = vpack.c.bf16 %v3144, %v3144
      %v3150 = vld [vmem:[%s10] sm:$0xf]
      %v3151 = vld [vmem:[%s10 + $0x4] sm:$0xf]
      %v3152 = vld [vmem:[%s10 + $0x8] sm:$0xf]
      %v3153 = vld [vmem:[%s10 + $0xc] sm:$0xf]
      %v3154 = vld [vmem:[%s10 + $0x10] sm:$0xf]
      %v3155 = vld [vmem:[%s10 + $0x14] sm:$0xf]
      %v3156 = vld [vmem:[%s10 + $0x18] sm:$0xf]
      %v3157 = vld [vmem:[%s10 + $0x1c] sm:$0xf]
      %v3166 = vunpack.c.l.b16 %v3150
      %v3167 = vunpack.c.l.b16 %v3151
      %v3168 = vunpack.c.l.b16 %v3152
      %v3169 = vunpack.c.l.b16 %v3153
      %v3170 = vunpack.c.l.b16 %v3154
      %v3171 = vunpack.c.l.b16 %v3155
      %v3172 = vunpack.c.l.b16 %v3156
      %v3173 = vunpack.c.l.b16 %v3157
      %v3174 = vpack.c.b16 %v3167, %v3166
      %v3175 = vpack.c.b16 %v3169, %v3168
      %v3176 = vpack.c.b16 %v3171, %v3170
      %v3177 = vpack.c.b16 %v3173, %v3172
      %v3183 = vsel %vm755, %v3145, 0
      %v3186 = vsel %vm755, %v3146, 0
      %v3189 = vsel %vm755, %v3147, 0
      %v3192 = vsel %vm755, %v3148, 0
      %v3195 = vsel %vm755, %v3149, 0
      %3197 = vmatprep.subr.bf16.mxu0 0
      %3198 = vmatpush1.bf16.msra.mxu0 0
      %3199 = vmatprep.subr.bf16.mxu0 0
      %3200 = vmatpush1.bf16.msra.mxu0 0
      %3201 = vmatprep.subr.bf16.mxu0 0
      %3202 = vmatpush1.bf16.msra.mxu0 0
      %3203 = vmatprep.subr.bf16.mxu0 0
      %3204 = vmatpush1.bf16.msra.mxu0 0
      %3205 = vmatprep.subr.bf16.mxu0 0
      %3206 = vmatpush1.bf16.msra.mxu0 %v3177
      %3207 = vmatprep.subr.bf16.mxu0 0
      %3208 = vmatpush1.bf16.msra.mxu0 %v3176
      %3209 = vmatprep.subr.bf16.mxu0 0
      %3210 = vmatpush1.bf16.msra.mxu0 %v3175
      %3211 = vmatprep.subr.bf16.mxu0 0
      %3212 = vmatpush1.bf16.msra.mxu0 %v3174
      %3213 = vmatprep.subr.bf16.mxu0 0
      %3214 = vmatpush2.bf16.msra.mxu0 0
      %3215 = vmatprep.subr.bf16.mxu0 0
      %3216 = vmatpush2.bf16.msra.mxu0 0
      %3217 = vmatprep.subr.bf16.mxu0 0
      %3218 = vmatpush2.bf16.msra.mxu0 0
      %3219 = vmatprep.subr.bf16.mxu0 0
      %3220 = vmatpush2.bf16.msra.mxu0 0
      %3221 = vmatprep.subr.bf16.mxu0 0
      %3222 = vmatpush2.bf16.msra.mxu0 0
      %3223 = vmatprep.subr.bf16.mxu0 0
      %3224 = vmatpush2.bf16.msra.mxu0 0
      %3225 = vmatprep.subr.bf16.mxu0 0
      %3226 = vmatpush2.bf16.msra.mxu0 0
      %3227 = vmatprep.subr.bf16.mxu0 0
      %3228 = vmatpush2.bf16.msra.mxu0 0
      %3229 = vmatprep.mubr.bf16.mxu0 0
      %3230 = vmatmul.mubr.bf16.gmra.mxu0 %v3183
      %v3231 = vpop.f32.mrf.mxu0
      %v3232 = vadd.f32 0.0, %v3231
      %v3233 = vpop.f32.mrf.mxu0
      %v3234 = vpop.f32.mrf.mxu0
      %v3235 = vadd.f32 0.0, %v3234
      %v3236 = vpop.f32.mrf.mxu0
      %3237 = vmatprep.mubr.bf16.mxu0 0
      %3238 = vmatmul.mubr.bf16.gmra.mxu0 %v3186
      %v3239 = vpop.f32.mrf.mxu0
      %v3240 = vadd.f32 0.0, %v3239
      %v3241 = vpop.f32.mrf.mxu0
      %v3242 = vpop.f32.mrf.mxu0
      %v3243 = vadd.f32 0.0, %v3242
      %v3244 = vpop.f32.mrf.mxu0
      %3245 = vmatprep.mubr.bf16.mxu0 0
      %3246 = vmatmul.mubr.bf16.gmra.mxu0 %v3189
      %v3247 = vpop.f32.mrf.mxu0
      %v3248 = vadd.f32 0.0, %v3247
      %v3249 = vpop.f32.mrf.mxu0
      %v3250 = vpop.f32.mrf.mxu0
      %v3251 = vadd.f32 0.0, %v3250
      %v3252 = vpop.f32.mrf.mxu0
      %3253 = vmatprep.mubr.bf16.mxu0 0
      %3254 = vmatmul.mubr.bf16.gmra.mxu0 %v3192
      %v3255 = vpop.f32.mrf.mxu0
      %v3256 = vadd.f32 0.0, %v3255
      %v3257 = vpop.f32.mrf.mxu0
      %v3258 = vpop.f32.mrf.mxu0
      %v3259 = vadd.f32 0.0, %v3258
      %v3260 = vpop.f32.mrf.mxu0
      %3261 = vmatprep.mubr.bf16.mxu0 0
      %3262 = vmatmul.mubr.bf16.gmra.mxu0 %v3195
      %v3263 = vpop.f32.mrf.mxu0
      %v3264 = vadd.f32 0.0, %v3263
      %v3265 = vpop.f32.mrf.mxu0
      %v3266 = vpop.f32.mrf.mxu0
      %v3267 = vpop.f32.mrf.mxu0
      %3268 = vdwg.mxu0
      %3269 = vst.msk [vmem:[%s386] sm:$0xff] %vm397, %v3232
      %3270 = vst.msk [vmem:[%s386 + $0x8] sm:$0xff] %vm397, %v3235
      %3271 = vst.msk [vmem:[%s386 + $0x10] sm:$0xff] %vm397, %v3240
      %3272 = vst.msk [vmem:[%s386 + $0x18] sm:$0xff] %vm397, %v3243
      %3273 = vst.msk [vmem:[%s386 + $0x20] sm:$0xff] %vm397, %v3248
      %3274 = vst.msk [vmem:[%s386 + $0x28] sm:$0xff] %vm397, %v3251
      %3275 = vst.msk [vmem:[%s386 + $0x30] sm:$0xff] %vm397, %v3256
      %3276 = vst.msk [vmem:[%s386 + $0x38] sm:$0xff] %vm397, %v3259
      %3277 = vst.msk [vmem:[%s386 + $0x40] sm:$0xff] %vm397, %v3264
      %p3278 = scmp.lt.s32.totalorder %s22, 1
      %s3279 = scalar_select %p3278, %s22, 1
      %s3280 = smul.addr %s3279, 9
      %s3281 = smul.addr %s3280, 8
      %s3282 = scalar_lea.vmem %s11, %s3281
      // Predicated region
      $region72: #{block_1d_forward.1} parent=63 // pred_check
        %p3283 = pneg %p276
      $region73: #{block_1d_forward.1} parent=63 // pred_check_branch
        %3285 = sbr.rel (%p3283) target = $region75
      $region74: #{block_1d_forward.1} parent=63 // pred_region
        _
      $region75: #{block_1d_forward.1} parent=63 // pred_fallthru
        _
    $region64: #{block_1d_forward.1} parent=5 // pred_fallthru
      _
    %p3286 = scmp.le.s32.totalorder 2, %s17
    // Predicated region
    $region76: #{block_1d_forward.1} parent=5 // pred_check
      %p3287 = pneg %p3286
    $region77: #{block_1d_forward.1} parent=5 // pred_check_branch
      %3289 = sbr.rel (%p3287) target = $region79
    $region78: #{block_1d_forward.1} parent=5 // pred_region
      %s3290 = ssub.s32 %s17, 2
      // Predicated region
      $region80: #{block_1d_forward.1} parent=78 // pred_check
        %p3291 = pneg %p282
      $region81: #{block_1d_forward.1} parent=78 // pred_check_branch
        %3293 = sbr.rel (%p3291) target = $region83
      $region82: #{block_1d_forward.1} parent=78 // pred_region
        %p3294 = scmp.lt.s32.totalorder %s23, 1
        %s3295 = scalar_select %p3294, %s23, 1
        %s3296 = smul.addr %s3295, 9
        %s3297 = smul.addr %s3296, 8
        %s3298 = scalar_lea.vmem %s11, %s3297
      $region83: #{block_1d_forward.1} parent=78 // pred_fallthru
        _
    $region79: #{block_1d_forward.1} parent=5 // pred_fallthru
      _
  $region6: #{block_1d_forward.1} parent=0 // loop_footer
    %s21 = sadd.s32 1, %s17
  $region7: #{block_1d_forward.1} parent=0 // loop_footer_branch
    %16 = sbr.rel target = $region3
  $region8: #{block_1d_forward.1} parent=0 // loop_exit
    _

</llo_original>
